<compile_context>
chip_gen: v7x
topology: tpu7x:2x2x1
jax: 0.10.0
libtpu: 0.0.40
codegen_flags: <defaults>
</compile_context>

<pallas_src>
import functools
import math

import jax
import jax.numpy as jnp
import numpy as np
from jax import lax
from jax.experimental import pallas as pl
from jax.experimental.pallas import tpu as pltpu

GELU_C = math.sqrt(2.0 / math.pi)
NEG_BIG = 1e10
LN_EPS = 1e-5

PARAM_ORDER = ("ln1_g", "ln1_b", "w_attn", "b_attn", "w_aproj", "b_aproj",
               "ln2_g", "ln2_b", "w_fc", "b_fc", "w_mproj", "b_mproj")


# ----------------------------- kernel helpers ------------------------------ #
def _layer_norm(x, g, b):
    u = jnp.mean(x, axis=-1, keepdims=True)
    xmu = x - u
    s = jnp.mean(xmu * xmu, axis=-1, keepdims=True)
    return xmu * lax.rsqrt(s + LN_EPS) * g + b


def _gelu(x):
    return 0.5 * x * (1.0 + jnp.tanh(GELU_C * (x + 0.044715 * x * x * x)))


# ------------------------------ Pallas kernel ------------------------------ #
def _layers_kernel(n_head, bt,
                   x_ref,
                   ln1_g, ln1_b, w_attn, b_attn, w_aproj, b_aproj,
                   ln2_g, ln2_b, w_fc, b_fc, w_mproj, b_mproj,
                   out_ref):
    """One transformer layer (grid axis 1) on one batch tile (grid axis 0).

    The residual stream lives in `out_ref`: its block index only depends on the
    batch-tile axis, so it stays resident in VMEM across the whole layer loop."""
    layer = pl.program_id(1)
    S, H = x_ref.shape[1], x_ref.shape[2]
    hd = H // n_head
    scale = 1.0 / math.sqrt(hd)
    bf16 = jnp.bfloat16
    f32 = jnp.float32

    # Load the embeddings into the resident residual buffer at the first layer.
    @pl.when(layer == 0)
    def _():
        out_ref[...] = x_ref[...]

    # Per-layer parameters (leading L-block axis squeezed off).
    g1, be1 = ln1_g[0], ln1_b[0]            # (1, H)        f32
    g2, be2 = ln2_g[0], ln2_b[0]            # (1, H)        f32
    wqkv = w_attn[0]                        # (H, 3H)       bf16
    wproj_h = w_aproj[0]                    # (nh, hd, H)   bf16
    wfc = w_fc[0]                           # (H, 4H)       bf16
    wmp = w_mproj[0]                        # (4H, H)       bf16
    bqkv, bproj = b_attn[0], b_aproj[0]     # (1, 3H)/(1,H) f32
    bfc, bmp = b_fc[0], b_mproj[0]          # (1, 4H)/(1,H) f32

    # Causal mask (past=None -> nd == ns == S): keep position j iff i >= j.
    ii = lax.broadcasted_iota(jnp.int32, (S, S), 0)
    jj = lax.broadcasted_iota(jnp.int32, (S, S), 1)
    causal = ii >= jj                       # (S, S) bool

    for b in range(bt):                     # static loop over the batch tile
        x = out_ref[b]                      # (S, H) f32 residual stream

        # ---- attention sub-block ----
        h1 = _layer_norm(x, g1, be1)
        c = jnp.dot(h1.astype(bf16), wqkv,
                    preferred_element_type=f32) + bqkv            # (S, 3H) f32

        # One relayout: (S, 3H) lanes -> head-major (nh, S, hd).  Everything
        # after this is head-batched MXU contractions (no per-head matmuls,
        # no lane-dim concatenate).
        q3 = jnp.stack([c[:, h * hd:(h + 1) * hd]
                        for h in range(n_head)], axis=0)           # (nh, S, hd)
        k3 = jnp.stack([c[:, H + h * hd:H + (h + 1) * hd]
                        for h in range(n_head)], axis=0)
        v3 = jnp.stack([c[:, 2 * H + h * hd:2 * H + (h + 1) * hd]
                        for h in range(n_head)], axis=0)
        qb = (q3 * scale).astype(bf16)      # fold 1/sqrt(hd) into q (O(S*hd))
        kb = k3.astype(bf16)
        vb = v3.astype(bf16)

        s = jnp.einsum("hqd,hkd->hqk", qb, kb,
                       preferred_element_type=f32)                 # (nh, S, S)
        s = jnp.where(causal[None, :, :], s, -NEG_BIG)
        s = s - jnp.max(s, axis=-1, keepdims=True)
        e = jnp.exp(s)
        p = e * pl.reciprocal(jnp.sum(e, axis=-1, keepdims=True), approx=True)
        a3 = jnp.einsum("hqk,hkd->hqd", p.astype(bf16), vb,
                        preferred_element_type=f32)                # (nh, S, hd)

        # Head merge + output projection: head-batched matmul then sum over
        # heads (weight pre-reshaped to (nh, hd, H) on the host).
        ap = jnp.einsum("hsd,hdk->hsk", a3.astype(bf16), wproj_h,
                        preferred_element_type=f32)                # (nh, S, H)
        x = x + jnp.sum(ap, axis=0) + bproj

        # ---- MLP sub-block ----
        # TODO(synk): for v7x at S>=1024 / H>=768, K-tile the (S, 4H) intermediate
        # with an f32 VMEM accumulator instead of materializing it whole.
        h2 = _layer_norm(x, g2, be2)
        m = jnp.dot(h2.astype(bf16), wfc, preferred_element_type=f32) + bfc
        m = _gelu(m)
        m = jnp.dot(m.astype(bf16), wmp, preferred_element_type=f32) + bmp

        out_ref[b] = x + m

    # TODO(synk): for long sequences replace the dense (nh,S,S) scores with a
    # KV-tiled online-softmax (flash-style) loop + f32 accumulator scratch.


# ------------------------------ host wrapper -------------------------------- #
def _pick_batch_tile(B, max_bt=8):
    for cand in range(min(B, max_bt), 0, -1):
        if B % cand == 0:
            return cand
    return 1


def pack_block_params(blocks, n_head):
    """Stack per-layer params on a leading L axis; matmul weights -> bf16; the
    attention output projection is pre-reshaped to (L, n_head, hd, H)."""
    L = len(blocks)
    H = blocks[0]["w_attn"].shape[0]
    hd = H // n_head
    st = lambda name: jnp.stack([blk[name] for blk in blocks], axis=0)
    bf16 = jnp.bfloat16
    return {
        "ln1_g": st("ln1_g"), "ln1_b": st("ln1_b"),                       # (L,1,H)  f32
        "w_attn": st("w_attn").astype(bf16),                              # (L,H,3H) bf16
        "b_attn": st("b_attn"),                                           # (L,1,3H) f32
        "w_aproj": st("w_aproj").astype(bf16).reshape(L, n_head, hd, H),  # (L,nh,hd,H)
        "b_aproj": st("b_aproj"),                                         # (L,1,H)  f32
        "ln2_g": st("ln2_g"), "ln2_b": st("ln2_b"),                       # (L,1,H)  f32
        "w_fc": st("w_fc").astype(bf16),                                  # (L,H,4H) bf16
        "b_fc": st("b_fc"),                                               # (L,1,4H) f32
        "w_mproj": st("w_mproj").astype(bf16),                            # (L,4H,H) bf16
        "b_mproj": st("b_mproj"),                                         # (L,1,H)  f32
    }


def transformer_forward(x, packed, n_head):
    """All transformer blocks in one fused pallas_call; x: (B, S, H) float32."""
    B, S, H = x.shape
    L = packed["w_attn"].shape[0]
    bt = _pick_batch_tile(B)
    nb = B // bt

    def x_index(b, l):
        return (b, 0, 0)

    def make_w_index(ndim_rest):
        def idx(b, l):
            return (l,) + (0,) * ndim_rest
        return idx

    weights = [packed[name] for name in PARAM_ORDER]
    in_specs = [pl.BlockSpec((bt, S, H), x_index)]
    for w in weights:
        in_specs.append(pl.BlockSpec((1,) + tuple(w.shape[1:]),
                                     make_w_index(w.ndim - 1)))

    # Advisory cost hint for the XLA scheduler around the custom call.
    flops = int(2 * B * S * H * (12 * H + 2 * S)) * L
    transcendentals = int(L * B * (n_head * S * S + S * 4 * H))
    bytes_accessed = int(2 * x.size * 4
                         + sum(int(np.prod(w.shape)) * w.dtype.itemsize for w in weights))

    return pl.pallas_call(
        functools.partial(_layers_kernel, n_head, bt),
        out_shape=jax.ShapeDtypeStruct((B, S, H), jnp.float32),
        grid=(nb, L),
        in_specs=in_specs,
        out_specs=pl.BlockSpec((bt, S, H), x_index),
        compiler_params=pltpu.CompilerParams(
            dimension_semantics=("parallel", "arbitrary"),
            vmem_limit_bytes=64 * 1024 * 1024),   # explicit budget (<= v7x physical)
        cost_estimate=pl.CostEstimate(flops=flops,
                                      transcendentals=transcendentals,
                                      bytes_accessed=bytes_accessed),
    )(x, *weights)


# ------------------------------ parameter init ----------------------------- #
def init_params(key, *, n_vocab, n_ctx, n_embed, n_hidden, n_layer):
    keys = jax.random.split(key, 2 + 4 * n_layer)
    params = {
        "wte": 0.02 * jax.random.normal(keys[0], (n_vocab, n_embed), jnp.float32),
        "wpe": 0.01 * jax.random.normal(keys[1], (n_ctx, n_embed), jnp.float32),
        "blocks": [],
    }
    H = n_hidden
    for i in range(n_layer):
        k0, k1, k2, k3 = keys[2 + 4 * i:2 + 4 * (i + 1)]
        blk = {
            "ln1_g": jnp.ones((1, H), jnp.float32),
            "ln1_b": jnp.zeros((1, H), jnp.float32),
            "w_attn": 0.02 * jax.random.normal(k0, (H, 3 * H), jnp.float32),
            "b_attn": jnp.zeros((1, 3 * H), jnp.float32),
            "w_aproj": 0.02 * jax.random.normal(k1, (H, H), jnp.float32),
            "b_aproj": jnp.zeros((1, H), jnp.float32),
            "ln2_g": jnp.ones((1, H), jnp.float32),
            "ln2_b": jnp.zeros((1, H), jnp.float32),
            "w_fc": 0.02 * jax.random.normal(k2, (H, 4 * H), jnp.float32),
            "b_fc": jnp.zeros((1, 4 * H), jnp.float32),
            "w_mproj": 0.02 * jax.random.normal(k3, (4 * H, H), jnp.float32),
            "b_mproj": jnp.zeros((1, H), jnp.float32),
        }
        params["blocks"].append(blk)
    return params


# ------------------------------ model forward ------------------------------ #
def model_forward(tokens, params, n_head):
    """tokens: (B, S) int32.  Returns {'hidden': (B, H)} (OutputGetters.mean)."""
    B, S = tokens.shape
    pos = jnp.arange(S)                                     # past=None -> past_length=0
    h = params["wte"][tokens] + params["wpe"][pos][None]    # (B, S, E); E == H -> no in_proj
    packed = pack_block_params(params["blocks"], n_head)
    h = transformer_forward(h, packed, n_head)              # hiddens[-1]
    # hidden_getter = mean over sequence of the LAST block output (pre-ln_f).
    # ln_f / out_proj / logits are not needed for the default output dict.
    return {"hidden": jnp.mean(h, axis=1)}


# --------------------------- pure-JAX reference ----------------------------- #
# Mirrors the kernel math (bf16 matmul inputs, f32 accumulation / stats) so the
# comparison checks the Pallas implementation itself.  With f32 weights this is
# numerically the same computation as the PyTorch module's forward.
def _ref_block(x, prm, n_head):
    B, S, H = x.shape
    hd = H // n_head
    bf16 = jnp.bfloat16
    f32 = jnp.float32

    def ln(z, g, b):
        u = jnp.mean(z, axis=-1, keepdims=True)
        zm = z - u
        s = jnp.mean(zm * zm, axis=-1, keepdims=True)
        return zm * lax.rsqrt(s + LN_EPS) * g + b

    def matmul(a, w):
        return jnp.einsum("bsh,hk->bsk", a.astype(bf16), w.astype(bf16),
                          preferred_element_type=f32)

    h1 = ln(x, prm["ln1_g"], prm["ln1_b"])
    c = matmul(h1, prm["w_attn"]) + prm["b_attn"]
    q, k, v = c[..., :H], c[..., H:2 * H], c[..., 2 * H:]
    split = lambda t: t.reshape(B, S, n_head, hd).transpose(0, 2, 1, 3)
    qh = (split(q) * (1.0 / math.sqrt(hd))).astype(bf16)
    kh = split(k).astype(bf16)
    vh = split(v).astype(bf16)
    s = jnp.einsum("bhqd,bhkd->bhqk", qh, kh, preferred_element_type=f32)
    mask = jnp.arange(S)[:, None] >= jnp.arange(S)[None, :]
    s = jnp.where(mask, s, -NEG_BIG)
    att = jax.nn.softmax(s, axis=-1)
    a = jnp.einsum("bhqk,bhkd->bhqd", att.astype(bf16), vh, preferred_element_type=f32)
    a = a.transpose(0, 2, 1, 3).reshape(B, S, H)
    a = matmul(a, prm["w_aproj"]) + prm["b_aproj"]
    x = x + a
    h2 = ln(x, prm["ln2_g"], prm["ln2_b"])
    m = matmul(h2, prm["w_fc"]) + prm["b_fc"]
    m = 0.5 * m * (1.0 + jnp.tanh(GELU_C * (m + 0.044715 * m ** 3)))
    m = matmul(m, prm["w_mproj"]) + prm["b_mproj"]
    return x + m


def _ref_forward(tokens, params, n_head):
    B, S = tokens.shape
    h = params["wte"][tokens] + params["wpe"][jnp.arange(S)][None]
    for blk in params["blocks"]:
        h = _ref_block(h, blk, n_head)
    return {"hidden": jnp.mean(h, axis=1)}


# ----------------------------------- main ----------------------------------- #
if __name__ == "__main__":
    # small HParams: n_vocab=50, n_ctx=16, n_embed=n_hidden=32, n_head=4, n_layer=2
    n_vocab, n_ctx, n_embed, n_hidden, n_head, n_layer = 50, 16, 32, 32, 4, 2
    B, S = 2, 8

    key = jax.random.PRNGKey(0)
    pkey, tkey = jax.random.split(key)
    params = init_params(pkey, n_vocab=n_vocab, n_ctx=n_ctx, n_embed=n_embed,
                         n_hidden=n_hidden, n_layer=n_layer)
    tokens = jax.random.randint(tkey, (B, S), 0, n_vocab, dtype=jnp.int32)

    out = model_forward(tokens, params, n_head)
    hidden = jax.block_until_ready(out["hidden"])
    assert hidden.shape == (B, n_hidden)

    ref = _ref_forward(tokens, params, n_head)["hidden"]
    np.testing.assert_allclose(np.asarray(hidden, dtype=np.float32),
                               np.asarray(ref, dtype=np.float32),
                               rtol=2e-2, atol=2e-3)

    print("KERNEL_OK")
</pallas_src>

<mosaic_0001>
module attributes {stable_mosaic.version = 11 : i64} {
  func.func @_layers_kernel(%arg0: i32, %arg1: i32, %arg2: memref<2x8x32xf32, #tpu.memory_space<vmem>>, %arg3: memref<1x1x32xf32, #tpu.memory_space<vmem>>, %arg4: memref<1x1x32xf32, #tpu.memory_space<vmem>>, %arg5: memref<1x32x96xbf16, #tpu.memory_space<vmem>>, %arg6: memref<1x1x96xf32, #tpu.memory_space<vmem>>, %arg7: memref<1x4x8x32xbf16, #tpu.memory_space<vmem>>, %arg8: memref<1x1x32xf32, #tpu.memory_space<vmem>>, %arg9: memref<1x1x32xf32, #tpu.memory_space<vmem>>, %arg10: memref<1x1x32xf32, #tpu.memory_space<vmem>>, %arg11: memref<1x32x128xbf16, #tpu.memory_space<vmem>>, %arg12: memref<1x1x128xf32, #tpu.memory_space<vmem>>, %arg13: memref<1x128x32xbf16, #tpu.memory_space<vmem>>, %arg14: memref<1x1x32xf32, #tpu.memory_space<vmem>>, %arg15: memref<2x8x32xf32, #tpu.memory_space<vmem>>) attributes {dimension_semantics = [#tpu.dimension_semantics<parallel>, #tpu.dimension_semantics<arbitrary>], iteration_bounds = array<i64: 1, 2>, scalar_prefetch = 0 : i64, scratch_operands = 0 : i64, tpu.core_type = #tpu.core_type<tc>, window_params = [{transform_indices = @transform_0, window_bounds = array<i64: 2, 8, 32>}, {transform_indices = @transform_1, window_bounds = array<i64: 1, 1, 32>}, {transform_indices = @transform_2, window_bounds = array<i64: 1, 1, 32>}, {transform_indices = @transform_3, window_bounds = array<i64: 1, 32, 96>}, {transform_indices = @transform_4, window_bounds = array<i64: 1, 1, 96>}, {transform_indices = @transform_5, window_bounds = array<i64: 1, 4, 8, 32>}, {transform_indices = @transform_6, window_bounds = array<i64: 1, 1, 32>}, {transform_indices = @transform_7, window_bounds = array<i64: 1, 1, 32>}, {transform_indices = @transform_8, window_bounds = array<i64: 1, 1, 32>}, {transform_indices = @transform_9, window_bounds = array<i64: 1, 32, 128>}, {transform_indices = @transform_10, window_bounds = array<i64: 1, 1, 128>}, {transform_indices = @transform_11, window_bounds = array<i64: 1, 128, 32>}, {transform_indices = @transform_12, window_bounds = array<i64: 1, 1, 32>}, {transform_indices = @transform_13, window_bounds = array<i64: 2, 8, 32>}]} {
    %c0_i32 = arith.constant 0 : i32
    %0 = arith.cmpi eq, %arg1, %c0_i32 : i32
    %1 = arith.extui %0 : i1 to i32
    %c0_i32_0 = arith.constant 0 : i32
    %2 = arith.cmpi ne, %1, %c0_i32_0 : i32
    scf.if %2 {
      %c0_97 = arith.constant 0 : index
      %c0_98 = arith.constant 0 : index
      %c0_99 = arith.constant 0 : index
      %284 = vector.load %arg2[%c0_97, %c0_98, %c0_99] : memref<2x8x32xf32, #tpu.memory_space<vmem>>, vector<2x8x32xf32>
      %c0_100 = arith.constant 0 : index
      %c0_101 = arith.constant 0 : index
      %c0_102 = arith.constant 0 : index
      %285 = vector.load %arg15[%c0_100, %c0_101, %c0_102] : memref<2x8x32xf32, #tpu.memory_space<vmem>>, vector<2x8x32xf32>
      tpu.vector_store %arg15[%c0_100, %c0_101, %c0_102], %284 {strides = array<i32>} : memref<2x8x32xf32, #tpu.memory_space<vmem>>, vector<2x8x32xf32>,
    } else {
    }
    %c0 = arith.constant 0 : index
    %c0_1 = arith.constant 0 : index
    %c0_2 = arith.constant 0 : index
    %3 = vector.load %arg3[%c0, %c0_1, %c0_2] : memref<1x1x32xf32, #tpu.memory_space<vmem>>, vector<1x1x32xf32>
    %4 = vector.shape_cast %3 : vector<1x1x32xf32> to vector<1x32xf32>
    %c0_3 = arith.constant 0 : index
    %c0_4 = arith.constant 0 : index
    %c0_5 = arith.constant 0 : index
    %5 = vector.load %arg4[%c0_3, %c0_4, %c0_5] : memref<1x1x32xf32, #tpu.memory_space<vmem>>, vector<1x1x32xf32>
    %6 = vector.shape_cast %5 : vector<1x1x32xf32> to vector<1x32xf32>
    %c0_6 = arith.constant 0 : index
    %c0_7 = arith.constant 0 : index
    %c0_8 = arith.constant 0 : index
    %7 = vector.load %arg9[%c0_6, %c0_7, %c0_8] : memref<1x1x32xf32, #tpu.memory_space<vmem>>, vector<1x1x32xf32>
    %8 = vector.shape_cast %7 : vector<1x1x32xf32> to vector<1x32xf32>
    %c0_9 = arith.constant 0 : index
    %c0_10 = arith.constant 0 : index
    %c0_11 = arith.constant 0 : index
    %9 = vector.load %arg10[%c0_9, %c0_10, %c0_11] : memref<1x1x32xf32, #tpu.memory_space<vmem>>, vector<1x1x32xf32>
    %10 = vector.shape_cast %9 : vector<1x1x32xf32> to vector<1x32xf32>
    %c0_12 = arith.constant 0 : index
    %c0_13 = arith.constant 0 : index
    %c0_14 = arith.constant 0 : index
    %11 = vector.load %arg5[%c0_12, %c0_13, %c0_14] : memref<1x32x96xbf16, #tpu.memory_space<vmem>>, vector<1x32x96xbf16>
    %12 = vector.shape_cast %11 : vector<1x32x96xbf16> to vector<32x96xbf16>
    %c0_15 = arith.constant 0 : index
    %c0_16 = arith.constant 0 : index
    %c0_17 = arith.constant 0 : index
    %c0_18 = arith.constant 0 : index
    %13 = vector.load %arg7[%c0_15, %c0_16, %c0_17, %c0_18] : memref<1x4x8x32xbf16, #tpu.memory_space<vmem>>, vector<1x4x8x32xbf16>
    %14 = vector.shape_cast %13 : vector<1x4x8x32xbf16> to vector<4x8x32xbf16>
    %c0_19 = arith.constant 0 : index
    %c0_20 = arith.constant 0 : index
    %c0_21 = arith.constant 0 : index
    %15 = vector.load %arg11[%c0_19, %c0_20, %c0_21] : memref<1x32x128xbf16, #tpu.memory_space<vmem>>, vector<1x32x128xbf16>
    %16 = vector.shape_cast %15 : vector<1x32x128xbf16> to vector<32x128xbf16>
    %c0_22 = arith.constant 0 : index
    %c0_23 = arith.constant 0 : index
    %c0_24 = arith.constant 0 : index
    %17 = vector.load %arg13[%c0_22, %c0_23, %c0_24] : memref<1x128x32xbf16, #tpu.memory_space<vmem>>, vector<1x128x32xbf16>
    %18 = vector.shape_cast %17 : vector<1x128x32xbf16> to vector<128x32xbf16>
    %c0_25 = arith.constant 0 : index
    %c0_26 = arith.constant 0 : index
    %c0_27 = arith.constant 0 : index
    %19 = vector.load %arg6[%c0_25, %c0_26, %c0_27] : memref<1x1x96xf32, #tpu.memory_space<vmem>>, vector<1x1x96xf32>
    %20 = vector.shape_cast %19 : vector<1x1x96xf32> to vector<1x96xf32>
    %c0_28 = arith.constant 0 : index
    %c0_29 = arith.constant 0 : index
    %c0_30 = arith.constant 0 : index
    %21 = vector.load %arg8[%c0_28, %c0_29, %c0_30] : memref<1x1x32xf32, #tpu.memory_space<vmem>>, vector<1x1x32xf32>
    %22 = vector.shape_cast %21 : vector<1x1x32xf32> to vector<1x32xf32>
    %c0_31 = arith.constant 0 : index
    %c0_32 = arith.constant 0 : index
    %c0_33 = arith.constant 0 : index
    %23 = vector.load %arg12[%c0_31, %c0_32, %c0_33] : memref<1x1x128xf32, #tpu.memory_space<vmem>>, vector<1x1x128xf32>
    %24 = vector.shape_cast %23 : vector<1x1x128xf32> to vector<1x128xf32>
    %c0_34 = arith.constant 0 : index
    %c0_35 = arith.constant 0 : index
    %c0_36 = arith.constant 0 : index
    %25 = vector.load %arg14[%c0_34, %c0_35, %c0_36] : memref<1x1x32xf32, #tpu.memory_space<vmem>>, vector<1x1x32xf32>
    %26 = vector.shape_cast %25 : vector<1x1x32xf32> to vector<1x32xf32>
    %27 = tpu.iota {dimensions = array<i32: 0>} : vector<8x8xi32>
    %28 = tpu.iota {dimensions = array<i32: 1>} : vector<8x8xi32>
    %29 = arith.cmpi sge, %27, %28 : vector<8x8xi32>
    %c0_37 = arith.constant 0 : index
    %c0_38 = arith.constant 0 : index
    %c0_39 = arith.constant 0 : index
    %30 = vector.load %arg15[%c0_37, %c0_38, %c0_39] : memref<2x8x32xf32, #tpu.memory_space<vmem>>, vector<1x8x32xf32>
    %31 = vector.shape_cast %30 : vector<1x8x32xf32> to vector<8x32xf32>
    %cst = arith.constant dense<0.000000e+00> : vector<8xf32>
    %32 = vector.multi_reduction <add>, %31, %cst [1] : vector<8x32xf32> to vector<8xf32>
    %33 = vector.shape_cast %32 : vector<8xf32> to vector<8x1xf32>
    %cst_40 = arith.constant 3.200000e+01 : f32
    %34 = vector.broadcast %cst_40 : f32 to vector<8x1xf32>
    %35 = arith.divf %33, %34 : vector<8x1xf32>
    %36 = vector.broadcast %35 : vector<8x1xf32> to vector<8x32xf32>
    %37 = arith.subf %31, %36 : vector<8x32xf32>
    %38 = arith.mulf %37, %37 : vector<8x32xf32>
    %cst_41 = arith.constant dense<0.000000e+00> : vector<8xf32>
    %39 = vector.multi_reduction <add>, %38, %cst_41 [1] : vector<8x32xf32> to vector<8xf32>
    %40 = vector.shape_cast %39 : vector<8xf32> to vector<8x1xf32>
    %cst_42 = arith.constant 3.200000e+01 : f32
    %41 = vector.broadcast %cst_42 : f32 to vector<8x1xf32>
    %42 = arith.divf %40, %41 : vector<8x1xf32>
    %cst_43 = arith.constant 9.99999974E-6 : f32
    %43 = vector.broadcast %cst_43 : f32 to vector<8x1xf32>
    %44 = arith.addf %42, %43 : vector<8x1xf32>
    %45 = math.rsqrt %44 : vector<8x1xf32>
    %46 = vector.broadcast %45 : vector<8x1xf32> to vector<8x32xf32>
    %47 = arith.mulf %37, %46 : vector<8x32xf32>
    %48 = vector.broadcast %4 : vector<1x32xf32> to vector<8x32xf32>
    %49 = arith.mulf %47, %48 : vector<8x32xf32>
    %50 = vector.broadcast %6 : vector<1x32xf32> to vector<8x32xf32>
    %51 = arith.addf %49, %50 : vector<8x32xf32>
    %52 = arith.truncf %51 : vector<8x32xf32> to vector<8x32xbf16>
    %cst_44 = arith.constant dense<0.000000e+00> : vector<8x96xf32>
    %53 = tpu.matmul %52, %12, %cst_44 {dimension_numbers = #tpu.dot_dimension_numbers<[1], [0], [0], [1], [0, 0, 1, 1], [], []>} : vector<8x32xbf16>, vector<32x96xbf16>, vector<8x96xf32> -> vector<8x96xf32>
    %54 = vector.broadcast %20 : vector<1x96xf32> to vector<8x96xf32>
    %55 = arith.addf %53, %54 : vector<8x96xf32>
    %56 = vector.extract_strided_slice %55 {offsets = [0, 0], sizes = [8, 8], strides = [1, 1]} : vector<8x96xf32> to vector<8x8xf32>
    %57 = vector.extract_strided_slice %55 {offsets = [0, 8], sizes = [8, 8], strides = [1, 1]} : vector<8x96xf32> to vector<8x8xf32>
    %58 = vector.extract_strided_slice %55 {offsets = [0, 16], sizes = [8, 8], strides = [1, 1]} : vector<8x96xf32> to vector<8x8xf32>
    %59 = vector.extract_strided_slice %55 {offsets = [0, 24], sizes = [8, 8], strides = [1, 1]} : vector<8x96xf32> to vector<8x8xf32>
    %60 = vector.shape_cast %56 : vector<8x8xf32> to vector<1x8x8xf32>
    %61 = vector.shape_cast %57 : vector<8x8xf32> to vector<1x8x8xf32>
    %62 = vector.shape_cast %58 : vector<8x8xf32> to vector<1x8x8xf32>
    %63 = vector.shape_cast %59 : vector<8x8xf32> to vector<1x8x8xf32>
    %64 = tpu.concatenate %60, %61, %62, %63 in 0 : vector<1x8x8xf32>, vector<1x8x8xf32>, vector<1x8x8xf32>, vector<1x8x8xf32> -> vector<4x8x8xf32>
    %65 = vector.extract_strided_slice %55 {offsets = [0, 32], sizes = [8, 8], strides = [1, 1]} : vector<8x96xf32> to vector<8x8xf32>
    %66 = vector.extract_strided_slice %55 {offsets = [0, 40], sizes = [8, 8], strides = [1, 1]} : vector<8x96xf32> to vector<8x8xf32>
    %67 = vector.extract_strided_slice %55 {offsets = [0, 48], sizes = [8, 8], strides = [1, 1]} : vector<8x96xf32> to vector<8x8xf32>
    %68 = vector.extract_strided_slice %55 {offsets = [0, 56], sizes = [8, 8], strides = [1, 1]} : vector<8x96xf32> to vector<8x8xf32>
    %69 = vector.shape_cast %65 : vector<8x8xf32> to vector<1x8x8xf32>
    %70 = vector.shape_cast %66 : vector<8x8xf32> to vector<1x8x8xf32>
    %71 = vector.shape_cast %67 : vector<8x8xf32> to vector<1x8x8xf32>
    %72 = vector.shape_cast %68 : vector<8x8xf32> to vector<1x8x8xf32>
    %73 = tpu.concatenate %69, %70, %71, %72 in 0 : vector<1x8x8xf32>, vector<1x8x8xf32>, vector<1x8x8xf32>, vector<1x8x8xf32> -> vector<4x8x8xf32>
    %74 = vector.extract_strided_slice %55 {offsets = [0, 64], sizes = [8, 8], strides = [1, 1]} : vector<8x96xf32> to vector<8x8xf32>
    %75 = vector.extract_strided_slice %55 {offsets = [0, 72], sizes = [8, 8], strides = [1, 1]} : vector<8x96xf32> to vector<8x8xf32>
    %76 = vector.extract_strided_slice %55 {offsets = [0, 80], sizes = [8, 8], strides = [1, 1]} : vector<8x96xf32> to vector<8x8xf32>
    %77 = vector.extract_strided_slice %55 {offsets = [0, 88], sizes = [8, 8], strides = [1, 1]} : vector<8x96xf32> to vector<8x8xf32>
    %78 = vector.shape_cast %74 : vector<8x8xf32> to vector<1x8x8xf32>
    %79 = vector.shape_cast %75 : vector<8x8xf32> to vector<1x8x8xf32>
    %80 = vector.shape_cast %76 : vector<8x8xf32> to vector<1x8x8xf32>
    %81 = vector.shape_cast %77 : vector<8x8xf32> to vector<1x8x8xf32>
    %82 = tpu.concatenate %78, %79, %80, %81 in 0 : vector<1x8x8xf32>, vector<1x8x8xf32>, vector<1x8x8xf32>, vector<1x8x8xf32> -> vector<4x8x8xf32>
    %cst_45 = arith.constant 0.353553385 : f32
    %83 = vector.broadcast %cst_45 : f32 to vector<4x8x8xf32>
    %84 = arith.mulf %64, %83 : vector<4x8x8xf32>
    %85 = arith.truncf %84 : vector<4x8x8xf32> to vector<4x8x8xbf16>
    %86 = arith.truncf %73 : vector<4x8x8xf32> to vector<4x8x8xbf16>
    %87 = arith.truncf %82 : vector<4x8x8xf32> to vector<4x8x8xbf16>
    "tpu.trace_start"() <{level = 10 : i32, message = "hqd,hkd->hqk"}> : () -> ()
    %cst_46 = arith.constant dense<0.000000e+00> : vector<4x8x8xf32>
    %88 = tpu.matmul %85, %86, %cst_46 {dimension_numbers = #tpu.dot_dimension_numbers<[2], [2], [1], [1], [0, 0, 0, 1, 1, 1], [0], [0]>} : vector<4x8x8xbf16>, vector<4x8x8xbf16>, vector<4x8x8xf32> -> vector<4x8x8xf32>
    "tpu.trace_stop"() : () -> ()
    %89 = vector.shape_cast %29 : vector<8x8xi1> to vector<1x8x8xi1>
    %cst_47 = arith.constant -1.000000e+10 : f32
    %90 = vector.shape_cast %89 : vector<1x8x8xi1> to vector<1x8x8xi1>
    %91 = vector.broadcast %90 : vector<1x8x8xi1> to vector<4x8x8xi1>
    %92 = vector.broadcast %cst_47 : f32 to vector<4x8x8xf32>
    %93 = arith.select %91, %88, %92 : vector<4x8x8xi1>, vector<4x8x8xf32>
    %cst_48 = arith.constant dense<0xFF800000> : vector<4x8xf32>
    %94 = vector.multi_reduction <maximumf>, %93, %cst_48 [2] : vector<4x8x8xf32> to vector<4x8xf32>
    %95 = vector.shape_cast %94 : vector<4x8xf32> to vector<4x8x1xf32>
    %96 = vector.broadcast %95 : vector<4x8x1xf32> to vector<4x8x8xf32>
    %97 = arith.subf %93, %96 : vector<4x8x8xf32>
    %98 = math.exp %97 : vector<4x8x8xf32>
    %cst_49 = arith.constant dense<0.000000e+00> : vector<4x8xf32>
    %99 = vector.multi_reduction <add>, %98, %cst_49 [2] : vector<4x8x8xf32> to vector<4x8xf32>
    %100 = vector.shape_cast %99 : vector<4x8xf32> to vector<4x8x1xf32>
    %101 = tpu.reciprocal %100 {approx = true} : vector<4x8x1xf32> -> vector<4x8x1xf32>
    %102 = vector.broadcast %101 : vector<4x8x1xf32> to vector<4x8x8xf32>
    %103 = arith.mulf %98, %102 : vector<4x8x8xf32>
    %104 = arith.truncf %103 : vector<4x8x8xf32> to vector<4x8x8xbf16>
    "tpu.trace_start"() <{level = 10 : i32, message = "hqk,hkd->hqd"}> : () -> ()
    %cst_50 = arith.constant dense<0.000000e+00> : vector<4x8x8xf32>
    %105 = tpu.matmul %104, %87, %cst_50 {dimension_numbers = #tpu.dot_dimension_numbers<[2], [1], [1], [2], [0, 0, 0, 1, 1, 2], [0], [0]>} : vector<4x8x8xbf16>, vector<4x8x8xbf16>, vector<4x8x8xf32> -> vector<4x8x8xf32>
    "tpu.trace_stop"() : () -> ()
    %106 = arith.truncf %105 : vector<4x8x8xf32> to vector<4x8x8xbf16>
    "tpu.trace_start"() <{level = 10 : i32, message = "hsd,hdk->hsk"}> : () -> ()
    %cst_51 = arith.constant dense<0.000000e+00> : vector<4x8x32xf32>
    %107 = tpu.matmul %106, %14, %cst_51 {dimension_numbers = #tpu.dot_dimension_numbers<[2], [1], [1], [2], [0, 0, 0, 1, 1, 2], [0], [0]>} : vector<4x8x8xbf16>, vector<4x8x32xbf16>, vector<4x8x32xf32> -> vector<4x8x32xf32>
    "tpu.trace_stop"() : () -> ()
    %cst_52 = arith.constant dense<0.000000e+00> : vector<8x32xf32>
    %108 = vector.multi_reduction <add>, %107, %cst_52 [0] : vector<4x8x32xf32> to vector<8x32xf32>
    %109 = arith.addf %31, %108 : vector<8x32xf32>
    %110 = vector.broadcast %22 : vector<1x32xf32> to vector<8x32xf32>
    %111 = arith.addf %109, %110 : vector<8x32xf32>
    %cst_53 = arith.constant dense<0.000000e+00> : vector<8xf32>
    %112 = vector.multi_reduction <add>, %111, %cst_53 [1] : vector<8x32xf32> to vector<8xf32>
    %113 = vector.shape_cast %112 : vector<8xf32> to vector<8x1xf32>
    %cst_54 = arith.constant 3.200000e+01 : f32
    %114 = vector.broadcast %cst_54 : f32 to vector<8x1xf32>
    %115 = arith.divf %113, %114 : vector<8x1xf32>
    %116 = vector.broadcast %115 : vector<8x1xf32> to vector<8x32xf32>
    %117 = arith.subf %111, %116 : vector<8x32xf32>
    %118 = arith.mulf %117, %117 : vector<8x32xf32>
    %cst_55 = arith.constant dense<0.000000e+00> : vector<8xf32>
    %119 = vector.multi_reduction <add>, %118, %cst_55 [1] : vector<8x32xf32> to vector<8xf32>
    %120 = vector.shape_cast %119 : vector<8xf32> to vector<8x1xf32>
    %cst_56 = arith.constant 3.200000e+01 : f32
    %121 = vector.broadcast %cst_56 : f32 to vector<8x1xf32>
    %122 = arith.divf %120, %121 : vector<8x1xf32>
    %cst_57 = arith.constant 9.99999974E-6 : f32
    %123 = vector.broadcast %cst_57 : f32 to vector<8x1xf32>
    %124 = arith.addf %122, %123 : vector<8x1xf32>
    %125 = math.rsqrt %124 : vector<8x1xf32>
    %126 = vector.broadcast %125 : vector<8x1xf32> to vector<8x32xf32>
    %127 = arith.mulf %117, %126 : vector<8x32xf32>
    %128 = vector.broadcast %8 : vector<1x32xf32> to vector<8x32xf32>
    %129 = arith.mulf %127, %128 : vector<8x32xf32>
    %130 = vector.broadcast %10 : vector<1x32xf32> to vector<8x32xf32>
    %131 = arith.addf %129, %130 : vector<8x32xf32>
    %132 = arith.truncf %131 : vector<8x32xf32> to vector<8x32xbf16>
    %cst_58 = arith.constant dense<0.000000e+00> : vector<8x128xf32>
    %133 = tpu.matmul %132, %16, %cst_58 {dimension_numbers = #tpu.dot_dimension_numbers<[1], [0], [0], [1], [0, 0, 1, 1], [], []>} : vector<8x32xbf16>, vector<32x128xbf16>, vector<8x128xf32> -> vector<8x128xf32>
    %134 = vector.broadcast %24 : vector<1x128xf32> to vector<8x128xf32>
    %135 = arith.addf %133, %134 : vector<8x128xf32>
    %cst_59 = arith.constant 5.000000e-01 : f32
    %136 = vector.broadcast %cst_59 : f32 to vector<8x128xf32>
    %137 = arith.mulf %136, %135 : vector<8x128xf32>
    %cst_60 = arith.constant 4.471500e-02 : f32
    %138 = vector.broadcast %cst_60 : f32 to vector<8x128xf32>
    %139 = arith.mulf %138, %135 : vector<8x128xf32>
    %140 = arith.mulf %139, %135 : vector<8x128xf32>
    %141 = arith.mulf %140, %135 : vector<8x128xf32>
    %142 = arith.addf %135, %141 : vector<8x128xf32>
    %cst_61 = arith.constant 0.797884583 : f32
    %143 = vector.broadcast %cst_61 : f32 to vector<8x128xf32>
    %144 = arith.mulf %143, %142 : vector<8x128xf32>
    %145 = math.tanh %144 : vector<8x128xf32>
    %cst_62 = arith.constant 1.000000e+00 : f32
    %146 = vector.broadcast %cst_62 : f32 to vector<8x128xf32>
    %147 = arith.addf %146, %145 : vector<8x128xf32>
    %148 = arith.mulf %137, %147 : vector<8x128xf32>
    %149 = arith.truncf %148 : vector<8x128xf32> to vector<8x128xbf16>
    %cst_63 = arith.constant dense<0.000000e+00> : vector<8x32xf32>
    %150 = tpu.matmul %149, %18, %cst_63 {dimension_numbers = #tpu.dot_dimension_numbers<[1], [0], [0], [1], [0, 0, 1, 1], [], []>} : vector<8x128xbf16>, vector<128x32xbf16>, vector<8x32xf32> -> vector<8x32xf32>
    %151 = vector.broadcast %26 : vector<1x32xf32> to vector<8x32xf32>
    %152 = arith.addf %150, %151 : vector<8x32xf32>
    %153 = arith.addf %111, %152 : vector<8x32xf32>
    %c0_64 = arith.constant 0 : index
    %c0_65 = arith.constant 0 : index
    %c0_66 = arith.constant 0 : index
    %154 = vector.load %arg15[%c0_64, %c0_65, %c0_66] : memref<2x8x32xf32, #tpu.memory_space<vmem>>, vector<1x8x32xf32>
    %155 = vector.shape_cast %154 : vector<1x8x32xf32> to vector<8x32xf32>
    %156 = vector.shape_cast %153 : vector<8x32xf32> to vector<1x8x32xf32>
    tpu.vector_store %arg15[%c0_64, %c0_65, %c0_66], %156 {strides = array<i32>} : memref<2x8x32xf32, #tpu.memory_space<vmem>>, vector<1x8x32xf32>,
    %c1 = arith.constant 1 : index
    %c0_67 = arith.constant 0 : index
    %c0_68 = arith.constant 0 : index
    %157 = vector.load %arg15[%c1, %c0_67, %c0_68] : memref<2x8x32xf32, #tpu.memory_space<vmem>>, vector<1x8x32xf32>
    %158 = vector.shape_cast %157 : vector<1x8x32xf32> to vector<8x32xf32>
    %cst_69 = arith.constant dense<0.000000e+00> : vector<8xf32>
    %159 = vector.multi_reduction <add>, %158, %cst_69 [1] : vector<8x32xf32> to vector<8xf32>
    %160 = vector.shape_cast %159 : vector<8xf32> to vector<8x1xf32>
    %cst_70 = arith.constant 3.200000e+01 : f32
    %161 = vector.broadcast %cst_70 : f32 to vector<8x1xf32>
    %162 = arith.divf %160, %161 : vector<8x1xf32>
    %163 = vector.broadcast %162 : vector<8x1xf32> to vector<8x32xf32>
    %164 = arith.subf %158, %163 : vector<8x32xf32>
    %165 = arith.mulf %164, %164 : vector<8x32xf32>
    %cst_71 = arith.constant dense<0.000000e+00> : vector<8xf32>
    %166 = vector.multi_reduction <add>, %165, %cst_71 [1] : vector<8x32xf32> to vector<8xf32>
    %167 = vector.shape_cast %166 : vector<8xf32> to vector<8x1xf32>
    %cst_72 = arith.constant 3.200000e+01 : f32
    %168 = vector.broadcast %cst_72 : f32 to vector<8x1xf32>
    %169 = arith.divf %167, %168 : vector<8x1xf32>
    %cst_73 = arith.constant 9.99999974E-6 : f32
    %170 = vector.broadcast %cst_73 : f32 to vector<8x1xf32>
    %171 = arith.addf %169, %170 : vector<8x1xf32>
    %172 = math.rsqrt %171 : vector<8x1xf32>
    %173 = vector.broadcast %172 : vector<8x1xf32> to vector<8x32xf32>
    %174 = arith.mulf %164, %173 : vector<8x32xf32>
    %175 = vector.broadcast %4 : vector<1x32xf32> to vector<8x32xf32>
    %176 = arith.mulf %174, %175 : vector<8x32xf32>
    %177 = vector.broadcast %6 : vector<1x32xf32> to vector<8x32xf32>
    %178 = arith.addf %176, %177 : vector<8x32xf32>
    %179 = arith.truncf %178 : vector<8x32xf32> to vector<8x32xbf16>
    %cst_74 = arith.constant dense<0.000000e+00> : vector<8x96xf32>
    %180 = tpu.matmul %179, %12, %cst_74 {dimension_numbers = #tpu.dot_dimension_numbers<[1], [0], [0], [1], [0, 0, 1, 1], [], []>} : vector<8x32xbf16>, vector<32x96xbf16>, vector<8x96xf32> -> vector<8x96xf32>
    %181 = vector.broadcast %20 : vector<1x96xf32> to vector<8x96xf32>
    %182 = arith.addf %180, %181 : vector<8x96xf32>
    %183 = vector.extract_strided_slice %182 {offsets = [0, 0], sizes = [8, 8], strides = [1, 1]} : vector<8x96xf32> to vector<8x8xf32>
    %184 = vector.extract_strided_slice %182 {offsets = [0, 8], sizes = [8, 8], strides = [1, 1]} : vector<8x96xf32> to vector<8x8xf32>
    %185 = vector.extract_strided_slice %182 {offsets = [0, 16], sizes = [8, 8], strides = [1, 1]} : vector<8x96xf32> to vector<8x8xf32>
    %186 = vector.extract_strided_slice %182 {offsets = [0, 24], sizes = [8, 8], strides = [1, 1]} : vector<8x96xf32> to vector<8x8xf32>
    %187 = vector.shape_cast %183 : vector<8x8xf32> to vector<1x8x8xf32>
    %188 = vector.shape_cast %184 : vector<8x8xf32> to vector<1x8x8xf32>
    %189 = vector.shape_cast %185 : vector<8x8xf32> to vector<1x8x8xf32>
    %190 = vector.shape_cast %186 : vector<8x8xf32> to vector<1x8x8xf32>
    %191 = tpu.concatenate %187, %188, %189, %190 in 0 : vector<1x8x8xf32>, vector<1x8x8xf32>, vector<1x8x8xf32>, vector<1x8x8xf32> -> vector<4x8x8xf32>
    %192 = vector.extract_strided_slice %182 {offsets = [0, 32], sizes = [8, 8], strides = [1, 1]} : vector<8x96xf32> to vector<8x8xf32>
    %193 = vector.extract_strided_slice %182 {offsets = [0, 40], sizes = [8, 8], strides = [1, 1]} : vector<8x96xf32> to vector<8x8xf32>
    %194 = vector.extract_strided_slice %182 {offsets = [0, 48], sizes = [8, 8], strides = [1, 1]} : vector<8x96xf32> to vector<8x8xf32>
    %195 = vector.extract_strided_slice %182 {offsets = [0, 56], sizes = [8, 8], strides = [1, 1]} : vector<8x96xf32> to vector<8x8xf32>
    %196 = vector.shape_cast %192 : vector<8x8xf32> to vector<1x8x8xf32>
    %197 = vector.shape_cast %193 : vector<8x8xf32> to vector<1x8x8xf32>
    %198 = vector.shape_cast %194 : vector<8x8xf32> to vector<1x8x8xf32>
    %199 = vector.shape_cast %195 : vector<8x8xf32> to vector<1x8x8xf32>
    %200 = tpu.concatenate %196, %197, %198, %199 in 0 : vector<1x8x8xf32>, vector<1x8x8xf32>, vector<1x8x8xf32>, vector<1x8x8xf32> -> vector<4x8x8xf32>
    %201 = vector.extract_strided_slice %182 {offsets = [0, 64], sizes = [8, 8], strides = [1, 1]} : vector<8x96xf32> to vector<8x8xf32>
    %202 = vector.extract_strided_slice %182 {offsets = [0, 72], sizes = [8, 8], strides = [1, 1]} : vector<8x96xf32> to vector<8x8xf32>
    %203 = vector.extract_strided_slice %182 {offsets = [0, 80], sizes = [8, 8], strides = [1, 1]} : vector<8x96xf32> to vector<8x8xf32>
    %204 = vector.extract_strided_slice %182 {offsets = [0, 88], sizes = [8, 8], strides = [1, 1]} : vector<8x96xf32> to vector<8x8xf32>
    %205 = vector.shape_cast %201 : vector<8x8xf32> to vector<1x8x8xf32>
    %206 = vector.shape_cast %202 : vector<8x8xf32> to vector<1x8x8xf32>
    %207 = vector.shape_cast %203 : vector<8x8xf32> to vector<1x8x8xf32>
    %208 = vector.shape_cast %204 : vector<8x8xf32> to vector<1x8x8xf32>
    %209 = tpu.concatenate %205, %206, %207, %208 in 0 : vector<1x8x8xf32>, vector<1x8x8xf32>, vector<1x8x8xf32>, vector<1x8x8xf32> -> vector<4x8x8xf32>
    %cst_75 = arith.constant 0.353553385 : f32
    %210 = vector.broadcast %cst_75 : f32 to vector<4x8x8xf32>
    %211 = arith.mulf %191, %210 : vector<4x8x8xf32>
    %212 = arith.truncf %211 : vector<4x8x8xf32> to vector<4x8x8xbf16>
    %213 = arith.truncf %200 : vector<4x8x8xf32> to vector<4x8x8xbf16>
    %214 = arith.truncf %209 : vector<4x8x8xf32> to vector<4x8x8xbf16>
    "tpu.trace_start"() <{level = 10 : i32, message = "hqd,hkd->hqk"}> : () -> ()
    %cst_76 = arith.constant dense<0.000000e+00> : vector<4x8x8xf32>
    %215 = tpu.matmul %212, %213, %cst_76 {dimension_numbers = #tpu.dot_dimension_numbers<[2], [2], [1], [1], [0, 0, 0, 1, 1, 1], [0], [0]>} : vector<4x8x8xbf16>, vector<4x8x8xbf16>, vector<4x8x8xf32> -> vector<4x8x8xf32>
    "tpu.trace_stop"() : () -> ()
    %216 = vector.shape_cast %29 : vector<8x8xi1> to vector<1x8x8xi1>
    %cst_77 = arith.constant -1.000000e+10 : f32
    %217 = vector.shape_cast %216 : vector<1x8x8xi1> to vector<1x8x8xi1>
    %218 = vector.broadcast %217 : vector<1x8x8xi1> to vector<4x8x8xi1>
    %219 = vector.broadcast %cst_77 : f32 to vector<4x8x8xf32>
    %220 = arith.select %218, %215, %219 : vector<4x8x8xi1>, vector<4x8x8xf32>
    %cst_78 = arith.constant dense<0xFF800000> : vector<4x8xf32>
    %221 = vector.multi_reduction <maximumf>, %220, %cst_78 [2] : vector<4x8x8xf32> to vector<4x8xf32>
    %222 = vector.shape_cast %221 : vector<4x8xf32> to vector<4x8x1xf32>
    %223 = vector.broadcast %222 : vector<4x8x1xf32> to vector<4x8x8xf32>
    %224 = arith.subf %220, %223 : vector<4x8x8xf32>
    %225 = math.exp %224 : vector<4x8x8xf32>
    %cst_79 = arith.constant dense<0.000000e+00> : vector<4x8xf32>
    %226 = vector.multi_reduction <add>, %225, %cst_79 [2] : vector<4x8x8xf32> to vector<4x8xf32>
    %227 = vector.shape_cast %226 : vector<4x8xf32> to vector<4x8x1xf32>
    %228 = tpu.reciprocal %227 {approx = true} : vector<4x8x1xf32> -> vector<4x8x1xf32>
    %229 = vector.broadcast %228 : vector<4x8x1xf32> to vector<4x8x8xf32>
    %230 = arith.mulf %225, %229 : vector<4x8x8xf32>
    %231 = arith.truncf %230 : vector<4x8x8xf32> to vector<4x8x8xbf16>
    "tpu.trace_start"() <{level = 10 : i32, message = "hqk,hkd->hqd"}> : () -> ()
    %cst_80 = arith.constant dense<0.000000e+00> : vector<4x8x8xf32>
    %232 = tpu.matmul %231, %214, %cst_80 {dimension_numbers = #tpu.dot_dimension_numbers<[2], [1], [1], [2], [0, 0, 0, 1, 1, 2], [0], [0]>} : vector<4x8x8xbf16>, vector<4x8x8xbf16>, vector<4x8x8xf32> -> vector<4x8x8xf32>
    "tpu.trace_stop"() : () -> ()
    %233 = arith.truncf %232 : vector<4x8x8xf32> to vector<4x8x8xbf16>
    "tpu.trace_start"() <{level = 10 : i32, message = "hsd,hdk->hsk"}> : () -> ()
    %cst_81 = arith.constant dense<0.000000e+00> : vector<4x8x32xf32>
    %234 = tpu.matmul %233, %14, %cst_81 {dimension_numbers = #tpu.dot_dimension_numbers<[2], [1], [1], [2], [0, 0, 0, 1, 1, 2], [0], [0]>} : vector<4x8x8xbf16>, vector<4x8x32xbf16>, vector<4x8x32xf32> -> vector<4x8x32xf32>
    "tpu.trace_stop"() : () -> ()
    %cst_82 = arith.constant dense<0.000000e+00> : vector<8x32xf32>
    %235 = vector.multi_reduction <add>, %234, %cst_82 [0] : vector<4x8x32xf32> to vector<8x32xf32>
    %236 = arith.addf %158, %235 : vector<8x32xf32>
    %237 = vector.broadcast %22 : vector<1x32xf32> to vector<8x32xf32>
    %238 = arith.addf %236, %237 : vector<8x32xf32>
    %cst_83 = arith.constant dense<0.000000e+00> : vector<8xf32>
    %239 = vector.multi_reduction <add>, %238, %cst_83 [1] : vector<8x32xf32> to vector<8xf32>
    %240 = vector.shape_cast %239 : vector<8xf32> to vector<8x1xf32>
    %cst_84 = arith.constant 3.200000e+01 : f32
    %241 = vector.broadcast %cst_84 : f32 to vector<8x1xf32>
    %242 = arith.divf %240, %241 : vector<8x1xf32>
    %243 = vector.broadcast %242 : vector<8x1xf32> to vector<8x32xf32>
    %244 = arith.subf %238, %243 : vector<8x32xf32>
    %245 = arith.mulf %244, %244 : vector<8x32xf32>
    %cst_85 = arith.constant dense<0.000000e+00> : vector<8xf32>
    %246 = vector.multi_reduction <add>, %245, %cst_85 [1] : vector<8x32xf32> to vector<8xf32>
    %247 = vector.shape_cast %246 : vector<8xf32> to vector<8x1xf32>
    %cst_86 = arith.constant 3.200000e+01 : f32
    %248 = vector.broadcast %cst_86 : f32 to vector<8x1xf32>
    %249 = arith.divf %247, %248 : vector<8x1xf32>
    %cst_87 = arith.constant 9.99999974E-6 : f32
    %250 = vector.broadcast %cst_87 : f32 to vector<8x1xf32>
    %251 = arith.addf %249, %250 : vector<8x1xf32>
    %252 = math.rsqrt %251 : vector<8x1xf32>
    %253 = vector.broadcast %252 : vector<8x1xf32> to vector<8x32xf32>
    %254 = arith.mulf %244, %253 : vector<8x32xf32>
    %255 = vector.broadcast %8 : vector<1x32xf32> to vector<8x32xf32>
    %256 = arith.mulf %254, %255 : vector<8x32xf32>
    %257 = vector.broadcast %10 : vector<1x32xf32> to vector<8x32xf32>
    %258 = arith.addf %256, %257 : vector<8x32xf32>
    %259 = arith.truncf %258 : vector<8x32xf32> to vector<8x32xbf16>
    %cst_88 = arith.constant dense<0.000000e+00> : vector<8x128xf32>
    %260 = tpu.matmul %259, %16, %cst_88 {dimension_numbers = #tpu.dot_dimension_numbers<[1], [0], [0], [1], [0, 0, 1, 1], [], []>} : vector<8x32xbf16>, vector<32x128xbf16>, vector<8x128xf32> -> vector<8x128xf32>
    %261 = vector.broadcast %24 : vector<1x128xf32> to vector<8x128xf32>
    %262 = arith.addf %260, %261 : vector<8x128xf32>
    %cst_89 = arith.constant 5.000000e-01 : f32
    %263 = vector.broadcast %cst_89 : f32 to vector<8x128xf32>
    %264 = arith.mulf %263, %262 : vector<8x128xf32>
    %cst_90 = arith.constant 4.471500e-02 : f32
    %265 = vector.broadcast %cst_90 : f32 to vector<8x128xf32>
    %266 = arith.mulf %265, %262 : vector<8x128xf32>
    %267 = arith.mulf %266, %262 : vector<8x128xf32>
    %268 = arith.mulf %267, %262 : vector<8x128xf32>
    %269 = arith.addf %262, %268 : vector<8x128xf32>
    %cst_91 = arith.constant 0.797884583 : f32
    %270 = vector.broadcast %cst_91 : f32 to vector<8x128xf32>
    %271 = arith.mulf %270, %269 : vector<8x128xf32>
    %272 = math.tanh %271 : vector<8x128xf32>
    %cst_92 = arith.constant 1.000000e+00 : f32
    %273 = vector.broadcast %cst_92 : f32 to vector<8x128xf32>
    %274 = arith.addf %273, %272 : vector<8x128xf32>
    %275 = arith.mulf %264, %274 : vector<8x128xf32>
    %276 = arith.truncf %275 : vector<8x128xf32> to vector<8x128xbf16>
    %cst_93 = arith.constant dense<0.000000e+00> : vector<8x32xf32>
    %277 = tpu.matmul %276, %18, %cst_93 {dimension_numbers = #tpu.dot_dimension_numbers<[1], [0], [0], [1], [0, 0, 1, 1], [], []>} : vector<8x128xbf16>, vector<128x32xbf16>, vector<8x32xf32> -> vector<8x32xf32>
    %278 = vector.broadcast %26 : vector<1x32xf32> to vector<8x32xf32>
    %279 = arith.addf %277, %278 : vector<8x32xf32>
    %280 = arith.addf %238, %279 : vector<8x32xf32>
    %c1_94 = arith.constant 1 : index
    %c0_95 = arith.constant 0 : index
    %c0_96 = arith.constant 0 : index
    %281 = vector.load %arg15[%c1_94, %c0_95, %c0_96] : memref<2x8x32xf32, #tpu.memory_space<vmem>>, vector<1x8x32xf32>
    %282 = vector.shape_cast %281 : vector<1x8x32xf32> to vector<8x32xf32>
    %283 = vector.shape_cast %280 : vector<8x32xf32> to vector<1x8x32xf32>
    tpu.vector_store %arg15[%c1_94, %c0_95, %c0_96], %283 {strides = array<i32>} : memref<2x8x32xf32, #tpu.memory_space<vmem>>, vector<1x8x32xf32>,
    return
  }
  func.func @transform_0(%arg0: i32, %arg1: i32) -> (i32, i32, i32) {
    %c0_i32 = arith.constant 0 : i32
    %c0_i32_0 = arith.constant 0 : i32
    %c0_i32_1 = arith.constant 0 : i32
    return %arg0, %c0_i32, %c0_i32_0 : i32, i32, i32
  }
  func.func @transform_1(%arg0: i32, %arg1: i32) -> (i32, i32, i32) {
    %c0_i32 = arith.constant 0 : i32
    %c0_i32_0 = arith.constant 0 : i32
    %c0_i32_1 = arith.constant 0 : i32
    return %arg1, %c0_i32, %c0_i32_0 : i32, i32, i32
  }
  func.func @transform_2(%arg0: i32, %arg1: i32) -> (i32, i32, i32) {
    %c0_i32 = arith.constant 0 : i32
    %c0_i32_0 = arith.constant 0 : i32
    %c0_i32_1 = arith.constant 0 : i32
    return %arg1, %c0_i32, %c0_i32_0 : i32, i32, i32
  }
  func.func @transform_3(%arg0: i32, %arg1: i32) -> (i32, i32, i32) {
    %c0_i32 = arith.constant 0 : i32
    %c0_i32_0 = arith.constant 0 : i32
    %c0_i32_1 = arith.constant 0 : i32
    return %arg1, %c0_i32, %c0_i32_0 : i32, i32, i32
  }
  func.func @transform_4(%arg0: i32, %arg1: i32) -> (i32, i32, i32) {
    %c0_i32 = arith.constant 0 : i32
    %c0_i32_0 = arith.constant 0 : i32
    %c0_i32_1 = arith.constant 0 : i32
    return %arg1, %c0_i32, %c0_i32_0 : i32, i32, i32
  }
  func.func @transform_5(%arg0: i32, %arg1: i32) -> (i32, i32, i32, i32) {
    %c0_i32 = arith.constant 0 : i32
    %c0_i32_0 = arith.constant 0 : i32
    %c0_i32_1 = arith.constant 0 : i32
    %c0_i32_2 = arith.constant 0 : i32
    return %arg1, %c0_i32, %c0_i32_0, %c0_i32_1 : i32, i32, i32, i32
  }
  func.func @transform_6(%arg0: i32, %arg1: i32) -> (i32, i32, i32) {
    %c0_i32 = arith.constant 0 : i32
    %c0_i32_0 = arith.constant 0 : i32
    %c0_i32_1 = arith.constant 0 : i32
    return %arg1, %c0_i32, %c0_i32_0 : i32, i32, i32
  }
  func.func @transform_7(%arg0: i32, %arg1: i32) -> (i32, i32, i32) {
    %c0_i32 = arith.constant 0 : i32
    %c0_i32_0 = arith.constant 0 : i32
    %c0_i32_1 = arith.constant 0 : i32
    return %arg1, %c0_i32, %c0_i32_0 : i32, i32, i32
  }
  func.func @transform_8(%arg0: i32, %arg1: i32) -> (i32, i32, i32) {
    %c0_i32 = arith.constant 0 : i32
    %c0_i32_0 = arith.constant 0 : i32
    %c0_i32_1 = arith.constant 0 : i32
    return %arg1, %c0_i32, %c0_i32_0 : i32, i32, i32
  }
  func.func @transform_9(%arg0: i32, %arg1: i32) -> (i32, i32, i32) {
    %c0_i32 = arith.constant 0 : i32
    %c0_i32_0 = arith.constant 0 : i32
    %c0_i32_1 = arith.constant 0 : i32
    return %arg1, %c0_i32, %c0_i32_0 : i32, i32, i32
  }
  func.func @transform_10(%arg0: i32, %arg1: i32) -> (i32, i32, i32) {
    %c0_i32 = arith.constant 0 : i32
    %c0_i32_0 = arith.constant 0 : i32
    %c0_i32_1 = arith.constant 0 : i32
    return %arg1, %c0_i32, %c0_i32_0 : i32, i32, i32
  }
  func.func @transform_11(%arg0: i32, %arg1: i32) -> (i32, i32, i32) {
    %c0_i32 = arith.constant 0 : i32
    %c0_i32_0 = arith.constant 0 : i32
    %c0_i32_1 = arith.constant 0 : i32
    return %arg1, %c0_i32, %c0_i32_0 : i32, i32, i32
  }
  func.func @transform_12(%arg0: i32, %arg1: i32) -> (i32, i32, i32) {
    %c0_i32 = arith.constant 0 : i32
    %c0_i32_0 = arith.constant 0 : i32
    %c0_i32_1 = arith.constant 0 : i32
    return %arg1, %c0_i32, %c0_i32_0 : i32, i32, i32
  }
  func.func @transform_13(%arg0: i32, %arg1: i32) -> (i32, i32, i32) {
    %c0_i32 = arith.constant 0 : i32
    %c0_i32_0 = arith.constant 0 : i32
    %c0_i32_1 = arith.constant 0 : i32
    return %arg0, %c0_i32, %c0_i32_0 : i32, i32, i32
  }
}

</mosaic_0001>

<llo_original>
// kernel: tpu_custom_call.1
$region0: #{tpu_custom_call.1}
  #allocation0 [shape = 'u32[]', space=smem, size = 0x4, offset = 0x4, fixed_abs, tag = 'smem constant byte address 0x4 - core index']
  #allocation1 [shape = 'u32[144,128]{1,0:T(1,128)}', space=vmem, size = 0x12000, scoped, tag = 'internal scratch']
  %s0 = inlined_call_operand.hbm [shape: f32[2,8,32], index: 0, kind: input, shape index: {}]
  %s1 = inlined_call_operand.hbm [shape: f32[2,1,32], index: 1, kind: input, shape index: {}]
  %s2 = inlined_call_operand.hbm [shape: f32[2,1,32], index: 2, kind: input, shape index: {}]
  %s3 = inlined_call_operand.hbm [shape: bf16[2,32,96], index: 3, kind: input, shape index: {}]
  %s4 = inlined_call_operand.hbm [shape: f32[2,1,96], index: 4, kind: input, shape index: {}]
  %s5 = inlined_call_operand.hbm [shape: bf16[2,4,8,32], index: 5, kind: input, shape index: {}]
  %s6 = inlined_call_operand.hbm [shape: f32[2,1,32], index: 6, kind: input, shape index: {}]
  %s7 = inlined_call_operand.hbm [shape: f32[2,1,32], index: 7, kind: input, shape index: {}]
  %s8 = inlined_call_operand.hbm [shape: f32[2,1,32], index: 8, kind: input, shape index: {}]
  %s9 = inlined_call_operand.hbm [shape: bf16[2,32,128], index: 9, kind: input, shape index: {}]
  %s10 = inlined_call_operand.hbm [shape: f32[2,1,128], index: 10, kind: input, shape index: {}]
  %s11 = inlined_call_operand.hbm [shape: bf16[2,128,32], index: 11, kind: input, shape index: {}]
  %s12 = inlined_call_operand.hbm [shape: f32[2,1,32], index: 12, kind: input, shape index: {}]
  %s13 = inlined_call_operand.hbm [shape: f32[2,8,32], index: 13, kind: output, shape index: {}]
  %s14 = sld [smem:[#allocation0]]
  $region141: #{tpu_custom_call.1} parent=0
    _
  %s16 = ssub.s32 1, %s14
  %s17 = scalar_select 0, %s16, %s14
  $region1: #{tpu_custom_call.1} parent=0
    #allocation2 [shape = 'u8[8192]{0}', space=vmem, size = 0x2000, scoped, tag = 'input window, operand 0, single buffered']
    #allocation3 [shape = 's32[2]{0}', space=sflag, size = 0x8, scoped, tag = 'scoped memory for tpu_custom_call.1']
    #allocation4 [shape = 's32[2]{0}', space=sflag, size = 0x8, scoped, tag = 'scoped memory for tpu_custom_call.1']
    #allocation5 [shape = 'u8[1024]{0}', space=vmem, size = 0x400, scoped, tag = 'input window, operand 1']
    #allocation6 [shape = 's32[2]{0}', space=sflag, size = 0x8, scoped, tag = 'scoped memory for tpu_custom_call.1']
    #allocation7 [shape = 'u8[1024]{0}', space=vmem, size = 0x400, scoped, tag = 'input window, operand 2']
    #allocation8 [shape = 'u8[16384]{0}', space=vmem, size = 0x4000, scoped, tag = 'input window, operand 3']
    #allocation9 [shape = 's32[2]{0}', space=sflag, size = 0x8, scoped, tag = 'scoped memory for tpu_custom_call.1']
    #allocation10 [shape = 'u8[1024]{0}', space=vmem, size = 0x400, scoped, tag = 'input window, operand 4']
    #allocation11 [shape = 'u8[16384]{0}', space=vmem, size = 0x4000, scoped, tag = 'input window, operand 5']
    #allocation12 [shape = 's32[2]{0}', space=sflag, size = 0x8, scoped, tag = 'scoped memory for tpu_custom_call.1']
    #allocation13 [shape = 'u8[1024]{0}', space=vmem, size = 0x400, scoped, tag = 'input window, operand 6']
    #allocation14 [shape = 'u8[1024]{0}', space=vmem, size = 0x400, scoped, tag = 'input window, operand 7']
    #allocation15 [shape = 's32[2]{0}', space=sflag, size = 0x8, scoped, tag = 'scoped memory for tpu_custom_call.1']
    #allocation16 [shape = 'u8[1024]{0}', space=vmem, size = 0x400, scoped, tag = 'input window, operand 8']
    #allocation17 [shape = 'u8[16384]{0}', space=vmem, size = 0x4000, scoped, tag = 'input window, operand 9']
    #allocation18 [shape = 's32[2]{0}', space=sflag, size = 0x8, scoped, tag = 'scoped memory for tpu_custom_call.1']
    #allocation19 [shape = 'u8[1024]{0}', space=vmem, size = 0x400, scoped, tag = 'input window, operand 10']
    #allocation20 [shape = 'u8[65536]{0}', space=vmem, size = 0x10000, scoped, tag = 'input window, operand 11']
    #allocation21 [shape = 's32[2]{0}', space=sflag, size = 0x8, scoped, tag = 'scoped memory for tpu_custom_call.1']
    #allocation22 [shape = 'u8[1024]{0}', space=vmem, size = 0x400, scoped, tag = 'input window, operand 12']
    #allocation23 [shape = 'u8[8192]{0}', space=vmem, size = 0x2000, scoped, tag = 'output window, operand 0, single buffered']
    %18 = vsyncpa [#allocation3], 0
    %19 = vsyncpa [#allocation6], 0
    %s20 = scalar_lea.sflag [#allocation6], 1
    %21 = vsyncpa %s20, 0
    %22 = vsyncpa [#allocation9], 0
    %s23 = scalar_lea.sflag [#allocation9], 1
    %24 = vsyncpa %s23, 0
    %25 = vsyncpa [#allocation12], 0
    %s26 = scalar_lea.sflag [#allocation12], 1
    %27 = vsyncpa %s26, 0
    %28 = vsyncpa [#allocation15], 0
    %s29 = scalar_lea.sflag [#allocation15], 1
    %30 = vsyncpa %s29, 0
    %31 = vsyncpa [#allocation18], 0
    %s32 = scalar_lea.sflag [#allocation18], 1
    %33 = vsyncpa %s32, 0
    %34 = vsyncpa [#allocation21], 0
    %s35 = scalar_lea.sflag [#allocation21], 1
    %36 = vsyncpa %s35, 0
    %37 = vsyncpa [#allocation4], 0
    loop: start=0, step=1, limit=4
    $region2: #{tpu_custom_call.1} parent=1 // loop_pre_header
      _
    $region3: #{tpu_custom_call.1} parent=1 // loop_header
      %s39 = sphi 0, %s43
      %p40 = scmp.ge.s32.totalorder %s39, 4
      %s46 = sphi 0, %s58
      %s47 = sphi 0, %s54
      %s48 = sphi 0, %s46
      %s49 = sphi 0, %s47
      %s50 = sphi 0, %s48
      %s51 = sphi 0, %s49
      %s61 = sphi 0, %s63
      %s64 = sphi 0, %s61
      %s65 = sphi 0, %s64
      %s81 = sphi 0, %s65
      %s87 = sphi 0, %s89
      %s90 = sphi 0, %s87
      %s91 = sphi 0, %s90
      %s107 = sphi 0, %s91
      %s113 = sphi 0, %s115
      %s116 = sphi 0, %s113
      %s117 = sphi 0, %s116
      %s133 = sphi 0, %s117
      %s139 = sphi 0, %s141
      %s142 = sphi 0, %s139
      %s143 = sphi 0, %s142
      %s159 = sphi 0, %s143
      %s165 = sphi 0, %s167
      %s168 = sphi 0, %s165
      %s169 = sphi 0, %s168
      %s185 = sphi 0, %s169
      %s191 = sphi 0, %s193
      %s194 = sphi 0, %s191
      %s195 = sphi 0, %s194
      %s211 = sphi 0, %s195
      %s217 = sphi 0, %s219
      %s220 = sphi 0, %s217
      %s221 = sphi 0, %s220
      %s237 = sphi 0, %s221
      %s243 = sphi 0, %s245
      %s246 = sphi 0, %s243
      %s247 = sphi 0, %s246
      %s263 = sphi 0, %s247
      %s269 = sphi 0, %s271
      %s272 = sphi 0, %s269
      %s273 = sphi 0, %s272
      %s289 = sphi 0, %s273
      %s295 = sphi 0, %s297
      %s298 = sphi 0, %s295
      %s299 = sphi 0, %s298
      %s315 = sphi 0, %s299
      %s321 = sphi 0, %s323
      %s324 = sphi 0, %s321
      %s325 = sphi 0, %s324
      %s341 = sphi 0, %s325
      %s347 = sphi 0, %s349
      %s350 = sphi 0, %s347
      %s351 = sphi 0, %s350
      %s367 = sphi 0, %s351
      %s373 = sphi 0, %s375
      %s376 = sphi 0, %s373
      %s377 = sphi 0, %s376
      %s393 = sphi 0, %s377
      %s399 = sphi 0, %s401
      %s402 = sphi 0, %s399
      %s403 = sphi 0, %s402
      %s419 = sphi 0, %s403
    $region4: #{tpu_custom_call.1} parent=1 // loop_header_branch
      %42 = sbr.rel (%p40) target = $region8
    $region5: #{tpu_custom_call.1} parent=1 // loop_body
      %s44 = ssub.s32 %s39, 1
      %s45 = ssub.s32 %s39, 2
      %s52 = sadd.s32 1, %s47
      %p53 = scmp.ge.s32.totalorder %s52, 2
      %s54 = scalar_select %p53, 0, %s52
      %s55 = sadd.s32 1, %s46
      %s56 = scalar_select %p53, %s55, %s46
      %p57 = scmp.ge.s32.totalorder %s56, 1
      %s58 = scalar_select %p57, 0, %s56
      %s59 = ssub.s32 %s46, %s58
      %p60 = scmp.eq.s32.totalorder %s59, 0
      %s62 = sadd.s32 %s61, 1
      %s63 = scalar_select %p60, %s61, %s62
      %p66 = pneg %p60
      %p67 = scmp.eq.s32.totalorder %s39, 1
      %p68 = por %p66, %p67
      %p69 = scmp.ne.s32.totalorder %s61, %s64
      %p70 = scmp.eq.s32.totalorder %s39, 0
      %p71 = por %p69, %p70
      %p72 = scmp.ne.s32.totalorder %s61, %s64
      %p73 = scmp.eq.s32.totalorder %s44, 1
      %p74 = por %p72, %p73
      %p75 = scmp.ne.s32.totalorder %s64, %s65
      %p76 = scmp.eq.s32.totalorder %s44, 0
      %p77 = por %p75, %p76
      %p78 = scmp.ne.s32.totalorder %s64, %s65
      %p79 = scmp.eq.s32.totalorder %s45, 1
      %p80 = por %p78, %p79
      %p82 = scmp.ne.s32.totalorder %s65, %s81
      %p83 = scmp.eq.s32.totalorder %s45, 0
      %p84 = por %p82, %p83
      %s85 = ssub.s32 %s47, %s54
      %p86 = scmp.eq.s32.totalorder %s85, 0
      %s88 = sadd.s32 %s87, 1
      %s89 = scalar_select %p86, %s87, %s88
      %p92 = pneg %p86
      %p93 = scmp.eq.s32.totalorder %s39, 1
      %p94 = por %p92, %p93
      %p95 = scmp.ne.s32.totalorder %s87, %s90
      %p96 = scmp.eq.s32.totalorder %s39, 0
      %p97 = por %p95, %p96
      %p98 = scmp.ne.s32.totalorder %s87, %s90
      %p99 = scmp.eq.s32.totalorder %s44, 1
      %p100 = por %p98, %p99
      %p101 = scmp.ne.s32.totalorder %s90, %s91
      %p102 = scmp.eq.s32.totalorder %s44, 0
      %p103 = por %p101, %p102
      %p104 = scmp.ne.s32.totalorder %s90, %s91
      %p105 = scmp.eq.s32.totalorder %s45, 1
      %p106 = por %p104, %p105
      %p108 = scmp.ne.s32.totalorder %s91, %s107
      %p109 = scmp.eq.s32.totalorder %s45, 0
      %p110 = por %p108, %p109
      %s111 = ssub.s32 %s47, %s54
      %p112 = scmp.eq.s32.totalorder %s111, 0
      %s114 = sadd.s32 %s113, 1
      %s115 = scalar_select %p112, %s113, %s114
      %p118 = pneg %p112
      %p119 = scmp.eq.s32.totalorder %s39, 1
      %p120 = por %p118, %p119
      %p121 = scmp.ne.s32.totalorder %s113, %s116
      %p122 = scmp.eq.s32.totalorder %s39, 0
      %p123 = por %p121, %p122
      %p124 = scmp.ne.s32.totalorder %s113, %s116
      %p125 = scmp.eq.s32.totalorder %s44, 1
      %p126 = por %p124, %p125
      %p127 = scmp.ne.s32.totalorder %s116, %s117
      %p128 = scmp.eq.s32.totalorder %s44, 0
      %p129 = por %p127, %p128
      %p130 = scmp.ne.s32.totalorder %s116, %s117
      %p131 = scmp.eq.s32.totalorder %s45, 1
      %p132 = por %p130, %p131
      %p134 = scmp.ne.s32.totalorder %s117, %s133
      %p135 = scmp.eq.s32.totalorder %s45, 0
      %p136 = por %p134, %p135
      %s137 = ssub.s32 %s47, %s54
      %p138 = scmp.eq.s32.totalorder %s137, 0
      %s140 = sadd.s32 %s139, 1
      %s141 = scalar_select %p138, %s139, %s140
      %p144 = pneg %p138
      %p145 = scmp.eq.s32.totalorder %s39, 1
      %p146 = por %p144, %p145
      %p147 = scmp.ne.s32.totalorder %s139, %s142
      %p148 = scmp.eq.s32.totalorder %s39, 0
      %p149 = por %p147, %p148
      %p150 = scmp.ne.s32.totalorder %s139, %s142
      %p151 = scmp.eq.s32.totalorder %s44, 1
      %p152 = por %p150, %p151
      %p153 = scmp.ne.s32.totalorder %s142, %s143
      %p154 = scmp.eq.s32.totalorder %s44, 0
      %p155 = por %p153, %p154
      %p156 = scmp.ne.s32.totalorder %s142, %s143
      %p157 = scmp.eq.s32.totalorder %s45, 1
      %p158 = por %p156, %p157
      %p160 = scmp.ne.s32.totalorder %s143, %s159
      %p161 = scmp.eq.s32.totalorder %s45, 0
      %p162 = por %p160, %p161
      %s163 = ssub.s32 %s47, %s54
      %p164 = scmp.eq.s32.totalorder %s163, 0
      %s166 = sadd.s32 %s165, 1
      %s167 = scalar_select %p164, %s165, %s166
      %p170 = pneg %p164
      %p171 = scmp.eq.s32.totalorder %s39, 1
      %p172 = por %p170, %p171
      %p173 = scmp.ne.s32.totalorder %s165, %s168
      %p174 = scmp.eq.s32.totalorder %s39, 0
      %p175 = por %p173, %p174
      %p176 = scmp.ne.s32.totalorder %s165, %s168
      %p177 = scmp.eq.s32.totalorder %s44, 1
      %p178 = por %p176, %p177
      %p179 = scmp.ne.s32.totalorder %s168, %s169
      %p180 = scmp.eq.s32.totalorder %s44, 0
      %p181 = por %p179, %p180
      %p182 = scmp.ne.s32.totalorder %s168, %s169
      %p183 = scmp.eq.s32.totalorder %s45, 1
      %p184 = por %p182, %p183
      %p186 = scmp.ne.s32.totalorder %s169, %s185
      %p187 = scmp.eq.s32.totalorder %s45, 0
      %p188 = por %p186, %p187
      %s189 = ssub.s32 %s47, %s54
      %p190 = scmp.eq.s32.totalorder %s189, 0
      %s192 = sadd.s32 %s191, 1
      %s193 = scalar_select %p190, %s191, %s192
      %p196 = pneg %p190
      %p197 = scmp.eq.s32.totalorder %s39, 1
      %p198 = por %p196, %p197
      %p199 = scmp.ne.s32.totalorder %s191, %s194
      %p200 = scmp.eq.s32.totalorder %s39, 0
      %p201 = por %p199, %p200
      %p202 = scmp.ne.s32.totalorder %s191, %s194
      %p203 = scmp.eq.s32.totalorder %s44, 1
      %p204 = por %p202, %p203
      %p205 = scmp.ne.s32.totalorder %s194, %s195
      %p206 = scmp.eq.s32.totalorder %s44, 0
      %p207 = por %p205, %p206
      %p208 = scmp.ne.s32.totalorder %s194, %s195
      %p209 = scmp.eq.s32.totalorder %s45, 1
      %p210 = por %p208, %p209
      %p212 = scmp.ne.s32.totalorder %s195, %s211
      %p213 = scmp.eq.s32.totalorder %s45, 0
      %p214 = por %p212, %p213
      %s215 = ssub.s32 %s47, %s54
      %p216 = scmp.eq.s32.totalorder %s215, 0
      %s218 = sadd.s32 %s217, 1
      %s219 = scalar_select %p216, %s217, %s218
      %p222 = pneg %p216
      %p223 = scmp.eq.s32.totalorder %s39, 1
      %p224 = por %p222, %p223
      %p225 = scmp.ne.s32.totalorder %s217, %s220
      %p226 = scmp.eq.s32.totalorder %s39, 0
      %p227 = por %p225, %p226
      %p228 = scmp.ne.s32.totalorder %s217, %s220
      %p229 = scmp.eq.s32.totalorder %s44, 1
      %p230 = por %p228, %p229
      %p231 = scmp.ne.s32.totalorder %s220, %s221
      %p232 = scmp.eq.s32.totalorder %s44, 0
      %p233 = por %p231, %p232
      %p234 = scmp.ne.s32.totalorder %s220, %s221
      %p235 = scmp.eq.s32.totalorder %s45, 1
      %p236 = por %p234, %p235
      %p238 = scmp.ne.s32.totalorder %s221, %s237
      %p239 = scmp.eq.s32.totalorder %s45, 0
      %p240 = por %p238, %p239
      %s241 = ssub.s32 %s47, %s54
      %p242 = scmp.eq.s32.totalorder %s241, 0
      %s244 = sadd.s32 %s243, 1
      %s245 = scalar_select %p242, %s243, %s244
      %p248 = pneg %p242
      %p249 = scmp.eq.s32.totalorder %s39, 1
      %p250 = por %p248, %p249
      %p251 = scmp.ne.s32.totalorder %s243, %s246
      %p252 = scmp.eq.s32.totalorder %s39, 0
      %p253 = por %p251, %p252
      %p254 = scmp.ne.s32.totalorder %s243, %s246
      %p255 = scmp.eq.s32.totalorder %s44, 1
      %p256 = por %p254, %p255
      %p257 = scmp.ne.s32.totalorder %s246, %s247
      %p258 = scmp.eq.s32.totalorder %s44, 0
      %p259 = por %p257, %p258
      %p260 = scmp.ne.s32.totalorder %s246, %s247
      %p261 = scmp.eq.s32.totalorder %s45, 1
      %p262 = por %p260, %p261
      %p264 = scmp.ne.s32.totalorder %s247, %s263
      %p265 = scmp.eq.s32.totalorder %s45, 0
      %p266 = por %p264, %p265
      %s267 = ssub.s32 %s47, %s54
      %p268 = scmp.eq.s32.totalorder %s267, 0
      %s270 = sadd.s32 %s269, 1
      %s271 = scalar_select %p268, %s269, %s270
      %p274 = pneg %p268
      %p275 = scmp.eq.s32.totalorder %s39, 1
      %p276 = por %p274, %p275
      %p277 = scmp.ne.s32.totalorder %s269, %s272
      %p278 = scmp.eq.s32.totalorder %s39, 0
      %p279 = por %p277, %p278
      %p280 = scmp.ne.s32.totalorder %s269, %s272
      %p281 = scmp.eq.s32.totalorder %s44, 1
      %p282 = por %p280, %p281
      %p283 = scmp.ne.s32.totalorder %s272, %s273
      %p284 = scmp.eq.s32.totalorder %s44, 0
      %p285 = por %p283, %p284
      %p286 = scmp.ne.s32.totalorder %s272, %s273
      %p287 = scmp.eq.s32.totalorder %s45, 1
      %p288 = por %p286, %p287
      %p290 = scmp.ne.s32.totalorder %s273, %s289
      %p291 = scmp.eq.s32.totalorder %s45, 0
      %p292 = por %p290, %p291
      %s293 = ssub.s32 %s47, %s54
      %p294 = scmp.eq.s32.totalorder %s293, 0
      %s296 = sadd.s32 %s295, 1
      %s297 = scalar_select %p294, %s295, %s296
      %p300 = pneg %p294
      %p301 = scmp.eq.s32.totalorder %s39, 1
      %p302 = por %p300, %p301
      %p303 = scmp.ne.s32.totalorder %s295, %s298
      %p304 = scmp.eq.s32.totalorder %s39, 0
      %p305 = por %p303, %p304
      %p306 = scmp.ne.s32.totalorder %s295, %s298
      %p307 = scmp.eq.s32.totalorder %s44, 1
      %p308 = por %p306, %p307
      %p309 = scmp.ne.s32.totalorder %s298, %s299
      %p310 = scmp.eq.s32.totalorder %s44, 0
      %p311 = por %p309, %p310
      %p312 = scmp.ne.s32.totalorder %s298, %s299
      %p313 = scmp.eq.s32.totalorder %s45, 1
      %p314 = por %p312, %p313
      %p316 = scmp.ne.s32.totalorder %s299, %s315
      %p317 = scmp.eq.s32.totalorder %s45, 0
      %p318 = por %p316, %p317
      %s319 = ssub.s32 %s47, %s54
      %p320 = scmp.eq.s32.totalorder %s319, 0
      %s322 = sadd.s32 %s321, 1
      %s323 = scalar_select %p320, %s321, %s322
      %p326 = pneg %p320
      %p327 = scmp.eq.s32.totalorder %s39, 1
      %p328 = por %p326, %p327
      %p329 = scmp.ne.s32.totalorder %s321, %s324
      %p330 = scmp.eq.s32.totalorder %s39, 0
      %p331 = por %p329, %p330
      %p332 = scmp.ne.s32.totalorder %s321, %s324
      %p333 = scmp.eq.s32.totalorder %s44, 1
      %p334 = por %p332, %p333
      %p335 = scmp.ne.s32.totalorder %s324, %s325
      %p336 = scmp.eq.s32.totalorder %s44, 0
      %p337 = por %p335, %p336
      %p338 = scmp.ne.s32.totalorder %s324, %s325
      %p339 = scmp.eq.s32.totalorder %s45, 1
      %p340 = por %p338, %p339
      %p342 = scmp.ne.s32.totalorder %s325, %s341
      %p343 = scmp.eq.s32.totalorder %s45, 0
      %p344 = por %p342, %p343
      %s345 = ssub.s32 %s47, %s54
      %p346 = scmp.eq.s32.totalorder %s345, 0
      %s348 = sadd.s32 %s347, 1
      %s349 = scalar_select %p346, %s347, %s348
      %p352 = pneg %p346
      %p353 = scmp.eq.s32.totalorder %s39, 1
      %p354 = por %p352, %p353
      %p355 = scmp.ne.s32.totalorder %s347, %s350
      %p356 = scmp.eq.s32.totalorder %s39, 0
      %p357 = por %p355, %p356
      %p358 = scmp.ne.s32.totalorder %s347, %s350
      %p359 = scmp.eq.s32.totalorder %s44, 1
      %p360 = por %p358, %p359
      %p361 = scmp.ne.s32.totalorder %s350, %s351
      %p362 = scmp.eq.s32.totalorder %s44, 0
      %p363 = por %p361, %p362
      %p364 = scmp.ne.s32.totalorder %s350, %s351
      %p365 = scmp.eq.s32.totalorder %s45, 1
      %p366 = por %p364, %p365
      %p368 = scmp.ne.s32.totalorder %s351, %s367
      %p369 = scmp.eq.s32.totalorder %s45, 0
      %p370 = por %p368, %p369
      %s371 = ssub.s32 %s47, %s54
      %p372 = scmp.eq.s32.totalorder %s371, 0
      %s374 = sadd.s32 %s373, 1
      %s375 = scalar_select %p372, %s373, %s374
      %p378 = pneg %p372
      %p379 = scmp.eq.s32.totalorder %s39, 1
      %p380 = por %p378, %p379
      %p381 = scmp.ne.s32.totalorder %s373, %s376
      %p382 = scmp.eq.s32.totalorder %s39, 0
      %p383 = por %p381, %p382
      %p384 = scmp.ne.s32.totalorder %s373, %s376
      %p385 = scmp.eq.s32.totalorder %s44, 1
      %p386 = por %p384, %p385
      %p387 = scmp.ne.s32.totalorder %s376, %s377
      %p388 = scmp.eq.s32.totalorder %s44, 0
      %p389 = por %p387, %p388
      %p390 = scmp.ne.s32.totalorder %s376, %s377
      %p391 = scmp.eq.s32.totalorder %s45, 1
      %p392 = por %p390, %p391
      %p394 = scmp.ne.s32.totalorder %s377, %s393
      %p395 = scmp.eq.s32.totalorder %s45, 0
      %p396 = por %p394, %p395
      %s397 = ssub.s32 %s46, %s58
      %p398 = scmp.eq.s32.totalorder %s397, 0
      %s400 = sadd.s32 %s399, 1
      %s401 = scalar_select %p398, %s399, %s400
      %p404 = pneg %p398
      %p405 = scmp.eq.s32.totalorder %s39, 1
      %p406 = por %p404, %p405
      %p407 = scmp.ne.s32.totalorder %s399, %s402
      %p408 = scmp.eq.s32.totalorder %s39, 0
      %p409 = por %p407, %p408
      %p410 = scmp.ne.s32.totalorder %s399, %s402
      %p411 = scmp.eq.s32.totalorder %s44, 1
      %p412 = por %p410, %p411
      %p413 = scmp.ne.s32.totalorder %s402, %s403
      %p414 = scmp.eq.s32.totalorder %s44, 0
      %p415 = por %p413, %p414
      %p416 = scmp.ne.s32.totalorder %s402, %s403
      %p417 = scmp.eq.s32.totalorder %s45, 1
      %p418 = por %p416, %p417
      %p420 = scmp.ne.s32.totalorder %s403, %s419
      %p421 = scmp.eq.s32.totalorder %s45, 0
      %p422 = por %p420, %p421
      %p423 = scmp.le.s32.totalorder 1, %s39
      %p424 = scmp.lt.s32.totalorder %s39, 3
      %p425 = pnand %p423, %p424
      %p426 = pneg %p425
      // Predicated region
      $region9: #{tpu_custom_call.1} parent=5 // pred_check
        _
      $region10: #{tpu_custom_call.1} parent=5 // pred_check_branch
        %428 = sbr.rel (%p425) target = $region12
      $region11: #{tpu_custom_call.1} parent=5 // pred_region
        %s429 = ssub.s32 %s39, 1
        // Predicated region
        $region13: #{tpu_custom_call.1} parent=11 // pred_check
          %p430 = pneg %p77
        $region14: #{tpu_custom_call.1} parent=11 // pred_check_branch
          %432 = sbr.rel (%p430) target = $region16
        $region15: #{tpu_custom_call.1} parent=11 // pred_region
          %s433 = smul.u32 2, %s48
          %s435 = ssub.s32 256, 256
          %436 = vsyncadd [#allocation3], %s435
          %s437 = smul.addr %s433, 128
          %s438 = scalar_lea.hbm %s0, %s437
          %s439 = sshll.u32 [#allocation2], 4
          %s440 = int_to_ptr.vmem [resolvable:$true] %s439
          %445 = dma.hbm_to_vmem [thread:$0]  %s438, 256, %s440, [#allocation3], 128, 128, 8
        $region16: #{tpu_custom_call.1} parent=11 // pred_fallthru
          _
      $region12: #{tpu_custom_call.1} parent=5 // pred_fallthru
        _
      %p446 = scmp.lt.s32.totalorder %s39, 2
      // Predicated region
      $region17: #{tpu_custom_call.1} parent=5 // pred_check
        %p447 = pneg %p446
      $region18: #{tpu_custom_call.1} parent=5 // pred_check_branch
        %449 = sbr.rel (%p447) target = $region20
      $region19: #{tpu_custom_call.1} parent=5 // pred_region
        // Predicated region
        $region21: #{tpu_custom_call.1} parent=19 // pred_check
          %p450 = pneg %p97
        $region22: #{tpu_custom_call.1} parent=19 // pred_check_branch
          %452 = sbr.rel (%p450) target = $region24
        $region23: #{tpu_custom_call.1} parent=19 // pred_region
          %s453 = sand.u32 %s39, 1
          %s454 = scalar_lea.sflag [#allocation6], %s453
          %s455 = sand.u32 %s87, 1
          %s456 = scalar_lea.vmem [#allocation5], %s455
          %s458 = ssub.s32 16, 16
          %459 = vsyncadd %s454, %s458
          %s460 = smul.addr %s47, 16
          %s461 = scalar_lea.hbm %s1, %s460
          %s463 = sshll.u32 %s456, 4
          %s464 = int_to_ptr.vmem [resolvable:$true] %s463
          %466 = dma.hbm_to_vmem [thread:$0]  %s461, 16, %s464, %s454
        $region24: #{tpu_custom_call.1} parent=19 // pred_fallthru
          _
        // Predicated region
        $region25: #{tpu_custom_call.1} parent=19 // pred_check
          %p467 = pneg %p123
        $region26: #{tpu_custom_call.1} parent=19 // pred_check_branch
          %469 = sbr.rel (%p467) target = $region28
        $region27: #{tpu_custom_call.1} parent=19 // pred_region
          %s470 = sand.u32 %s39, 1
          %s471 = scalar_lea.sflag [#allocation6], %s470
          %s472 = sand.u32 %s113, 1
          %s473 = scalar_lea.vmem [#allocation7], %s472
          %s475 = ssub.s32 16, 16
          %476 = vsyncadd %s471, %s475
          %s477 = smul.addr %s47, 16
          %s478 = scalar_lea.hbm %s2, %s477
          %s480 = sshll.u32 %s473, 4
          %s481 = int_to_ptr.vmem [resolvable:$true] %s480
          %483 = dma.hbm_to_vmem [thread:$0]  %s478, 16, %s481, %s471
        $region28: #{tpu_custom_call.1} parent=19 // pred_fallthru
          _
        // Predicated region
        $region29: #{tpu_custom_call.1} parent=19 // pred_check
          %p484 = pneg %p149
        $region30: #{tpu_custom_call.1} parent=19 // pred_check_branch
          %486 = sbr.rel (%p484) target = $region32
        $region31: #{tpu_custom_call.1} parent=19 // pred_region
          %s487 = sand.u32 %s39, 1
          %s488 = scalar_lea.sflag [#allocation9], %s487
          %s489 = sand.u32 %s139, 1
          %s490 = smul.addr %s489, 16
          %s491 = scalar_lea.vmem [#allocation8], %s490
          %s493 = ssub.s32 256, 256
          %494 = vsyncadd %s488, %s493
          %s495 = smul.addr %s47, 4
          %s496 = smul.addr %s495, 64
          %s497 = scalar_lea.hbm %s3, %s496
          %s498 = sshll.u32 %s491, 4
          %s499 = int_to_ptr.vmem [resolvable:$true] %s498
          %504 = dma.hbm_to_vmem [thread:$0]  %s497, 256, %s499, %s488, 64, 64, 4
        $region32: #{tpu_custom_call.1} parent=19 // pred_fallthru
          _
        // Predicated region
        $region33: #{tpu_custom_call.1} parent=19 // pred_check
          %p505 = pneg %p175
        $region34: #{tpu_custom_call.1} parent=19 // pred_check_branch
          %507 = sbr.rel (%p505) target = $region36
        $region35: #{tpu_custom_call.1} parent=19 // pred_region
          %s508 = sand.u32 %s39, 1
          %s509 = scalar_lea.sflag [#allocation9], %s508
          %s510 = sand.u32 %s165, 1
          %s511 = scalar_lea.vmem [#allocation10], %s510
          %s513 = ssub.s32 16, 16
          %514 = vsyncadd %s509, %s513
          %s515 = smul.addr %s47, 16
          %s516 = scalar_lea.hbm %s4, %s515
          %s518 = sshll.u32 %s511, 4
          %s519 = int_to_ptr.vmem [resolvable:$true] %s518
          %521 = dma.hbm_to_vmem [thread:$0]  %s516, 16, %s519, %s509
        $region36: #{tpu_custom_call.1} parent=19 // pred_fallthru
          _
        // Predicated region
        $region37: #{tpu_custom_call.1} parent=19 // pred_check
          %p522 = pneg %p201
        $region38: #{tpu_custom_call.1} parent=19 // pred_check_branch
          %524 = sbr.rel (%p522) target = $region40
        $region39: #{tpu_custom_call.1} parent=19 // pred_region
          %s525 = sand.u32 %s39, 1
          %s526 = scalar_lea.sflag [#allocation12], %s525
          %s527 = sand.u32 %s191, 1
          %s528 = smul.addr %s527, 16
          %s529 = scalar_lea.vmem [#allocation11], %s528
          %s531 = ssub.s32 256, 256
          %532 = vsyncadd %s526, %s531
          %s533 = smul.addr %s47, 4
          %s534 = smul.addr %s533, 64
          %s535 = scalar_lea.hbm %s5, %s534
          %s536 = sshll.u32 %s529, 4
          %s537 = int_to_ptr.vmem [resolvable:$true] %s536
          %542 = dma.hbm_to_vmem [thread:$0]  %s535, 256, %s537, %s526, 64, 64, 4
        $region40: #{tpu_custom_call.1} parent=19 // pred_fallthru
          _
        // Predicated region
        $region41: #{tpu_custom_call.1} parent=19 // pred_check
          %p543 = pneg %p227
        $region42: #{tpu_custom_call.1} parent=19 // pred_check_branch
          %545 = sbr.rel (%p543) target = $region44
        $region43: #{tpu_custom_call.1} parent=19 // pred_region
          %s546 = sand.u32 %s39, 1
          %s547 = scalar_lea.sflag [#allocation12], %s546
          %s548 = sand.u32 %s217, 1
          %s549 = scalar_lea.vmem [#allocation13], %s548
          %s551 = ssub.s32 16, 16
          %552 = vsyncadd %s547, %s551
          %s553 = smul.addr %s47, 16
          %s554 = scalar_lea.hbm %s6, %s553
          %s556 = sshll.u32 %s549, 4
          %s557 = int_to_ptr.vmem [resolvable:$true] %s556
          %559 = dma.hbm_to_vmem [thread:$0]  %s554, 16, %s557, %s547
        $region44: #{tpu_custom_call.1} parent=19 // pred_fallthru
          _
        // Predicated region
        $region45: #{tpu_custom_call.1} parent=19 // pred_check
          %p560 = pneg %p253
        $region46: #{tpu_custom_call.1} parent=19 // pred_check_branch
          %562 = sbr.rel (%p560) target = $region48
        $region47: #{tpu_custom_call.1} parent=19 // pred_region
          %s563 = sand.u32 %s39, 1
          %s564 = scalar_lea.sflag [#allocation15], %s563
          %s565 = sand.u32 %s243, 1
          %s566 = scalar_lea.vmem [#allocation14], %s565
          %s568 = ssub.s32 16, 16
          %569 = vsyncadd %s564, %s568
          %s570 = smul.addr %s47, 16
          %s571 = scalar_lea.hbm %s7, %s570
          %s573 = sshll.u32 %s566, 4
          %s574 = int_to_ptr.vmem [resolvable:$true] %s573
          %576 = dma.hbm_to_vmem [thread:$0]  %s571, 16, %s574, %s564
        $region48: #{tpu_custom_call.1} parent=19 // pred_fallthru
          _
        // Predicated region
        $region49: #{tpu_custom_call.1} parent=19 // pred_check
          %p577 = pneg %p279
        $region50: #{tpu_custom_call.1} parent=19 // pred_check_branch
          %579 = sbr.rel (%p577) target = $region52
        $region51: #{tpu_custom_call.1} parent=19 // pred_region
          %s580 = sand.u32 %s39, 1
          %s581 = scalar_lea.sflag [#allocation15], %s580
          %s582 = sand.u32 %s269, 1
          %s583 = scalar_lea.vmem [#allocation16], %s582
          %s585 = ssub.s32 16, 16
          %586 = vsyncadd %s581, %s585
          %s587 = smul.addr %s47, 16
          %s588 = scalar_lea.hbm %s8, %s587
          %s590 = sshll.u32 %s583, 4
          %s591 = int_to_ptr.vmem [resolvable:$true] %s590
          %593 = dma.hbm_to_vmem [thread:$0]  %s588, 16, %s591, %s581
        $region52: #{tpu_custom_call.1} parent=19 // pred_fallthru
          _
        // Predicated region
        $region53: #{tpu_custom_call.1} parent=19 // pred_check
          %p594 = pneg %p305
        $region54: #{tpu_custom_call.1} parent=19 // pred_check_branch
          %596 = sbr.rel (%p594) target = $region56
        $region55: #{tpu_custom_call.1} parent=19 // pred_region
          %s597 = sand.u32 %s39, 1
          %s598 = scalar_lea.sflag [#allocation18], %s597
          %s599 = sand.u32 %s295, 1
          %s600 = smul.addr %s599, 16
          %s601 = scalar_lea.vmem [#allocation17], %s600
          %s603 = ssub.s32 256, 256
          %604 = vsyncadd %s598, %s603
          %s605 = smul.addr %s47, 4
          %s606 = smul.addr %s605, 64
          %s607 = scalar_lea.hbm %s9, %s606
          %s608 = sshll.u32 %s601, 4
          %s609 = int_to_ptr.vmem [resolvable:$true] %s608
          %614 = dma.hbm_to_vmem [thread:$0]  %s607, 256, %s609, %s598, 64, 64, 4
        $region56: #{tpu_custom_call.1} parent=19 // pred_fallthru
          _
        // Predicated region
        $region57: #{tpu_custom_call.1} parent=19 // pred_check
          %p615 = pneg %p331
        $region58: #{tpu_custom_call.1} parent=19 // pred_check_branch
          %617 = sbr.rel (%p615) target = $region60
        $region59: #{tpu_custom_call.1} parent=19 // pred_region
          %s618 = sand.u32 %s39, 1
          %s619 = scalar_lea.sflag [#allocation18], %s618
          %s620 = sand.u32 %s321, 1
          %s621 = scalar_lea.vmem [#allocation19], %s620
          %s623 = ssub.s32 16, 16
          %624 = vsyncadd %s619, %s623
          %s625 = smul.addr %s47, 16
          %s626 = scalar_lea.hbm %s10, %s625
          %s628 = sshll.u32 %s621, 4
          %s629 = int_to_ptr.vmem [resolvable:$true] %s628
          %631 = dma.hbm_to_vmem [thread:$0]  %s626, 16, %s629, %s619
        $region60: #{tpu_custom_call.1} parent=19 // pred_fallthru
          _
        // Predicated region
        $region61: #{tpu_custom_call.1} parent=19 // pred_check
          %p632 = pneg %p357
        $region62: #{tpu_custom_call.1} parent=19 // pred_check_branch
          %634 = sbr.rel (%p632) target = $region64
        $region63: #{tpu_custom_call.1} parent=19 // pred_region
          %s635 = sand.u32 %s39, 1
          %s636 = scalar_lea.sflag [#allocation21], %s635
          %s637 = sand.u32 %s347, 1
          %s638 = smul.addr %s637, 64
          %s639 = scalar_lea.vmem [#allocation20], %s638
          %s641 = ssub.s32 1024, 1024
          %642 = vsyncadd %s636, %s641
          %s643 = smul.addr %s47, 16
          %s644 = smul.addr %s643, 64
          %s645 = scalar_lea.hbm %s11, %s644
          %s646 = sshll.u32 %s639, 4
          %s647 = int_to_ptr.vmem [resolvable:$true] %s646
          %652 = dma.hbm_to_vmem [thread:$0]  %s645, 1024, %s647, %s636, 64, 64, 4
        $region64: #{tpu_custom_call.1} parent=19 // pred_fallthru
          _
        // Predicated region
        $region65: #{tpu_custom_call.1} parent=19 // pred_check
          %p653 = pneg %p383
        $region66: #{tpu_custom_call.1} parent=19 // pred_check_branch
          %655 = sbr.rel (%p653) target = $region68
        $region67: #{tpu_custom_call.1} parent=19 // pred_region
          %s656 = sand.u32 %s39, 1
          %s657 = scalar_lea.sflag [#allocation21], %s656
          %s658 = sand.u32 %s373, 1
          %s659 = scalar_lea.vmem [#allocation22], %s658
          %s661 = ssub.s32 16, 16
          %662 = vsyncadd %s657, %s661
          %s663 = smul.addr %s47, 16
          %s664 = scalar_lea.hbm %s12, %s663
          %s666 = sshll.u32 %s659, 4
          %s667 = int_to_ptr.vmem [resolvable:$true] %s666
          %669 = dma.hbm_to_vmem [thread:$0]  %s664, 16, %s667, %s657
        $region68: #{tpu_custom_call.1} parent=19 // pred_fallthru
          _
      $region20: #{tpu_custom_call.1} parent=5 // pred_fallthru
        _
      %p670 = scmp.le.s32.totalorder 1, %s39
      %p671 = scmp.lt.s32.totalorder %s39, 3
      %p672 = pnand %p670, %p671
      %p673 = pneg %p672
      // Predicated region
      $region69: #{tpu_custom_call.1} parent=5 // pred_check
        _
      $region70: #{tpu_custom_call.1} parent=5 // pred_check_branch
        %675 = sbr.rel (%p672) target = $region72
      $region71: #{tpu_custom_call.1} parent=5 // pred_region
        %s676 = ssub.s32 %s39, 1
        // Predicated region
        $region73: #{tpu_custom_call.1} parent=71 // pred_check
          %p677 = pneg %p77
        $region74: #{tpu_custom_call.1} parent=71 // pred_check_branch
          %679 = sbr.rel (%p677) target = $region76
        $region75: #{tpu_custom_call.1} parent=71 // pred_region
          %680 = dma.done [#allocation3], 256
        $region76: #{tpu_custom_call.1} parent=71 // pred_fallthru
          _
        %s681 = sand.u32 %s44, 1
        %s682 = scalar_lea.sflag [#allocation6], %s681
        %s683 = sand.u32 %s90, 1
        %s684 = scalar_lea.vmem [#allocation5], %s683
        // Predicated region
        $region77: #{tpu_custom_call.1} parent=71 // pred_check
          %p685 = pneg %p103
        $region78: #{tpu_custom_call.1} parent=71 // pred_check_branch
          %687 = sbr.rel (%p685) target = $region80
        $region79: #{tpu_custom_call.1} parent=71 // pred_region
          %688 = dma.done %s682, 16
        $region80: #{tpu_custom_call.1} parent=71 // pred_fallthru
          _
        %s689 = sand.u32 %s44, 1
        %s690 = scalar_lea.sflag [#allocation6], %s689
        %s691 = sand.u32 %s116, 1
        %s692 = scalar_lea.vmem [#allocation7], %s691
        // Predicated region
        $region81: #{tpu_custom_call.1} parent=71 // pred_check
          %p693 = pneg %p129
        $region82: #{tpu_custom_call.1} parent=71 // pred_check_branch
          %695 = sbr.rel (%p693) target = $region84
        $region83: #{tpu_custom_call.1} parent=71 // pred_region
          %696 = dma.done %s690, 16
        $region84: #{tpu_custom_call.1} parent=71 // pred_fallthru
          _
        %s697 = sand.u32 %s44, 1
        %s698 = scalar_lea.sflag [#allocation9], %s697
        %s699 = sand.u32 %s142, 1
        %s700 = smul.addr %s699, 16
        %s701 = scalar_lea.vmem [#allocation8], %s700
        // Predicated region
        $region85: #{tpu_custom_call.1} parent=71 // pred_check
          %p702 = pneg %p155
        $region86: #{tpu_custom_call.1} parent=71 // pred_check_branch
          %704 = sbr.rel (%p702) target = $region88
        $region87: #{tpu_custom_call.1} parent=71 // pred_region
          %705 = dma.done %s698, 256
        $region88: #{tpu_custom_call.1} parent=71 // pred_fallthru
          _
        %s706 = sand.u32 %s44, 1
        %s707 = scalar_lea.sflag [#allocation9], %s706
        %s708 = sand.u32 %s168, 1
        %s709 = scalar_lea.vmem [#allocation10], %s708
        // Predicated region
        $region89: #{tpu_custom_call.1} parent=71 // pred_check
          %p710 = pneg %p181
        $region90: #{tpu_custom_call.1} parent=71 // pred_check_branch
          %712 = sbr.rel (%p710) target = $region92
        $region91: #{tpu_custom_call.1} parent=71 // pred_region
          %713 = dma.done %s707, 16
        $region92: #{tpu_custom_call.1} parent=71 // pred_fallthru
          _
        %s714 = sand.u32 %s44, 1
        %s715 = scalar_lea.sflag [#allocation12], %s714
        %s716 = sand.u32 %s194, 1
        %s717 = smul.addr %s716, 16
        %s718 = scalar_lea.vmem [#allocation11], %s717
        // Predicated region
        $region93: #{tpu_custom_call.1} parent=71 // pred_check
          %p719 = pneg %p207
        $region94: #{tpu_custom_call.1} parent=71 // pred_check_branch
          %721 = sbr.rel (%p719) target = $region96
        $region95: #{tpu_custom_call.1} parent=71 // pred_region
          %722 = dma.done %s715, 256
        $region96: #{tpu_custom_call.1} parent=71 // pred_fallthru
          _
        %s723 = sand.u32 %s44, 1
        %s724 = scalar_lea.sflag [#allocation12], %s723
        %s725 = sand.u32 %s220, 1
        %s726 = scalar_lea.vmem [#allocation13], %s725
        // Predicated region
        $region97: #{tpu_custom_call.1} parent=71 // pred_check
          %p727 = pneg %p233
        $region98: #{tpu_custom_call.1} parent=71 // pred_check_branch
          %729 = sbr.rel (%p727) target = $region100
        $region99: #{tpu_custom_call.1} parent=71 // pred_region
          %730 = dma.done %s724, 16
        $region100: #{tpu_custom_call.1} parent=71 // pred_fallthru
          _
        %s731 = sand.u32 %s44, 1
        %s732 = scalar_lea.sflag [#allocation15], %s731
        %s733 = sand.u32 %s246, 1
        %s734 = scalar_lea.vmem [#allocation14], %s733
        // Predicated region
        $region101: #{tpu_custom_call.1} parent=71 // pred_check
          %p735 = pneg %p259
        $region102: #{tpu_custom_call.1} parent=71 // pred_check_branch
          %737 = sbr.rel (%p735) target = $region104
        $region103: #{tpu_custom_call.1} parent=71 // pred_region
          %738 = dma.done %s732, 16
        $region104: #{tpu_custom_call.1} parent=71 // pred_fallthru
          _
        %s739 = sand.u32 %s44, 1
        %s740 = scalar_lea.sflag [#allocation15], %s739
        %s741 = sand.u32 %s272, 1
        %s742 = scalar_lea.vmem [#allocation16], %s741
        // Predicated region
        $region105: #{tpu_custom_call.1} parent=71 // pred_check
          %p743 = pneg %p285
        $region106: #{tpu_custom_call.1} parent=71 // pred_check_branch
          %745 = sbr.rel (%p743) target = $region108
        $region107: #{tpu_custom_call.1} parent=71 // pred_region
          %746 = dma.done %s740, 16
        $region108: #{tpu_custom_call.1} parent=71 // pred_fallthru
          _
        %s747 = sand.u32 %s44, 1
        %s748 = scalar_lea.sflag [#allocation18], %s747
        %s749 = sand.u32 %s298, 1
        %s750 = smul.addr %s749, 16
        %s751 = scalar_lea.vmem [#allocation17], %s750
        // Predicated region
        $region109: #{tpu_custom_call.1} parent=71 // pred_check
          %p752 = pneg %p311
        $region110: #{tpu_custom_call.1} parent=71 // pred_check_branch
          %754 = sbr.rel (%p752) target = $region112
        $region111: #{tpu_custom_call.1} parent=71 // pred_region
          %755 = dma.done %s748, 256
        $region112: #{tpu_custom_call.1} parent=71 // pred_fallthru
          _
        %s756 = sand.u32 %s44, 1
        %s757 = scalar_lea.sflag [#allocation18], %s756
        %s758 = sand.u32 %s324, 1
        %s759 = scalar_lea.vmem [#allocation19], %s758
        // Predicated region
        $region113: #{tpu_custom_call.1} parent=71 // pred_check
          %p760 = pneg %p337
        $region114: #{tpu_custom_call.1} parent=71 // pred_check_branch
          %762 = sbr.rel (%p760) target = $region116
        $region115: #{tpu_custom_call.1} parent=71 // pred_region
          %763 = dma.done %s757, 16
        $region116: #{tpu_custom_call.1} parent=71 // pred_fallthru
          _
        %s764 = sand.u32 %s44, 1
        %s765 = scalar_lea.sflag [#allocation21], %s764
        %s766 = sand.u32 %s350, 1
        %s767 = smul.addr %s766, 64
        %s768 = scalar_lea.vmem [#allocation20], %s767
        // Predicated region
        $region117: #{tpu_custom_call.1} parent=71 // pred_check
          %p769 = pneg %p363
        $region118: #{tpu_custom_call.1} parent=71 // pred_check_branch
          %771 = sbr.rel (%p769) target = $region120
        $region119: #{tpu_custom_call.1} parent=71 // pred_region
          %772 = dma.done %s765, 1024
        $region120: #{tpu_custom_call.1} parent=71 // pred_fallthru
          _
        %s773 = sand.u32 %s44, 1
        %s774 = scalar_lea.sflag [#allocation21], %s773
        %s775 = sand.u32 %s376, 1
        %s776 = scalar_lea.vmem [#allocation22], %s775
        // Predicated region
        $region121: #{tpu_custom_call.1} parent=71 // pred_check
          %p777 = pneg %p389
        $region122: #{tpu_custom_call.1} parent=71 // pred_check_branch
          %779 = sbr.rel (%p777) target = $region124
        $region123: #{tpu_custom_call.1} parent=71 // pred_region
          %780 = dma.done %s774, 16
        $region124: #{tpu_custom_call.1} parent=71 // pred_fallthru
          _
        %p781 = pneg %p77
        %p782 = pneg %p74
        %s783 = sand.u32 %s44, 1
        %s784 = scalar_lea.sflag [#allocation6], %s783
        %s785 = sand.u32 %s90, 1
        %s786 = scalar_lea.vmem [#allocation5], %s785
        %p787 = pneg %p103
        %p788 = pneg %p100
        %s789 = sand.u32 %s44, 1
        %s790 = scalar_lea.sflag [#allocation6], %s789
        %s791 = sand.u32 %s116, 1
        %s792 = scalar_lea.vmem [#allocation7], %s791
        %p793 = pneg %p129
        %p794 = pneg %p126
        %s795 = sand.u32 %s44, 1
        %s796 = scalar_lea.sflag [#allocation9], %s795
        %s797 = sand.u32 %s142, 1
        %s798 = smul.addr %s797, 16
        %s799 = scalar_lea.vmem [#allocation8], %s798
        %p800 = pneg %p155
        %p801 = pneg %p152
        %s802 = sand.u32 %s44, 1
        %s803 = scalar_lea.sflag [#allocation9], %s802
        %s804 = sand.u32 %s168, 1
        %s805 = scalar_lea.vmem [#allocation10], %s804
        %p806 = pneg %p181
        %p807 = pneg %p178
        %s808 = sand.u32 %s44, 1
        %s809 = scalar_lea.sflag [#allocation12], %s808
        %s810 = sand.u32 %s194, 1
        %s811 = smul.addr %s810, 16
        %s812 = scalar_lea.vmem [#allocation11], %s811
        %p813 = pneg %p207
        %p814 = pneg %p204
        %s815 = sand.u32 %s44, 1
        %s816 = scalar_lea.sflag [#allocation12], %s815
        %s817 = sand.u32 %s220, 1
        %s818 = scalar_lea.vmem [#allocation13], %s817
        %p819 = pneg %p233
        %p820 = pneg %p230
        %s821 = sand.u32 %s44, 1
        %s822 = scalar_lea.sflag [#allocation15], %s821
        %s823 = sand.u32 %s246, 1
        %s824 = scalar_lea.vmem [#allocation14], %s823
        %p825 = pneg %p259
        %p826 = pneg %p256
        %s827 = sand.u32 %s44, 1
        %s828 = scalar_lea.sflag [#allocation15], %s827
        %s829 = sand.u32 %s272, 1
        %s830 = scalar_lea.vmem [#allocation16], %s829
        %p831 = pneg %p285
        %p832 = pneg %p282
        %s833 = sand.u32 %s44, 1
        %s834 = scalar_lea.sflag [#allocation18], %s833
        %s835 = sand.u32 %s298, 1
        %s836 = smul.addr %s835, 16
        %s837 = scalar_lea.vmem [#allocation17], %s836
        %p838 = pneg %p311
        %p839 = pneg %p308
        %s840 = sand.u32 %s44, 1
        %s841 = scalar_lea.sflag [#allocation18], %s840
        %s842 = sand.u32 %s324, 1
        %s843 = scalar_lea.vmem [#allocation19], %s842
        %p844 = pneg %p337
        %p845 = pneg %p334
        %s846 = sand.u32 %s44, 1
        %s847 = scalar_lea.sflag [#allocation21], %s846
        %s848 = sand.u32 %s350, 1
        %s849 = smul.addr %s848, 64
        %s850 = scalar_lea.vmem [#allocation20], %s849
        %p851 = pneg %p363
        %p852 = pneg %p360
        %s853 = sand.u32 %s44, 1
        %s854 = scalar_lea.sflag [#allocation21], %s853
        %s855 = sand.u32 %s376, 1
        %s856 = scalar_lea.vmem [#allocation22], %s855
        %p857 = pneg %p389
        %p858 = pneg %p386
        %p859 = pneg %p415
        %p860 = pneg %p412
        %s861 = smul.u32 2, %s48
        %s862 = smul.u32 2, %s48
        %p864 = scmp.eq.s32.totalorder %s49, 0
        // Predicated region
        $region125: #{tpu_custom_call.1} parent=71 // pred_check
          %p865 = pneg %p864
        $region126: #{tpu_custom_call.1} parent=71 // pred_check_branch
          %867 = sbr.rel (%p865) target = $region128
        $region127: #{tpu_custom_call.1} parent=71 // pred_region
          %v868 = vld [vmem:[#allocation2] sm:$0xff]
          %v869 = vld [vmem:[#allocation2 + $0x8] sm:$0xff]
          %vm870 = vcmask 261120
          %871 = vst.msk [vmem:[#allocation23] sm:$0xff] %vm870, %v868
          %872 = vst.msk [vmem:[#allocation23 + $0x8] sm:$0xff] %vm870, %v869
        $region128: #{tpu_custom_call.1} parent=71 // pred_fallthru
          _
        %v873 = vld [vmem:[%s684] sm:$0x1]
        %v874 = vld [vmem:[%s692] sm:$0x1]
        %v875 = vld [vmem:[%s734] sm:$0x1]
        %v876 = vld [vmem:[%s742] sm:$0x1]
        %v877 = vld [vmem:[%s701] sm:$0xf]
        %v878 = vld [vmem:[%s701 + $0x4] sm:$0xf]
        %v879 = vld [vmem:[%s701 + $0x8] sm:$0xf]
        %v880 = vld [vmem:[%s701 + $0xc] sm:$0xf]
        %v881 = vld [vmem:[%s718] sm:$0xf]
        %v882 = vld [vmem:[%s718 + $0x4] sm:$0xf]
        %v883 = vld [vmem:[%s718 + $0x8] sm:$0xf]
        %v884 = vld [vmem:[%s718 + $0xc] sm:$0xf]
        %v885 = vld [vmem:[%s751] sm:$0xf]
        %v886 = vld [vmem:[%s751 + $0x4] sm:$0xf]
        %v887 = vld [vmem:[%s751 + $0x8] sm:$0xf]
        %v888 = vld [vmem:[%s751 + $0xc] sm:$0xf]
        %v889 = vld [vmem:[%s768] sm:$0xf]
        %v890 = vld [vmem:[%s768 + $0x4] sm:$0xf]
        %v891 = vld [vmem:[%s768 + $0x8] sm:$0xf]
        %v892 = vld [vmem:[%s768 + $0xc] sm:$0xf]
        %v893 = vld [vmem:[%s768 + $0x10] sm:$0xf]
        %v894 = vld [vmem:[%s768 + $0x14] sm:$0xf]
        %v895 = vld [vmem:[%s768 + $0x18] sm:$0xf]
        %v896 = vld [vmem:[%s768 + $0x1c] sm:$0xf]
        %v897 = vld [vmem:[%s768 + $0x20] sm:$0xf]
        %v898 = vld [vmem:[%s768 + $0x24] sm:$0xf]
        %v899 = vld [vmem:[%s768 + $0x28] sm:$0xf]
        %v900 = vld [vmem:[%s768 + $0x2c] sm:$0xf]
        %v901 = vld [vmem:[%s768 + $0x30] sm:$0xf]
        %v902 = vld [vmem:[%s768 + $0x34] sm:$0xf]
        %v903 = vld [vmem:[%s768 + $0x38] sm:$0xf]
        %v904 = vld [vmem:[%s768 + $0x3c] sm:$0xf]
        %v905 = vld [vmem:[%s709] sm:$0x1]
        %v906 = vld [vmem:[%s726] sm:$0x1]
        %v907 = vld [vmem:[%s759] sm:$0x1]
        %v908 = vld [vmem:[%s776] sm:$0x1]
        %v909 = vlaneseq
        %v910 = vshrl.u32 %v909, 7
        %v911 = vlaneseq
        %v912 = vand.u32 %v911, 127
        %vm913 = vcmp.ge.s32.totalorder %v910, %v912
        %v914 = vld [vmem:[#allocation23] sm:$0xff]
        %vm915 = vcmask 261120
        %v916 = vsel %vm915, %v914, 0.0
        %917 = vadd.xlane.f32.xlu0 %v916
        %v918 = vpop.xlane.xlu0 %917
        %v919 = vrcp.pop 32.0
        %v920 = vmul.f32 %v918, %v919
        %v921 = vsub.f32 %v914, %v920
        %v922 = vmul.f32 %v921, %v921
        %v923 = vsel %vm915, %v922, 0.0
        %924 = vadd.xlane.f32.xlu0 %v923
        %v925 = vpop.xlane.xlu0 %924
        %v926 = vmul.f32 %v925, %v919
        %v927 = vadd.f32 %v926, 1e-05
        %v928 = vrsqrt.pop %v927
        %v929 = vmul.f32 %v921, %v928
        %v931 = vlaneseq
        %v932 = vshrl.u32 %v931, 7
        %v933 = vsub.s32 0, %v932
        %v934 = vrot.slane %v873, %v933
        %v936 = vmul.f32 %v929, %v934
        %v938 = vlaneseq
        %v939 = vshrl.u32 %v938, 7
        %v940 = vsub.s32 0, %v939
        %v941 = vrot.slane %v874, %v940
        %v943 = vadd.f32 %v936, %v941
        %v944 = vpack.c.bf16 %v943, %v943
        %v946 = vlaneseq
        %v947 = vshrl.u32 %v946, 7
        %v948 = vsub.s32 0, %v947
        %v949 = vrot.slane %v905, %v948
        %v955 = vunpack.c.l.b16 %v877
        %v956 = vunpack.c.l.b16 %v878
        %v957 = vunpack.c.l.b16 %v879
        %v958 = vunpack.c.l.b16 %v880
        %v959 = vpack.c.b16 %v956, %v955
        %v960 = vpack.c.b16 %v958, %v957
        %v964 = vsel %vm915, %v944, 0
        %966 = vmatprep.subr.bf16.mxu0 0
        %967 = vmatpush1.bf16.msra.mxu0 %v959
        %968 = vmatprep.subr.bf16.mxu0 0
        %969 = vmatpush1.bf16.msra.mxu0 %v960
        %970 = vmatprep.subr.bf16.mxu0 0
        %971 = vmatpush1.bf16.msra.mxu0 0
        %972 = vmatprep.subr.bf16.mxu0 0
        %973 = vmatpush1.bf16.msra.mxu0 0
        %974 = vmatprep.subr.bf16.mxu0 0
        %975 = vmatpush1.bf16.msra.mxu0 0
        %976 = vmatprep.subr.bf16.mxu0 0
        %977 = vmatpush1.bf16.msra.mxu0 0
        %978 = vmatprep.subr.bf16.mxu0 0
        %979 = vmatpush1.bf16.msra.mxu0 0
        %980 = vmatprep.subr.bf16.mxu0 0
        %981 = vmatpush1.bf16.msra.mxu0 0
        %982 = vmatprep.subr.bf16.mxu0 0
        %983 = vmatpush1.bf16.msra.mxu0 0
        %984 = vmatprep.subr.bf16.mxu0 0
        %985 = vmatpush1.bf16.msra.mxu0 0
        %986 = vmatprep.subr.bf16.mxu0 0
        %987 = vmatpush1.bf16.msra.mxu0 0
        %988 = vmatprep.subr.bf16.mxu0 0
        %989 = vmatpush1.bf16.msra.mxu0 0
        %990 = vmatprep.subr.bf16.mxu0 0
        %991 = vmatpush1.bf16.msra.mxu0 0
        %992 = vmatprep.subr.bf16.mxu0 0
        %993 = vmatpush1.bf16.msra.mxu0 0
        %994 = vmatprep.subr.bf16.mxu0 0
        %995 = vmatpush1.bf16.msra.mxu0 0
        %996 = vmatprep.subr.bf16.mxu0 0
        %997 = vmatpush1.bf16.msra.mxu0 0
        %998 = vmatprep.mubr.bf16.mxu0 0
        %999 = vmatmul.mubr.bf16.gmra.mrb[0].mxu0 %v964
        %v1000 = vpop.f32.mrb[0].mxu0
        %v1001 = vadd.f32 %v949, %v1000
        %v1002 = vpop.f32.mrb[0].mxu0
        %v1003 = vpop.f32.mrb[0].mxu0
        %v1004 = vpop.f32.mrb[0].mxu0
        %1005 = vdwg.mxu0
        %1007 = vrot.lane.b32.xlu0 %v1001, 120
        %v1008 = vpop.permute.xlu0 %1007
        %1010 = vrot.lane.b32.xlu0 %v1001, 112
        %v1011 = vpop.permute.xlu0 %1010
        %1013 = vrot.lane.b32.xlu0 %v1001, 104
        %v1014 = vpop.permute.xlu0 %1013
        %v1016 = vmul.f32 %v1001, 0.35355338
        %v1017 = vmul.f32 %v1008, 0.35355338
        %v1018 = vmul.f32 %v1011, 0.35355338
        %v1019 = vmul.f32 %v1014, 0.35355338
        %v1020 = vpack.c.bf16 %v1016, %v1016
        %v1021 = vpack.c.bf16 %v1017, %v1017
        %v1022 = vpack.c.bf16 %v1018, %v1018
        %v1023 = vpack.c.bf16 %v1019, %v1019
        %v1024 = vpack.c.bf16 %v1001, %v1001
        %v1025 = vpack.c.bf16 %v1008, %v1008
        %v1026 = vpack.c.bf16 %v1011, %v1011
        %v1027 = vpack.c.bf16 %v1014, %v1014
        %1029 = vrot.lane.b32.xlu0 %v1024, 96
        %v1030 = vpop.permute.xlu0 %1029
        %vm1031 = vcmask 64512
        %v1033 = vsel %vm1031, %v1020, 0
        %v1036 = vsel %vm1031, %v1030, 0
        %1038 = vmatprep.subr.bf16.mxu0 0
        %1039 = vmatpush1.bf16.xpose.msra.mxu0 %v1036
        %1040 = vmatprep.subr.bf16.mxu0 0
        %1041 = vmatpush1.bf16.xpose.msra.mxu0 0
        %1042 = vmatprep.subr.bf16.mxu0 0
        %1043 = vmatpush1.bf16.xpose.msra.mxu0 0
        %1044 = vmatprep.subr.bf16.mxu0 0
        %1045 = vmatpush1.bf16.xpose.msra.mxu0 0
        %1046 = vmatprep.subr.bf16.mxu0 0
        %1047 = vmatpush1.bf16.xpose.msra.mxu0 0
        %1048 = vmatprep.subr.bf16.mxu0 0
        %1049 = vmatpush1.bf16.xpose.msra.mxu0 0
        %1050 = vmatprep.subr.bf16.mxu0 0
        %1051 = vmatpush1.bf16.xpose.msra.mxu0 0
        %1052 = vmatprep.subr.bf16.mxu0 0
        %1053 = vmatpush1.bf16.xpose.msra.mxu0 0
        %1054 = vmatprep.subr.bf16.mxu0 0
        %1055 = vmatpush1.bf16.xpose.msra.mxu0 0
        %1056 = vmatprep.subr.bf16.mxu0 0
        %1057 = vmatpush1.bf16.xpose.msra.mxu0 0
        %1058 = vmatprep.subr.bf16.mxu0 0
        %1059 = vmatpush1.bf16.xpose.msra.mxu0 0
        %1060 = vmatprep.subr.bf16.mxu0 0
        %1061 = vmatpush1.bf16.xpose.msra.mxu0 0
        %1062 = vmatprep.subr.bf16.mxu0 0
        %1063 = vmatpush1.bf16.xpose.msra.mxu0 0
        %1064 = vmatprep.subr.bf16.mxu0 0
        %1065 = vmatpush1.bf16.xpose.msra.mxu0 0
        %1066 = vmatprep.subr.bf16.mxu0 0
        %1067 = vmatpush1.bf16.xpose.msra.mxu0 0
        %1068 = vmatprep.subr.bf16.mxu0 0
        %1069 = vmatpush1.bf16.xpose.msra.mxu0 0
        %1070 = vmatprep.mubr.bf16.mxu0 0
        %1071 = vmatmul.mubr.bf16.gmra.mrb[0].mxu0 %v1033
        %v1072 = vpop.f32.mrb[0].mxu0
        %v1073 = vadd.f32 0.0, %v1072
        %v1074 = vpop.f32.mrb[0].mxu0
        %v1075 = vpop.f32.mrb[0].mxu0
        %v1076 = vpop.f32.mrb[0].mxu0
        %1077 = vdwg.mxu0
        %1079 = vrot.lane.b32.xlu0 %v1025, 96
        %v1080 = vpop.permute.xlu0 %1079
        %v1082 = vsel %vm1031, %v1021, 0
        %v1085 = vsel %vm1031, %v1080, 0
        %1087 = vmatprep.subr.bf16.mxu0 0
        %1088 = vmatpush1.bf16.xpose.msra.mxu0 %v1085
        %1089 = vmatprep.subr.bf16.mxu0 0
        %1090 = vmatpush1.bf16.xpose.msra.mxu0 0
        %1091 = vmatprep.subr.bf16.mxu0 0
        %1092 = vmatpush1.bf16.xpose.msra.mxu0 0
        %1093 = vmatprep.subr.bf16.mxu0 0
        %1094 = vmatpush1.bf16.xpose.msra.mxu0 0
        %1095 = vmatprep.subr.bf16.mxu0 0
        %1096 = vmatpush1.bf16.xpose.msra.mxu0 0
        %1097 = vmatprep.subr.bf16.mxu0 0
        %1098 = vmatpush1.bf16.xpose.msra.mxu0 0
        %1099 = vmatprep.subr.bf16.mxu0 0
        %1100 = vmatpush1.bf16.xpose.msra.mxu0 0
        %1101 = vmatprep.subr.bf16.mxu0 0
        %1102 = vmatpush1.bf16.xpose.msra.mxu0 0
        %1103 = vmatprep.subr.bf16.mxu0 0
        %1104 = vmatpush1.bf16.xpose.msra.mxu0 0
        %1105 = vmatprep.subr.bf16.mxu0 0
        %1106 = vmatpush1.bf16.xpose.msra.mxu0 0
        %1107 = vmatprep.subr.bf16.mxu0 0
        %1108 = vmatpush1.bf16.xpose.msra.mxu0 0
        %1109 = vmatprep.subr.bf16.mxu0 0
        %1110 = vmatpush1.bf16.xpose.msra.mxu0 0
        %1111 = vmatprep.subr.bf16.mxu0 0
        %1112 = vmatpush1.bf16.xpose.msra.mxu0 0
        %1113 = vmatprep.subr.bf16.mxu0 0
        %1114 = vmatpush1.bf16.xpose.msra.mxu0 0
        %1115 = vmatprep.subr.bf16.mxu0 0
        %1116 = vmatpush1.bf16.xpose.msra.mxu0 0
        %1117 = vmatprep.subr.bf16.mxu0 0
        %1118 = vmatpush1.bf16.xpose.msra.mxu0 0
        %1119 = vmatprep.mubr.bf16.mxu0 0
        %1120 = vmatmul.mubr.bf16.gmra.mrb[0].mxu0 %v1082
        %v1121 = vpop.f32.mrb[0].mxu0
        %v1122 = vadd.f32 0.0, %v1121
        %v1123 = vpop.f32.mrb[0].mxu0
        %v1124 = vpop.f32.mrb[0].mxu0
        %v1125 = vpop.f32.mrb[0].mxu0
        %1126 = vdwg.mxu0
        %1128 = vrot.lane.b32.xlu0 %v1026, 96
        %v1129 = vpop.permute.xlu0 %1128
        %v1131 = vsel %vm1031, %v1022, 0
        %v1134 = vsel %vm1031, %v1129, 0
        %1136 = vmatprep.subr.bf16.mxu0 0
        %1137 = vmatpush1.bf16.xpose.msra.mxu0 %v1134
        %1138 = vmatprep.subr.bf16.mxu0 0
        %1139 = vmatpush1.bf16.xpose.msra.mxu0 0
        %1140 = vmatprep.subr.bf16.mxu0 0
        %1141 = vmatpush1.bf16.xpose.msra.mxu0 0
        %1142 = vmatprep.subr.bf16.mxu0 0
        %1143 = vmatpush1.bf16.xpose.msra.mxu0 0
        %1144 = vmatprep.subr.bf16.mxu0 0
        %1145 = vmatpush1.bf16.xpose.msra.mxu0 0
        %1146 = vmatprep.subr.bf16.mxu0 0
        %1147 = vmatpush1.bf16.xpose.msra.mxu0 0
        %1148 = vmatprep.subr.bf16.mxu0 0
        %1149 = vmatpush1.bf16.xpose.msra.mxu0 0
        %1150 = vmatprep.subr.bf16.mxu0 0
        %1151 = vmatpush1.bf16.xpose.msra.mxu0 0
        %1152 = vmatprep.subr.bf16.mxu0 0
        %1153 = vmatpush1.bf16.xpose.msra.mxu0 0
        %1154 = vmatprep.subr.bf16.mxu0 0
        %1155 = vmatpush1.bf16.xpose.msra.mxu0 0
        %1156 = vmatprep.subr.bf16.mxu0 0
        %1157 = vmatpush1.bf16.xpose.msra.mxu0 0
        %1158 = vmatprep.subr.bf16.mxu0 0
        %1159 = vmatpush1.bf16.xpose.msra.mxu0 0
        %1160 = vmatprep.subr.bf16.mxu0 0
        %1161 = vmatpush1.bf16.xpose.msra.mxu0 0
        %1162 = vmatprep.subr.bf16.mxu0 0
        %1163 = vmatpush1.bf16.xpose.msra.mxu0 0
        %1164 = vmatprep.subr.bf16.mxu0 0
        %1165 = vmatpush1.bf16.xpose.msra.mxu0 0
        %1166 = vmatprep.subr.bf16.mxu0 0
        %1167 = vmatpush1.bf16.xpose.msra.mxu0 0
        %1168 = vmatprep.mubr.bf16.mxu0 0
        %1169 = vmatmul.mubr.bf16.gmra.mrb[0].mxu0 %v1131
        %v1170 = vpop.f32.mrb[0].mxu0
        %v1171 = vadd.f32 0.0, %v1170
        %v1172 = vpop.f32.mrb[0].mxu0
        %v1173 = vpop.f32.mrb[0].mxu0
        %v1174 = vpop.f32.mrb[0].mxu0
        %1175 = vdwg.mxu0
        %1177 = vrot.lane.b32.xlu0 %v1027, 96
        %v1178 = vpop.permute.xlu0 %1177
        %v1180 = vsel %vm1031, %v1023, 0
        %v1183 = vsel %vm1031, %v1178, 0
        %1185 = vmatprep.subr.bf16.mxu0 0
        %1186 = vmatpush1.bf16.xpose.msra.mxu0 %v1183
        %1187 = vmatprep.subr.bf16.mxu0 0
        %1188 = vmatpush1.bf16.xpose.msra.mxu0 0
        %1189 = vmatprep.subr.bf16.mxu0 0
        %1190 = vmatpush1.bf16.xpose.msra.mxu0 0
        %1191 = vmatprep.subr.bf16.mxu0 0
        %1192 = vmatpush1.bf16.xpose.msra.mxu0 0
        %1193 = vmatprep.subr.bf16.mxu0 0
        %1194 = vmatpush1.bf16.xpose.msra.mxu0 0
        %1195 = vmatprep.subr.bf16.mxu0 0
        %1196 = vmatpush1.bf16.xpose.msra.mxu0 0
        %1197 = vmatprep.subr.bf16.mxu0 0
        %1198 = vmatpush1.bf16.xpose.msra.mxu0 0
        %1199 = vmatprep.subr.bf16.mxu0 0
        %1200 = vmatpush1.bf16.xpose.msra.mxu0 0
        %1201 = vmatprep.subr.bf16.mxu0 0
        %1202 = vmatpush1.bf16.xpose.msra.mxu0 0
        %1203 = vmatprep.subr.bf16.mxu0 0
        %1204 = vmatpush1.bf16.xpose.msra.mxu0 0
        %1205 = vmatprep.subr.bf16.mxu0 0
        %1206 = vmatpush1.bf16.xpose.msra.mxu0 0
        %1207 = vmatprep.subr.bf16.mxu0 0
        %1208 = vmatpush1.bf16.xpose.msra.mxu0 0
        %1209 = vmatprep.subr.bf16.mxu0 0
        %1210 = vmatpush1.bf16.xpose.msra.mxu0 0
        %1211 = vmatprep.subr.bf16.mxu0 0
        %1212 = vmatpush1.bf16.xpose.msra.mxu0 0
        %1213 = vmatprep.subr.bf16.mxu0 0
        %1214 = vmatpush1.bf16.xpose.msra.mxu0 0
        %1215 = vmatprep.subr.bf16.mxu0 0
        %1216 = vmatpush1.bf16.xpose.msra.mxu0 0
        %1217 = vmatprep.mubr.bf16.mxu0 0
        %1218 = vmatmul.mubr.bf16.gmra.mrb[0].mxu0 %v1180
        %v1219 = vpop.f32.mrb[0].mxu0
        %v1220 = vadd.f32 0.0, %v1219
        %v1221 = vpop.f32.mrb[0].mxu0
        %v1222 = vpop.f32.mrb[0].mxu0
        %v1223 = vpop.f32.mrb[0].mxu0
        %1224 = vdwg.mxu0
        %v1225 = vsel %vm913, 1, 0
        %vm1226 = vcmp.eq.s32.totalorder %v1225, 1
        %v1227 = vsel %vm1226, %v1073, -1e+10
        %v1228 = vsel %vm1226, %v1122, -1e+10
        %v1229 = vsel %vm1226, %v1171, -1e+10
        %v1230 = vsel %vm1226, %v1220, -1e+10
        %v1231 = vsel %vm1031, %v1227, -inf
        %1232 = vmax.xlane.f32.xlu0 %v1231
        %v1233 = vpop.xlane.xlu0 %1232
        %v1234 = vsel %vm1031, %v1228, -inf
        %1235 = vmax.xlane.f32.xlu0 %v1234
        %v1236 = vpop.xlane.xlu0 %1235
        %v1237 = vsel %vm1031, %v1229, -inf
        %1238 = vmax.xlane.f32.xlu0 %v1237
        %v1239 = vpop.xlane.xlu0 %1238
        %v1240 = vsel %vm1031, %v1230, -inf
        %1241 = vmax.xlane.f32.xlu0 %v1240
        %v1242 = vpop.xlane.xlu0 %1241
        %v1243 = vsub.f32 %v1227, %v1233
        %v1244 = vsub.f32 %v1228, %v1236
        %v1245 = vsub.f32 %v1229, %v1239
        %v1246 = vsub.f32 %v1230, %v1242
        %v1247 = vmul.f32 %v1243, 1.442695
        %v1248 = vpow.pop %v1247
        %v1249 = vmul.f32 %v1244, 1.442695
        %v1250 = vpow.pop %v1249
        %v1251 = vmul.f32 %v1245, 1.442695
        %v1252 = vpow.pop %v1251
        %v1253 = vmul.f32 %v1246, 1.442695
        %v1254 = vpow.pop %v1253
        %v1255 = vsel %vm1031, %v1248, 0.0
        %1256 = vadd.xlane.f32.xlu0 %v1255
        %v1257 = vpop.xlane.xlu0 %1256
        %v1258 = vsel %vm1031, %v1250, 0.0
        %1259 = vadd.xlane.f32.xlu0 %v1258
        %v1260 = vpop.xlane.xlu0 %1259
        %v1261 = vsel %vm1031, %v1252, 0.0
        %1262 = vadd.xlane.f32.xlu0 %v1261
        %v1263 = vpop.xlane.xlu0 %1262
        %v1264 = vsel %vm1031, %v1254, 0.0
        %1265 = vadd.xlane.f32.xlu0 %v1264
        %v1266 = vpop.xlane.xlu0 %1265
        %v1267 = vrcp.pop %v1257
        %v1268 = vrcp.pop %v1260
        %v1269 = vrcp.pop %v1263
        %v1270 = vrcp.pop %v1266
        %v1271 = vmul.f32 %v1248, %v1267
        %v1272 = vmul.f32 %v1250, %v1268
        %v1273 = vmul.f32 %v1252, %v1269
        %v1274 = vmul.f32 %v1254, %v1270
        %v1275 = vpack.c.bf16 %v1271, %v1271
        %v1276 = vpack.c.bf16 %v1272, %v1272
        %v1277 = vpack.c.bf16 %v1273, %v1273
        %v1278 = vpack.c.bf16 %v1274, %v1274
        %1279 = vrot.lane.b32.xlu0 %v1024, 64
        %v1280 = vpop.permute.xlu0 %1279
        %v1282 = vsel %vm1031, %v1275, 0
        %vm1284 = vcmask 1043456
        %v1286 = vsel %vm1284, %v1280, 0
        %1288 = vmatprep.subr.bf16.mxu0 0
        %1289 = vmatpush1.bf16.msra.mxu0 %v1286
        %1290 = vmatprep.subr.bf16.mxu0 0
        %1291 = vmatpush1.bf16.msra.mxu0 0
        %1292 = vmatprep.subr.bf16.mxu0 0
        %1293 = vmatpush1.bf16.msra.mxu0 0
        %1294 = vmatprep.subr.bf16.mxu0 0
        %1295 = vmatpush1.bf16.msra.mxu0 0
        %1296 = vmatprep.subr.bf16.mxu0 0
        %1297 = vmatpush1.bf16.msra.mxu0 0
        %1298 = vmatprep.subr.bf16.mxu0 0
        %1299 = vmatpush1.bf16.msra.mxu0 0
        %1300 = vmatprep.subr.bf16.mxu0 0
        %1301 = vmatpush1.bf16.msra.mxu0 0
        %1302 = vmatprep.subr.bf16.mxu0 0
        %1303 = vmatpush1.bf16.msra.mxu0 0
        %1304 = vmatprep.subr.bf16.mxu0 0
        %1305 = vmatpush1.bf16.msra.mxu0 0
        %1306 = vmatprep.subr.bf16.mxu0 0
        %1307 = vmatpush1.bf16.msra.mxu0 0
        %1308 = vmatprep.subr.bf16.mxu0 0
        %1309 = vmatpush1.bf16.msra.mxu0 0
        %1310 = vmatprep.subr.bf16.mxu0 0
        %1311 = vmatpush1.bf16.msra.mxu0 0
        %1312 = vmatprep.subr.bf16.mxu0 0
        %1313 = vmatpush1.bf16.msra.mxu0 0
        %1314 = vmatprep.subr.bf16.mxu0 0
        %1315 = vmatpush1.bf16.msra.mxu0 0
        %1316 = vmatprep.subr.bf16.mxu0 0
        %1317 = vmatpush1.bf16.msra.mxu0 0
        %1318 = vmatprep.subr.bf16.mxu0 0
        %1319 = vmatpush1.bf16.msra.mxu0 0
        %1320 = vmatprep.mubr.bf16.mxu0 0
        %1321 = vmatmul.mubr.bf16.gmra.mrb[0].mxu0 %v1282
        %v1322 = vpop.f32.mrb[0].mxu0
        %v1323 = vadd.f32 0.0, %v1322
        %v1324 = vpop.f32.mrb[0].mxu0
        %v1325 = vpop.f32.mrb[0].mxu0
        %v1326 = vpop.f32.mrb[0].mxu0
        %1327 = vdwg.mxu0
        %1328 = vrot.lane.b32.xlu0 %v1025, 64
        %v1329 = vpop.permute.xlu0 %1328
        %v1331 = vsel %vm1031, %v1276, 0
        %v1334 = vsel %vm1284, %v1329, 0
        %1336 = vmatprep.subr.bf16.mxu0 0
        %1337 = vmatpush1.bf16.msra.mxu0 %v1334
        %1338 = vmatprep.subr.bf16.mxu0 0
        %1339 = vmatpush1.bf16.msra.mxu0 0
        %1340 = vmatprep.subr.bf16.mxu0 0
        %1341 = vmatpush1.bf16.msra.mxu0 0
        %1342 = vmatprep.subr.bf16.mxu0 0
        %1343 = vmatpush1.bf16.msra.mxu0 0
        %1344 = vmatprep.subr.bf16.mxu0 0
        %1345 = vmatpush1.bf16.msra.mxu0 0
        %1346 = vmatprep.subr.bf16.mxu0 0
        %1347 = vmatpush1.bf16.msra.mxu0 0
        %1348 = vmatprep.subr.bf16.mxu0 0
        %1349 = vmatpush1.bf16.msra.mxu0 0
        %1350 = vmatprep.subr.bf16.mxu0 0
        %1351 = vmatpush1.bf16.msra.mxu0 0
        %1352 = vmatprep.subr.bf16.mxu0 0
        %1353 = vmatpush1.bf16.msra.mxu0 0
        %1354 = vmatprep.subr.bf16.mxu0 0
        %1355 = vmatpush1.bf16.msra.mxu0 0
        %1356 = vmatprep.subr.bf16.mxu0 0
        %1357 = vmatpush1.bf16.msra.mxu0 0
        %1358 = vmatprep.subr.bf16.mxu0 0
        %1359 = vmatpush1.bf16.msra.mxu0 0
        %1360 = vmatprep.subr.bf16.mxu0 0
        %1361 = vmatpush1.bf16.msra.mxu0 0
        %1362 = vmatprep.subr.bf16.mxu0 0
        %1363 = vmatpush1.bf16.msra.mxu0 0
        %1364 = vmatprep.subr.bf16.mxu0 0
        %1365 = vmatpush1.bf16.msra.mxu0 0
        %1366 = vmatprep.subr.bf16.mxu0 0
        %1367 = vmatpush1.bf16.msra.mxu0 0
        %1368 = vmatprep.mubr.bf16.mxu0 0
        %1369 = vmatmul.mubr.bf16.gmra.mrb[0].mxu0 %v1331
        %v1370 = vpop.f32.mrb[0].mxu0
        %v1371 = vadd.f32 0.0, %v1370
        %v1372 = vpop.f32.mrb[0].mxu0
        %v1373 = vpop.f32.mrb[0].mxu0
        %v1374 = vpop.f32.mrb[0].mxu0
        %1375 = vdwg.mxu0
        %1376 = vrot.lane.b32.xlu0 %v1026, 64
        %v1377 = vpop.permute.xlu0 %1376
        %v1379 = vsel %vm1031, %v1277, 0
        %v1382 = vsel %vm1284, %v1377, 0
        %1384 = vmatprep.subr.bf16.mxu0 0
        %1385 = vmatpush1.bf16.msra.mxu0 %v1382
        %1386 = vmatprep.subr.bf16.mxu0 0
        %1387 = vmatpush1.bf16.msra.mxu0 0
        %1388 = vmatprep.subr.bf16.mxu0 0
        %1389 = vmatpush1.bf16.msra.mxu0 0
        %1390 = vmatprep.subr.bf16.mxu0 0
        %1391 = vmatpush1.bf16.msra.mxu0 0
        %1392 = vmatprep.subr.bf16.mxu0 0
        %1393 = vmatpush1.bf16.msra.mxu0 0
        %1394 = vmatprep.subr.bf16.mxu0 0
        %1395 = vmatpush1.bf16.msra.mxu0 0
        %1396 = vmatprep.subr.bf16.mxu0 0
        %1397 = vmatpush1.bf16.msra.mxu0 0
        %1398 = vmatprep.subr.bf16.mxu0 0
        %1399 = vmatpush1.bf16.msra.mxu0 0
        %1400 = vmatprep.subr.bf16.mxu0 0
        %1401 = vmatpush1.bf16.msra.mxu0 0
        %1402 = vmatprep.subr.bf16.mxu0 0
        %1403 = vmatpush1.bf16.msra.mxu0 0
        %1404 = vmatprep.subr.bf16.mxu0 0
        %1405 = vmatpush1.bf16.msra.mxu0 0
        %1406 = vmatprep.subr.bf16.mxu0 0
        %1407 = vmatpush1.bf16.msra.mxu0 0
        %1408 = vmatprep.subr.bf16.mxu0 0
        %1409 = vmatpush1.bf16.msra.mxu0 0
        %1410 = vmatprep.subr.bf16.mxu0 0
        %1411 = vmatpush1.bf16.msra.mxu0 0
        %1412 = vmatprep.subr.bf16.mxu0 0
        %1413 = vmatpush1.bf16.msra.mxu0 0
        %1414 = vmatprep.subr.bf16.mxu0 0
        %1415 = vmatpush1.bf16.msra.mxu0 0
        %1416 = vmatprep.mubr.bf16.mxu0 0
        %1417 = vmatmul.mubr.bf16.gmra.mrb[0].mxu0 %v1379
        %v1418 = vpop.f32.mrb[0].mxu0
        %v1419 = vadd.f32 0.0, %v1418
        %v1420 = vpop.f32.mrb[0].mxu0
        %v1421 = vpop.f32.mrb[0].mxu0
        %v1422 = vpop.f32.mrb[0].mxu0
        %1423 = vdwg.mxu0
        %1424 = vrot.lane.b32.xlu0 %v1027, 64
        %v1425 = vpop.permute.xlu0 %1424
        %v1427 = vsel %vm1031, %v1278, 0
        %v1430 = vsel %vm1284, %v1425, 0
        %1432 = vmatprep.subr.bf16.mxu0 0
        %1433 = vmatpush1.bf16.msra.mxu0 %v1430
        %1434 = vmatprep.subr.bf16.mxu0 0
        %1435 = vmatpush1.bf16.msra.mxu0 0
        %1436 = vmatprep.subr.bf16.mxu0 0
        %1437 = vmatpush1.bf16.msra.mxu0 0
        %1438 = vmatprep.subr.bf16.mxu0 0
        %1439 = vmatpush1.bf16.msra.mxu0 0
        %1440 = vmatprep.subr.bf16.mxu0 0
        %1441 = vmatpush1.bf16.msra.mxu0 0
        %1442 = vmatprep.subr.bf16.mxu0 0
        %1443 = vmatpush1.bf16.msra.mxu0 0
        %1444 = vmatprep.subr.bf16.mxu0 0
        %1445 = vmatpush1.bf16.msra.mxu0 0
        %1446 = vmatprep.subr.bf16.mxu0 0
        %1447 = vmatpush1.bf16.msra.mxu0 0
        %1448 = vmatprep.subr.bf16.mxu0 0
        %1449 = vmatpush1.bf16.msra.mxu0 0
        %1450 = vmatprep.subr.bf16.mxu0 0
        %1451 = vmatpush1.bf16.msra.mxu0 0
        %1452 = vmatprep.subr.bf16.mxu0 0
        %1453 = vmatpush1.bf16.msra.mxu0 0
        %1454 = vmatprep.subr.bf16.mxu0 0
        %1455 = vmatpush1.bf16.msra.mxu0 0
        %1456 = vmatprep.subr.bf16.mxu0 0
        %1457 = vmatpush1.bf16.msra.mxu0 0
        %1458 = vmatprep.subr.bf16.mxu0 0
        %1459 = vmatpush1.bf16.msra.mxu0 0
        %1460 = vmatprep.subr.bf16.mxu0 0
        %1461 = vmatpush1.bf16.msra.mxu0 0
        %1462 = vmatprep.subr.bf16.mxu0 0
        %1463 = vmatpush1.bf16.msra.mxu0 0
        %1464 = vmatprep.mubr.bf16.mxu0 0
        %1465 = vmatmul.mubr.bf16.gmra.mrb[0].mxu0 %v1427
        %v1466 = vpop.f32.mrb[0].mxu0
        %v1467 = vadd.f32 0.0, %v1466
        %v1468 = vpop.f32.mrb[0].mxu0
        %v1469 = vpop.f32.mrb[0].mxu0
        %v1470 = vpop.f32.mrb[0].mxu0
        %1471 = vdwg.mxu0
        %v1472 = vpack.c.bf16 %v1323, %v1323
        %v1473 = vpack.c.bf16 %v1371, %v1371
        %v1474 = vpack.c.bf16 %v1419, %v1419
        %v1475 = vpack.c.bf16 %v1467, %v1467
        %v1477 = vsel %vm1031, %v1472, 0
        %v1480 = vsel %vm1284, %v881, 0
        %1482 = vmatprep.subr.bf16.mxu0 0
        %1483 = vmatpush1.bf16.msra.mxu0 %v1480
        %1484 = vmatprep.subr.bf16.mxu0 0
        %1485 = vmatpush1.bf16.msra.mxu0 0
        %1486 = vmatprep.subr.bf16.mxu0 0
        %1487 = vmatpush1.bf16.msra.mxu0 0
        %1488 = vmatprep.subr.bf16.mxu0 0
        %1489 = vmatpush1.bf16.msra.mxu0 0
        %1490 = vmatprep.subr.bf16.mxu0 0
        %1491 = vmatpush1.bf16.msra.mxu0 0
        %1492 = vmatprep.subr.bf16.mxu0 0
        %1493 = vmatpush1.bf16.msra.mxu0 0
        %1494 = vmatprep.subr.bf16.mxu0 0
        %1495 = vmatpush1.bf16.msra.mxu0 0
        %1496 = vmatprep.subr.bf16.mxu0 0
        %1497 = vmatpush1.bf16.msra.mxu0 0
        %1498 = vmatprep.subr.bf16.mxu0 0
        %1499 = vmatpush1.bf16.msra.mxu0 0
        %1500 = vmatprep.subr.bf16.mxu0 0
        %1501 = vmatpush1.bf16.msra.mxu0 0
        %1502 = vmatprep.subr.bf16.mxu0 0
        %1503 = vmatpush1.bf16.msra.mxu0 0
        %1504 = vmatprep.subr.bf16.mxu0 0
        %1505 = vmatpush1.bf16.msra.mxu0 0
        %1506 = vmatprep.subr.bf16.mxu0 0
        %1507 = vmatpush1.bf16.msra.mxu0 0
        %1508 = vmatprep.subr.bf16.mxu0 0
        %1509 = vmatpush1.bf16.msra.mxu0 0
        %1510 = vmatprep.subr.bf16.mxu0 0
        %1511 = vmatpush1.bf16.msra.mxu0 0
        %1512 = vmatprep.subr.bf16.mxu0 0
        %1513 = vmatpush1.bf16.msra.mxu0 0
        %1514 = vmatprep.mubr.bf16.mxu0 0
        %1515 = vmatmul.mubr.bf16.gmra.mrb[0].mxu0 %v1477
        %v1516 = vpop.f32.mrb[0].mxu0
        %v1517 = vadd.f32 0.0, %v1516
        %v1518 = vpop.f32.mrb[0].mxu0
        %v1519 = vpop.f32.mrb[0].mxu0
        %v1520 = vpop.f32.mrb[0].mxu0
        %1521 = vdwg.mxu0
        %v1523 = vsel %vm1031, %v1473, 0
        %v1526 = vsel %vm1284, %v882, 0
        %1528 = vmatprep.subr.bf16.mxu0 0
        %1529 = vmatpush1.bf16.msra.mxu0 %v1526
        %1530 = vmatprep.subr.bf16.mxu0 0
        %1531 = vmatpush1.bf16.msra.mxu0 0
        %1532 = vmatprep.subr.bf16.mxu0 0
        %1533 = vmatpush1.bf16.msra.mxu0 0
        %1534 = vmatprep.subr.bf16.mxu0 0
        %1535 = vmatpush1.bf16.msra.mxu0 0
        %1536 = vmatprep.subr.bf16.mxu0 0
        %1537 = vmatpush1.bf16.msra.mxu0 0
        %1538 = vmatprep.subr.bf16.mxu0 0
        %1539 = vmatpush1.bf16.msra.mxu0 0
        %1540 = vmatprep.subr.bf16.mxu0 0
        %1541 = vmatpush1.bf16.msra.mxu0 0
        %1542 = vmatprep.subr.bf16.mxu0 0
        %1543 = vmatpush1.bf16.msra.mxu0 0
        %1544 = vmatprep.subr.bf16.mxu0 0
        %1545 = vmatpush1.bf16.msra.mxu0 0
        %1546 = vmatprep.subr.bf16.mxu0 0
        %1547 = vmatpush1.bf16.msra.mxu0 0
        %1548 = vmatprep.subr.bf16.mxu0 0
        %1549 = vmatpush1.bf16.msra.mxu0 0
        %1550 = vmatprep.subr.bf16.mxu0 0
        %1551 = vmatpush1.bf16.msra.mxu0 0
        %1552 = vmatprep.subr.bf16.mxu0 0
        %1553 = vmatpush1.bf16.msra.mxu0 0
        %1554 = vmatprep.subr.bf16.mxu0 0
        %1555 = vmatpush1.bf16.msra.mxu0 0
        %1556 = vmatprep.subr.bf16.mxu0 0
        %1557 = vmatpush1.bf16.msra.mxu0 0
        %1558 = vmatprep.subr.bf16.mxu0 0
        %1559 = vmatpush1.bf16.msra.mxu0 0
        %1560 = vmatprep.mubr.bf16.mxu0 0
        %1561 = vmatmul.mubr.bf16.gmra.mrb[0].mxu0 %v1523
        %v1562 = vpop.f32.mrb[0].mxu0
        %v1563 = vadd.f32 0.0, %v1562
        %v1564 = vpop.f32.mrb[0].mxu0
        %v1565 = vpop.f32.mrb[0].mxu0
        %v1566 = vpop.f32.mrb[0].mxu0
        %1567 = vdwg.mxu0
        %v1569 = vsel %vm1031, %v1474, 0
        %v1572 = vsel %vm1284, %v883, 0
        %1574 = vmatprep.subr.bf16.mxu0 0
        %1575 = vmatpush1.bf16.msra.mxu0 %v1572
        %1576 = vmatprep.subr.bf16.mxu0 0
        %1577 = vmatpush1.bf16.msra.mxu0 0
        %1578 = vmatprep.subr.bf16.mxu0 0
        %1579 = vmatpush1.bf16.msra.mxu0 0
        %1580 = vmatprep.subr.bf16.mxu0 0
        %1581 = vmatpush1.bf16.msra.mxu0 0
        %1582 = vmatprep.subr.bf16.mxu0 0
        %1583 = vmatpush1.bf16.msra.mxu0 0
        %1584 = vmatprep.subr.bf16.mxu0 0
        %1585 = vmatpush1.bf16.msra.mxu0 0
        %1586 = vmatprep.subr.bf16.mxu0 0
        %1587 = vmatpush1.bf16.msra.mxu0 0
        %1588 = vmatprep.subr.bf16.mxu0 0
        %1589 = vmatpush1.bf16.msra.mxu0 0
        %1590 = vmatprep.subr.bf16.mxu0 0
        %1591 = vmatpush1.bf16.msra.mxu0 0
        %1592 = vmatprep.subr.bf16.mxu0 0
        %1593 = vmatpush1.bf16.msra.mxu0 0
        %1594 = vmatprep.subr.bf16.mxu0 0
        %1595 = vmatpush1.bf16.msra.mxu0 0
        %1596 = vmatprep.subr.bf16.mxu0 0
        %1597 = vmatpush1.bf16.msra.mxu0 0
        %1598 = vmatprep.subr.bf16.mxu0 0
        %1599 = vmatpush1.bf16.msra.mxu0 0
        %1600 = vmatprep.subr.bf16.mxu0 0
        %1601 = vmatpush1.bf16.msra.mxu0 0
        %1602 = vmatprep.subr.bf16.mxu0 0
        %1603 = vmatpush1.bf16.msra.mxu0 0
        %1604 = vmatprep.subr.bf16.mxu0 0
        %1605 = vmatpush1.bf16.msra.mxu0 0
        %1606 = vmatprep.mubr.bf16.mxu0 0
        %1607 = vmatmul.mubr.bf16.gmra.mrb[0].mxu0 %v1569
        %v1608 = vpop.f32.mrb[0].mxu0
        %v1609 = vadd.f32 0.0, %v1608
        %v1610 = vpop.f32.mrb[0].mxu0
        %v1611 = vpop.f32.mrb[0].mxu0
        %v1612 = vpop.f32.mrb[0].mxu0
        %1613 = vdwg.mxu0
        %v1615 = vsel %vm1031, %v1475, 0
        %v1618 = vsel %vm1284, %v884, 0
        %1620 = vmatprep.subr.bf16.mxu0 0
        %1621 = vmatpush1.bf16.msra.mxu0 %v1618
        %1622 = vmatprep.subr.bf16.mxu0 0
        %1623 = vmatpush1.bf16.msra.mxu0 0
        %1624 = vmatprep.subr.bf16.mxu0 0
        %1625 = vmatpush1.bf16.msra.mxu0 0
        %1626 = vmatprep.subr.bf16.mxu0 0
        %1627 = vmatpush1.bf16.msra.mxu0 0
        %1628 = vmatprep.subr.bf16.mxu0 0
        %1629 = vmatpush1.bf16.msra.mxu0 0
        %1630 = vmatprep.subr.bf16.mxu0 0
        %1631 = vmatpush1.bf16.msra.mxu0 0
        %1632 = vmatprep.subr.bf16.mxu0 0
        %1633 = vmatpush1.bf16.msra.mxu0 0
        %1634 = vmatprep.subr.bf16.mxu0 0
        %1635 = vmatpush1.bf16.msra.mxu0 0
        %1636 = vmatprep.subr.bf16.mxu0 0
        %1637 = vmatpush1.bf16.msra.mxu0 0
        %1638 = vmatprep.subr.bf16.mxu0 0
        %1639 = vmatpush1.bf16.msra.mxu0 0
        %1640 = vmatprep.subr.bf16.mxu0 0
        %1641 = vmatpush1.bf16.msra.mxu0 0
        %1642 = vmatprep.subr.bf16.mxu0 0
        %1643 = vmatpush1.bf16.msra.mxu0 0
        %1644 = vmatprep.subr.bf16.mxu0 0
        %1645 = vmatpush1.bf16.msra.mxu0 0
        %1646 = vmatprep.subr.bf16.mxu0 0
        %1647 = vmatpush1.bf16.msra.mxu0 0
        %1648 = vmatprep.subr.bf16.mxu0 0
        %1649 = vmatpush1.bf16.msra.mxu0 0
        %1650 = vmatprep.subr.bf16.mxu0 0
        %1651 = vmatpush1.bf16.msra.mxu0 0
        %1652 = vmatprep.mubr.bf16.mxu0 0
        %1653 = vmatmul.mubr.bf16.gmra.mrb[0].mxu0 %v1615
        %v1654 = vpop.f32.mrb[0].mxu0
        %v1655 = vadd.f32 0.0, %v1654
        %v1656 = vpop.f32.mrb[0].mxu0
        %v1657 = vpop.f32.mrb[0].mxu0
        %v1658 = vpop.f32.mrb[0].mxu0
        %1659 = vdwg.mxu0
        %v1660 = vsel %vm915, %v1517, 0.0
        %v1661 = vsel %vm915, %v1563, 0.0
        %v1662 = vadd.f32 %v1660, %v1661
        %v1663 = vsel %vm915, %v1609, 0.0
        %v1664 = vadd.f32 %v1662, %v1663
        %v1665 = vsel %vm915, %v1655, 0.0
        %v1666 = vadd.f32 %v1664, %v1665
        %v1667 = vadd.f32 %v914, %v1666
        %v1669 = vlaneseq
        %v1670 = vshrl.u32 %v1669, 7
        %v1671 = vsub.s32 0, %v1670
        %v1672 = vrot.slane %v906, %v1671
        %v1674 = vadd.f32 %v1667, %v1672
        %v1675 = vsel %vm915, %v1674, 0.0
        %1676 = vadd.xlane.f32.xlu0 %v1675
        %v1677 = vpop.xlane.xlu0 %1676
        %v1678 = vmul.f32 %v1677, %v919
        %v1679 = vsub.f32 %v1674, %v1678
        %v1680 = vmul.f32 %v1679, %v1679
        %v1681 = vsel %vm915, %v1680, 0.0
        %1682 = vadd.xlane.f32.xlu0 %v1681
        %v1683 = vpop.xlane.xlu0 %1682
        %v1684 = vmul.f32 %v1683, %v919
        %v1685 = vadd.f32 %v1684, 1e-05
        %v1686 = vrsqrt.pop %v1685
        %v1687 = vmul.f32 %v1679, %v1686
        %v1689 = vlaneseq
        %v1690 = vshrl.u32 %v1689, 7
        %v1691 = vsub.s32 0, %v1690
        %v1692 = vrot.slane %v875, %v1691
        %v1694 = vmul.f32 %v1687, %v1692
        %v1696 = vlaneseq
        %v1697 = vshrl.u32 %v1696, 7
        %v1698 = vsub.s32 0, %v1697
        %v1699 = vrot.slane %v876, %v1698
        %v1701 = vadd.f32 %v1694, %v1699
        %v1702 = vpack.c.bf16 %v1701, %v1701
        %v1704 = vlaneseq
        %v1705 = vshrl.u32 %v1704, 7
        %v1706 = vsub.s32 0, %v1705
        %v1707 = vrot.slane %v907, %v1706
        %v1713 = vunpack.c.l.b16 %v885
        %v1714 = vunpack.c.l.b16 %v886
        %v1715 = vunpack.c.l.b16 %v887
        %v1716 = vunpack.c.l.b16 %v888
        %v1717 = vpack.c.b16 %v1714, %v1713
        %v1718 = vpack.c.b16 %v1716, %v1715
        %v1722 = vsel %vm915, %v1702, 0
        %1724 = vmatprep.subr.bf16.mxu0 0
        %1725 = vmatpush1.bf16.msra.mxu0 %v1717
        %1726 = vmatprep.subr.bf16.mxu0 0
        %1727 = vmatpush1.bf16.msra.mxu0 %v1718
        %1728 = vmatprep.subr.bf16.mxu0 0
        %1729 = vmatpush1.bf16.msra.mxu0 0
        %1730 = vmatprep.subr.bf16.mxu0 0
        %1731 = vmatpush1.bf16.msra.mxu0 0
        %1732 = vmatprep.subr.bf16.mxu0 0
        %1733 = vmatpush1.bf16.msra.mxu0 0
        %1734 = vmatprep.subr.bf16.mxu0 0
        %1735 = vmatpush1.bf16.msra.mxu0 0
        %1736 = vmatprep.subr.bf16.mxu0 0
        %1737 = vmatpush1.bf16.msra.mxu0 0
        %1738 = vmatprep.subr.bf16.mxu0 0
        %1739 = vmatpush1.bf16.msra.mxu0 0
        %1740 = vmatprep.subr.bf16.mxu0 0
        %1741 = vmatpush1.bf16.msra.mxu0 0
        %1742 = vmatprep.subr.bf16.mxu0 0
        %1743 = vmatpush1.bf16.msra.mxu0 0
        %1744 = vmatprep.subr.bf16.mxu0 0
        %1745 = vmatpush1.bf16.msra.mxu0 0
        %1746 = vmatprep.subr.bf16.mxu0 0
        %1747 = vmatpush1.bf16.msra.mxu0 0
        %1748 = vmatprep.subr.bf16.mxu0 0
        %1749 = vmatpush1.bf16.msra.mxu0 0
        %1750 = vmatprep.subr.bf16.mxu0 0
        %1751 = vmatpush1.bf16.msra.mxu0 0
        %1752 = vmatprep.subr.bf16.mxu0 0
        %1753 = vmatpush1.bf16.msra.mxu0 0
        %1754 = vmatprep.subr.bf16.mxu0 0
        %1755 = vmatpush1.bf16.msra.mxu0 0
        %1756 = vmatprep.mubr.bf16.mxu0 0
        %1757 = vmatmul.mubr.bf16.gmra.mrb[0].mxu0 %v1722
        %v1758 = vpop.f32.mrb[0].mxu0
        %v1759 = vadd.f32 %v1707, %v1758
        %v1760 = vpop.f32.mrb[0].mxu0
        %v1761 = vpop.f32.mrb[0].mxu0
        %v1762 = vpop.f32.mrb[0].mxu0
        %1763 = vdwg.mxu0
        %v1764 = vmul.f32 %v1759, 0.5
        %v1765 = vmul.f32 %v1759, 0.044715
        %v1766 = vmul.f32 %v1765, %v1759
        %v1767 = vmul.f32 %v1766, %v1759
        %v1768 = vadd.f32 %v1759, %v1767
        %v1769 = vmul.f32 %v1768, 0.7978846
        %v1770 = vtanh.pop %v1769
        %v1771 = vadd.f32 %v1770, 1.0
        %v1772 = vmul.f32 %v1764, %v1771
        %v1773 = vpack.c.bf16 %v1772, %v1772
        %v1775 = vlaneseq
        %v1776 = vshrl.u32 %v1775, 7
        %v1777 = vsub.s32 0, %v1776
        %v1778 = vrot.slane %v908, %v1777
        %v1796 = vunpack.c.l.b16 %v889
        %v1797 = vunpack.c.l.b16 %v890
        %v1798 = vunpack.c.l.b16 %v891
        %v1799 = vunpack.c.l.b16 %v892
        %v1800 = vunpack.c.l.b16 %v893
        %v1801 = vunpack.c.l.b16 %v894
        %v1802 = vunpack.c.l.b16 %v895
        %v1803 = vunpack.c.l.b16 %v896
        %v1804 = vunpack.c.l.b16 %v897
        %v1805 = vunpack.c.l.b16 %v898
        %v1806 = vunpack.c.l.b16 %v899
        %v1807 = vunpack.c.l.b16 %v900
        %v1808 = vunpack.c.l.b16 %v901
        %v1809 = vunpack.c.l.b16 %v902
        %v1810 = vunpack.c.l.b16 %v903
        %v1811 = vunpack.c.l.b16 %v904
        %v1812 = vpack.c.b16 %v1797, %v1796
        %v1813 = vpack.c.b16 %v1799, %v1798
        %v1814 = vpack.c.b16 %v1801, %v1800
        %v1815 = vpack.c.b16 %v1803, %v1802
        %v1816 = vpack.c.b16 %v1805, %v1804
        %v1817 = vpack.c.b16 %v1807, %v1806
        %v1818 = vpack.c.b16 %v1809, %v1808
        %v1819 = vpack.c.b16 %v1811, %v1810
        %1828 = vmatprep.subr.bf16.mxu0 0
        %1829 = vmatpush1.bf16.msra.mxu0 %v1812
        %1830 = vmatprep.subr.bf16.mxu0 0
        %1831 = vmatpush1.bf16.msra.mxu0 %v1813
        %1832 = vmatprep.subr.bf16.mxu0 0
        %1833 = vmatpush1.bf16.msra.mxu0 %v1814
        %1834 = vmatprep.subr.bf16.mxu0 0
        %1835 = vmatpush1.bf16.msra.mxu0 %v1815
        %1836 = vmatprep.subr.bf16.mxu0 0
        %1837 = vmatpush1.bf16.msra.mxu0 %v1816
        %1838 = vmatprep.subr.bf16.mxu0 0
        %1839 = vmatpush1.bf16.msra.mxu0 %v1817
        %1840 = vmatprep.subr.bf16.mxu0 0
        %1841 = vmatpush1.bf16.msra.mxu0 %v1818
        %1842 = vmatprep.subr.bf16.mxu0 0
        %1843 = vmatpush1.bf16.msra.mxu0 %v1819
        %1844 = vmatprep.subr.bf16.mxu0 0
        %1845 = vmatpush1.bf16.msra.mxu0 0
        %1846 = vmatprep.subr.bf16.mxu0 0
        %1847 = vmatpush1.bf16.msra.mxu0 0
        %1848 = vmatprep.subr.bf16.mxu0 0
        %1849 = vmatpush1.bf16.msra.mxu0 0
        %1850 = vmatprep.subr.bf16.mxu0 0
        %1851 = vmatpush1.bf16.msra.mxu0 0
        %1852 = vmatprep.subr.bf16.mxu0 0
        %1853 = vmatpush1.bf16.msra.mxu0 0
        %1854 = vmatprep.subr.bf16.mxu0 0
        %1855 = vmatpush1.bf16.msra.mxu0 0
        %1856 = vmatprep.subr.bf16.mxu0 0
        %1857 = vmatpush1.bf16.msra.mxu0 0
        %1858 = vmatprep.subr.bf16.mxu0 0
        %1859 = vmatpush1.bf16.msra.mxu0 0
        %1860 = vmatprep.mubr.bf16.mxu0 0
        %1861 = vmatmul.mubr.bf16.gmra.mrb[0].mxu0 %v1773
        %v1862 = vpop.f32.mrb[0].mxu0
        %v1863 = vadd.f32 %v1778, %v1862
        %v1864 = vpop.f32.mrb[0].mxu0
        %v1865 = vpop.f32.mrb[0].mxu0
        %v1866 = vpop.f32.mrb[0].mxu0
        %1867 = vdwg.mxu0
        %v1868 = vadd.f32 %v1674, %v1863
        %1869 = vst.msk [vmem:[#allocation23] sm:$0xff] %vm915, %v1868
        %s1870 = scalar_lea.vmem [#allocation23], 8
        %v1871 = vld [vmem:[%s1870] sm:$0xff]
        %v1872 = vsel %vm915, %v1871, 0.0
        %1873 = vadd.xlane.f32.xlu0 %v1872
        %v1874 = vpop.xlane.xlu0 %1873
        %v1875 = vmul.f32 %v1874, %v919
        %v1876 = vsub.f32 %v1871, %v1875
        %v1877 = vmul.f32 %v1876, %v1876
        %v1878 = vsel %vm915, %v1877, 0.0
        %1879 = vadd.xlane.f32.xlu0 %v1878
        %v1880 = vpop.xlane.xlu0 %1879
        %v1881 = vmul.f32 %v1880, %v919
        %v1882 = vadd.f32 %v1881, 1e-05
        %v1883 = vrsqrt.pop %v1882
        %v1884 = vmul.f32 %v1876, %v1883
        %v1885 = vmul.f32 %v1884, %v934
        %v1886 = vadd.f32 %v1885, %v941
        %v1887 = vpack.c.bf16 %v1886, %v1886
        %v1889 = vsel %vm915, %v1887, 0
        %1891 = vmatprep.subr.bf16.mxu0 0
        %1892 = vmatpush1.bf16.msra.mxu0 %v959
        %1893 = vmatprep.subr.bf16.mxu0 0
        %1894 = vmatpush1.bf16.msra.mxu0 %v960
        %1895 = vmatprep.subr.bf16.mxu0 0
        %1896 = vmatpush1.bf16.msra.mxu0 0
        %1897 = vmatprep.subr.bf16.mxu0 0
        %1898 = vmatpush1.bf16.msra.mxu0 0
        %1899 = vmatprep.subr.bf16.mxu0 0
        %1900 = vmatpush1.bf16.msra.mxu0 0
        %1901 = vmatprep.subr.bf16.mxu0 0
        %1902 = vmatpush1.bf16.msra.mxu0 0
        %1903 = vmatprep.subr.bf16.mxu0 0
        %1904 = vmatpush1.bf16.msra.mxu0 0
        %1905 = vmatprep.subr.bf16.mxu0 0
        %1906 = vmatpush1.bf16.msra.mxu0 0
        %1907 = vmatprep.subr.bf16.mxu0 0
        %1908 = vmatpush1.bf16.msra.mxu0 0
        %1909 = vmatprep.subr.bf16.mxu0 0
        %1910 = vmatpush1.bf16.msra.mxu0 0
        %1911 = vmatprep.subr.bf16.mxu0 0
        %1912 = vmatpush1.bf16.msra.mxu0 0
        %1913 = vmatprep.subr.bf16.mxu0 0
        %1914 = vmatpush1.bf16.msra.mxu0 0
        %1915 = vmatprep.subr.bf16.mxu0 0
        %1916 = vmatpush1.bf16.msra.mxu0 0
        %1917 = vmatprep.subr.bf16.mxu0 0
        %1918 = vmatpush1.bf16.msra.mxu0 0
        %1919 = vmatprep.subr.bf16.mxu0 0
        %1920 = vmatpush1.bf16.msra.mxu0 0
        %1921 = vmatprep.subr.bf16.mxu0 0
        %1922 = vmatpush1.bf16.msra.mxu0 0
        %1923 = vmatprep.mubr.bf16.mxu0 0
        %1924 = vmatmul.mubr.bf16.gmra.mrb[0].mxu0 %v1889
        %v1925 = vpop.f32.mrb[0].mxu0
        %v1926 = vadd.f32 %v949, %v1925
        %v1927 = vpop.f32.mrb[0].mxu0
        %v1928 = vpop.f32.mrb[0].mxu0
        %v1929 = vpop.f32.mrb[0].mxu0
        %1930 = vdwg.mxu0
        %1932 = vrot.lane.b32.xlu0 %v1926, 120
        %v1933 = vpop.permute.xlu0 %1932
        %1935 = vrot.lane.b32.xlu0 %v1926, 112
        %v1936 = vpop.permute.xlu0 %1935
        %1938 = vrot.lane.b32.xlu0 %v1926, 104
        %v1939 = vpop.permute.xlu0 %1938
        %v1941 = vmul.f32 %v1926, 0.35355338
        %v1942 = vmul.f32 %v1933, 0.35355338
        %v1943 = vmul.f32 %v1936, 0.35355338
        %v1944 = vmul.f32 %v1939, 0.35355338
        %v1945 = vpack.c.bf16 %v1941, %v1941
        %v1946 = vpack.c.bf16 %v1942, %v1942
        %v1947 = vpack.c.bf16 %v1943, %v1943
        %v1948 = vpack.c.bf16 %v1944, %v1944
        %v1949 = vpack.c.bf16 %v1926, %v1926
        %v1950 = vpack.c.bf16 %v1933, %v1933
        %v1951 = vpack.c.bf16 %v1936, %v1936
        %v1952 = vpack.c.bf16 %v1939, %v1939
        %1954 = vrot.lane.b32.xlu0 %v1949, 96
        %v1955 = vpop.permute.xlu0 %1954
        %v1957 = vsel %vm1031, %v1945, 0
        %v1960 = vsel %vm1031, %v1955, 0
        %1962 = vmatprep.subr.bf16.mxu0 0
        %1963 = vmatpush1.bf16.xpose.msra.mxu0 %v1960
        %1964 = vmatprep.subr.bf16.mxu0 0
        %1965 = vmatpush1.bf16.xpose.msra.mxu0 0
        %1966 = vmatprep.subr.bf16.mxu0 0
        %1967 = vmatpush1.bf16.xpose.msra.mxu0 0
        %1968 = vmatprep.subr.bf16.mxu0 0
        %1969 = vmatpush1.bf16.xpose.msra.mxu0 0
        %1970 = vmatprep.subr.bf16.mxu0 0
        %1971 = vmatpush1.bf16.xpose.msra.mxu0 0
        %1972 = vmatprep.subr.bf16.mxu0 0
        %1973 = vmatpush1.bf16.xpose.msra.mxu0 0
        %1974 = vmatprep.subr.bf16.mxu0 0
        %1975 = vmatpush1.bf16.xpose.msra.mxu0 0
        %1976 = vmatprep.subr.bf16.mxu0 0
        %1977 = vmatpush1.bf16.xpose.msra.mxu0 0
        %1978 = vmatprep.subr.bf16.mxu0 0
        %1979 = vmatpush1.bf16.xpose.msra.mxu0 0
        %1980 = vmatprep.subr.bf16.mxu0 0
        %1981 = vmatpush1.bf16.xpose.msra.mxu0 0
        %1982 = vmatprep.subr.bf16.mxu0 0
        %1983 = vmatpush1.bf16.xpose.msra.mxu0 0
        %1984 = vmatprep.subr.bf16.mxu0 0
        %1985 = vmatpush1.bf16.xpose.msra.mxu0 0
        %1986 = vmatprep.subr.bf16.mxu0 0
        %1987 = vmatpush1.bf16.xpose.msra.mxu0 0
        %1988 = vmatprep.subr.bf16.mxu0 0
        %1989 = vmatpush1.bf16.xpose.msra.mxu0 0
        %1990 = vmatprep.subr.bf16.mxu0 0
        %1991 = vmatpush1.bf16.xpose.msra.mxu0 0
        %1992 = vmatprep.subr.bf16.mxu0 0
        %1993 = vmatpush1.bf16.xpose.msra.mxu0 0
        %1994 = vmatprep.mubr.bf16.mxu0 0
        %1995 = vmatmul.mubr.bf16.gmra.mrb[0].mxu0 %v1957
        %v1996 = vpop.f32.mrb[0].mxu0
        %v1997 = vadd.f32 0.0, %v1996
        %v1998 = vpop.f32.mrb[0].mxu0
        %v1999 = vpop.f32.mrb[0].mxu0
        %v2000 = vpop.f32.mrb[0].mxu0
        %2001 = vdwg.mxu0
        %2003 = vrot.lane.b32.xlu0 %v1950, 96
        %v2004 = vpop.permute.xlu0 %2003
        %v2006 = vsel %vm1031, %v1946, 0
        %v2009 = vsel %vm1031, %v2004, 0
        %2011 = vmatprep.subr.bf16.mxu0 0
        %2012 = vmatpush1.bf16.xpose.msra.mxu0 %v2009
        %2013 = vmatprep.subr.bf16.mxu0 0
        %2014 = vmatpush1.bf16.xpose.msra.mxu0 0
        %2015 = vmatprep.subr.bf16.mxu0 0
        %2016 = vmatpush1.bf16.xpose.msra.mxu0 0
        %2017 = vmatprep.subr.bf16.mxu0 0
        %2018 = vmatpush1.bf16.xpose.msra.mxu0 0
        %2019 = vmatprep.subr.bf16.mxu0 0
        %2020 = vmatpush1.bf16.xpose.msra.mxu0 0
        %2021 = vmatprep.subr.bf16.mxu0 0
        %2022 = vmatpush1.bf16.xpose.msra.mxu0 0
        %2023 = vmatprep.subr.bf16.mxu0 0
        %2024 = vmatpush1.bf16.xpose.msra.mxu0 0
        %2025 = vmatprep.subr.bf16.mxu0 0
        %2026 = vmatpush1.bf16.xpose.msra.mxu0 0
        %2027 = vmatprep.subr.bf16.mxu0 0
        %2028 = vmatpush1.bf16.xpose.msra.mxu0 0
        %2029 = vmatprep.subr.bf16.mxu0 0
        %2030 = vmatpush1.bf16.xpose.msra.mxu0 0
        %2031 = vmatprep.subr.bf16.mxu0 0
        %2032 = vmatpush1.bf16.xpose.msra.mxu0 0
        %2033 = vmatprep.subr.bf16.mxu0 0
        %2034 = vmatpush1.bf16.xpose.msra.mxu0 0
        %2035 = vmatprep.subr.bf16.mxu0 0
        %2036 = vmatpush1.bf16.xpose.msra.mxu0 0
        %2037 = vmatprep.subr.bf16.mxu0 0
        %2038 = vmatpush1.bf16.xpose.msra.mxu0 0
        %2039 = vmatprep.subr.bf16.mxu0 0
        %2040 = vmatpush1.bf16.xpose.msra.mxu0 0
        %2041 = vmatprep.subr.bf16.mxu0 0
        %2042 = vmatpush1.bf16.xpose.msra.mxu0 0
        %2043 = vmatprep.mubr.bf16.mxu0 0
        %2044 = vmatmul.mubr.bf16.gmra.mrb[0].mxu0 %v2006
        %v2045 = vpop.f32.mrb[0].mxu0
        %v2046 = vadd.f32 0.0, %v2045
        %v2047 = vpop.f32.mrb[0].mxu0
        %v2048 = vpop.f32.mrb[0].mxu0
        %v2049 = vpop.f32.mrb[0].mxu0
        %2050 = vdwg.mxu0
        %2052 = vrot.lane.b32.xlu0 %v1951, 96
        %v2053 = vpop.permute.xlu0 %2052
        %v2055 = vsel %vm1031, %v1947, 0
        %v2058 = vsel %vm1031, %v2053, 0
        %2060 = vmatprep.subr.bf16.mxu0 0
        %2061 = vmatpush1.bf16.xpose.msra.mxu0 %v2058
        %2062 = vmatprep.subr.bf16.mxu0 0
        %2063 = vmatpush1.bf16.xpose.msra.mxu0 0
        %2064 = vmatprep.subr.bf16.mxu0 0
        %2065 = vmatpush1.bf16.xpose.msra.mxu0 0
        %2066 = vmatprep.subr.bf16.mxu0 0
        %2067 = vmatpush1.bf16.xpose.msra.mxu0 0
        %2068 = vmatprep.subr.bf16.mxu0 0
        %2069 = vmatpush1.bf16.xpose.msra.mxu0 0
        %2070 = vmatprep.subr.bf16.mxu0 0
        %2071 = vmatpush1.bf16.xpose.msra.mxu0 0
        %2072 = vmatprep.subr.bf16.mxu0 0
        %2073 = vmatpush1.bf16.xpose.msra.mxu0 0
        %2074 = vmatprep.subr.bf16.mxu0 0
        %2075 = vmatpush1.bf16.xpose.msra.mxu0 0
        %2076 = vmatprep.subr.bf16.mxu0 0
        %2077 = vmatpush1.bf16.xpose.msra.mxu0 0
        %2078 = vmatprep.subr.bf16.mxu0 0
        %2079 = vmatpush1.bf16.xpose.msra.mxu0 0
        %2080 = vmatprep.subr.bf16.mxu0 0
        %2081 = vmatpush1.bf16.xpose.msra.mxu0 0
        %2082 = vmatprep.subr.bf16.mxu0 0
        %2083 = vmatpush1.bf16.xpose.msra.mxu0 0
        %2084 = vmatprep.subr.bf16.mxu0 0
        %2085 = vmatpush1.bf16.xpose.msra.mxu0 0
        %2086 = vmatprep.subr.bf16.mxu0 0
        %2087 = vmatpush1.bf16.xpose.msra.mxu0 0
        %2088 = vmatprep.subr.bf16.mxu0 0
        %2089 = vmatpush1.bf16.xpose.msra.mxu0 0
        %2090 = vmatprep.subr.bf16.mxu0 0
        %2091 = vmatpush1.bf16.xpose.msra.mxu0 0
        %2092 = vmatprep.mubr.bf16.mxu0 0
        %2093 = vmatmul.mubr.bf16.gmra.mrb[0].mxu0 %v2055
        %v2094 = vpop.f32.mrb[0].mxu0
        %v2095 = vadd.f32 0.0, %v2094
        %v2096 = vpop.f32.mrb[0].mxu0
        %v2097 = vpop.f32.mrb[0].mxu0
        %v2098 = vpop.f32.mrb[0].mxu0
        %2099 = vdwg.mxu0
        %2101 = vrot.lane.b32.xlu0 %v1952, 96
        %v2102 = vpop.permute.xlu0 %2101
        %v2104 = vsel %vm1031, %v1948, 0
        %v2107 = vsel %vm1031, %v2102, 0
        %2109 = vmatprep.subr.bf16.mxu0 0
        %2110 = vmatpush1.bf16.xpose.msra.mxu0 %v2107
        %2111 = vmatprep.subr.bf16.mxu0 0
        %2112 = vmatpush1.bf16.xpose.msra.mxu0 0
        %2113 = vmatprep.subr.bf16.mxu0 0
        %2114 = vmatpush1.bf16.xpose.msra.mxu0 0
        %2115 = vmatprep.subr.bf16.mxu0 0
        %2116 = vmatpush1.bf16.xpose.msra.mxu0 0
        %2117 = vmatprep.subr.bf16.mxu0 0
        %2118 = vmatpush1.bf16.xpose.msra.mxu0 0
        %2119 = vmatprep.subr.bf16.mxu0 0
        %2120 = vmatpush1.bf16.xpose.msra.mxu0 0
        %2121 = vmatprep.subr.bf16.mxu0 0
        %2122 = vmatpush1.bf16.xpose.msra.mxu0 0
        %2123 = vmatprep.subr.bf16.mxu0 0
        %2124 = vmatpush1.bf16.xpose.msra.mxu0 0
        %2125 = vmatprep.subr.bf16.mxu0 0
        %2126 = vmatpush1.bf16.xpose.msra.mxu0 0
        %2127 = vmatprep.subr.bf16.mxu0 0
        %2128 = vmatpush1.bf16.xpose.msra.mxu0 0
        %2129 = vmatprep.subr.bf16.mxu0 0
        %2130 = vmatpush1.bf16.xpose.msra.mxu0 0
        %2131 = vmatprep.subr.bf16.mxu0 0
        %2132 = vmatpush1.bf16.xpose.msra.mxu0 0
        %2133 = vmatprep.subr.bf16.mxu0 0
        %2134 = vmatpush1.bf16.xpose.msra.mxu0 0
        %2135 = vmatprep.subr.bf16.mxu0 0
        %2136 = vmatpush1.bf16.xpose.msra.mxu0 0
        %2137 = vmatprep.subr.bf16.mxu0 0
        %2138 = vmatpush1.bf16.xpose.msra.mxu0 0
        %2139 = vmatprep.subr.bf16.mxu0 0
        %2140 = vmatpush1.bf16.xpose.msra.mxu0 0
        %2141 = vmatprep.mubr.bf16.mxu0 0
        %2142 = vmatmul.mubr.bf16.gmra.mrb[0].mxu0 %v2104
        %v2143 = vpop.f32.mrb[0].mxu0
        %v2144 = vadd.f32 0.0, %v2143
        %v2145 = vpop.f32.mrb[0].mxu0
        %v2146 = vpop.f32.mrb[0].mxu0
        %v2147 = vpop.f32.mrb[0].mxu0
        %2148 = vdwg.mxu0
        %v2149 = vsel %vm1226, %v1997, -1e+10
        %v2150 = vsel %vm1226, %v2046, -1e+10
        %v2151 = vsel %vm1226, %v2095, -1e+10
        %v2152 = vsel %vm1226, %v2144, -1e+10
        %v2153 = vsel %vm1031, %v2149, -inf
        %2154 = vmax.xlane.f32.xlu0 %v2153
        %v2155 = vpop.xlane.xlu0 %2154
        %v2156 = vsel %vm1031, %v2150, -inf
        %2157 = vmax.xlane.f32.xlu0 %v2156
        %v2158 = vpop.xlane.xlu0 %2157
        %v2159 = vsel %vm1031, %v2151, -inf
        %2160 = vmax.xlane.f32.xlu0 %v2159
        %v2161 = vpop.xlane.xlu0 %2160
        %v2162 = vsel %vm1031, %v2152, -inf
        %2163 = vmax.xlane.f32.xlu0 %v2162
        %v2164 = vpop.xlane.xlu0 %2163
        %v2165 = vsub.f32 %v2149, %v2155
        %v2166 = vsub.f32 %v2150, %v2158
        %v2167 = vsub.f32 %v2151, %v2161
        %v2168 = vsub.f32 %v2152, %v2164
        %v2169 = vmul.f32 %v2165, 1.442695
        %v2170 = vpow.pop %v2169
        %v2171 = vmul.f32 %v2166, 1.442695
        %v2172 = vpow.pop %v2171
        %v2173 = vmul.f32 %v2167, 1.442695
        %v2174 = vpow.pop %v2173
        %v2175 = vmul.f32 %v2168, 1.442695
        %v2176 = vpow.pop %v2175
        %v2177 = vsel %vm1031, %v2170, 0.0
        %2178 = vadd.xlane.f32.xlu0 %v2177
        %v2179 = vpop.xlane.xlu0 %2178
        %v2180 = vsel %vm1031, %v2172, 0.0
        %2181 = vadd.xlane.f32.xlu0 %v2180
        %v2182 = vpop.xlane.xlu0 %2181
        %v2183 = vsel %vm1031, %v2174, 0.0
        %2184 = vadd.xlane.f32.xlu0 %v2183
        %v2185 = vpop.xlane.xlu0 %2184
        %v2186 = vsel %vm1031, %v2176, 0.0
        %2187 = vadd.xlane.f32.xlu0 %v2186
        %v2188 = vpop.xlane.xlu0 %2187
        %v2189 = vrcp.pop %v2179
        %v2190 = vrcp.pop %v2182
        %v2191 = vrcp.pop %v2185
        %v2192 = vrcp.pop %v2188
        %v2193 = vmul.f32 %v2170, %v2189
        %v2194 = vmul.f32 %v2172, %v2190
        %v2195 = vmul.f32 %v2174, %v2191
        %v2196 = vmul.f32 %v2176, %v2192
        %v2197 = vpack.c.bf16 %v2193, %v2193
        %v2198 = vpack.c.bf16 %v2194, %v2194
        %v2199 = vpack.c.bf16 %v2195, %v2195
        %v2200 = vpack.c.bf16 %v2196, %v2196
        %2201 = vrot.lane.b32.xlu0 %v1949, 64
        %v2202 = vpop.permute.xlu0 %2201
        %v2204 = vsel %vm1031, %v2197, 0
        %v2207 = vsel %vm1284, %v2202, 0
        %2209 = vmatprep.subr.bf16.mxu0 0
        %2210 = vmatpush1.bf16.msra.mxu0 %v2207
        %2211 = vmatprep.subr.bf16.mxu0 0
        %2212 = vmatpush1.bf16.msra.mxu0 0
        %2213 = vmatprep.subr.bf16.mxu0 0
        %2214 = vmatpush1.bf16.msra.mxu0 0
        %2215 = vmatprep.subr.bf16.mxu0 0
        %2216 = vmatpush1.bf16.msra.mxu0 0
        %2217 = vmatprep.subr.bf16.mxu0 0
        %2218 = vmatpush1.bf16.msra.mxu0 0
        %2219 = vmatprep.subr.bf16.mxu0 0
        %2220 = vmatpush1.bf16.msra.mxu0 0
        %2221 = vmatprep.subr.bf16.mxu0 0
        %2222 = vmatpush1.bf16.msra.mxu0 0
        %2223 = vmatprep.subr.bf16.mxu0 0
        %2224 = vmatpush1.bf16.msra.mxu0 0
        %2225 = vmatprep.subr.bf16.mxu0 0
        %2226 = vmatpush1.bf16.msra.mxu0 0
        %2227 = vmatprep.subr.bf16.mxu0 0
        %2228 = vmatpush1.bf16.msra.mxu0 0
        %2229 = vmatprep.subr.bf16.mxu0 0
        %2230 = vmatpush1.bf16.msra.mxu0 0
        %2231 = vmatprep.subr.bf16.mxu0 0
        %2232 = vmatpush1.bf16.msra.mxu0 0
        %2233 = vmatprep.subr.bf16.mxu0 0
        %2234 = vmatpush1.bf16.msra.mxu0 0
        %2235 = vmatprep.subr.bf16.mxu0 0
        %2236 = vmatpush1.bf16.msra.mxu0 0
        %2237 = vmatprep.subr.bf16.mxu0 0
        %2238 = vmatpush1.bf16.msra.mxu0 0
        %2239 = vmatprep.subr.bf16.mxu0 0
        %2240 = vmatpush1.bf16.msra.mxu0 0
        %2241 = vmatprep.mubr.bf16.mxu0 0
        %2242 = vmatmul.mubr.bf16.gmra.mrb[0].mxu0 %v2204
        %v2243 = vpop.f32.mrb[0].mxu0
        %v2244 = vadd.f32 0.0, %v2243
        %v2245 = vpop.f32.mrb[0].mxu0
        %v2246 = vpop.f32.mrb[0].mxu0
        %v2247 = vpop.f32.mrb[0].mxu0
        %2248 = vdwg.mxu0
        %2249 = vrot.lane.b32.xlu0 %v1950, 64
        %v2250 = vpop.permute.xlu0 %2249
        %v2252 = vsel %vm1031, %v2198, 0
        %v2255 = vsel %vm1284, %v2250, 0
        %2257 = vmatprep.subr.bf16.mxu0 0
        %2258 = vmatpush1.bf16.msra.mxu0 %v2255
        %2259 = vmatprep.subr.bf16.mxu0 0
        %2260 = vmatpush1.bf16.msra.mxu0 0
        %2261 = vmatprep.subr.bf16.mxu0 0
        %2262 = vmatpush1.bf16.msra.mxu0 0
        %2263 = vmatprep.subr.bf16.mxu0 0
        %2264 = vmatpush1.bf16.msra.mxu0 0
        %2265 = vmatprep.subr.bf16.mxu0 0
        %2266 = vmatpush1.bf16.msra.mxu0 0
        %2267 = vmatprep.subr.bf16.mxu0 0
        %2268 = vmatpush1.bf16.msra.mxu0 0
        %2269 = vmatprep.subr.bf16.mxu0 0
        %2270 = vmatpush1.bf16.msra.mxu0 0
        %2271 = vmatprep.subr.bf16.mxu0 0
        %2272 = vmatpush1.bf16.msra.mxu0 0
        %2273 = vmatprep.subr.bf16.mxu0 0
        %2274 = vmatpush1.bf16.msra.mxu0 0
        %2275 = vmatprep.subr.bf16.mxu0 0
        %2276 = vmatpush1.bf16.msra.mxu0 0
        %2277 = vmatprep.subr.bf16.mxu0 0
        %2278 = vmatpush1.bf16.msra.mxu0 0
        %2279 = vmatprep.subr.bf16.mxu0 0
        %2280 = vmatpush1.bf16.msra.mxu0 0
        %2281 = vmatprep.subr.bf16.mxu0 0
        %2282 = vmatpush1.bf16.msra.mxu0 0
        %2283 = vmatprep.subr.bf16.mxu0 0
        %2284 = vmatpush1.bf16.msra.mxu0 0
        %2285 = vmatprep.subr.bf16.mxu0 0
        %2286 = vmatpush1.bf16.msra.mxu0 0
        %2287 = vmatprep.subr.bf16.mxu0 0
        %2288 = vmatpush1.bf16.msra.mxu0 0
        %2289 = vmatprep.mubr.bf16.mxu0 0
        %2290 = vmatmul.mubr.bf16.gmra.mrb[0].mxu0 %v2252
        %v2291 = vpop.f32.mrb[0].mxu0
        %v2292 = vadd.f32 0.0, %v2291
        %v2293 = vpop.f32.mrb[0].mxu0
        %v2294 = vpop.f32.mrb[0].mxu0
        %v2295 = vpop.f32.mrb[0].mxu0
        %2296 = vdwg.mxu0
        %2297 = vrot.lane.b32.xlu0 %v1951, 64
        %v2298 = vpop.permute.xlu0 %2297
        %v2300 = vsel %vm1031, %v2199, 0
        %v2303 = vsel %vm1284, %v2298, 0
        %2305 = vmatprep.subr.bf16.mxu0 0
        %2306 = vmatpush1.bf16.msra.mxu0 %v2303
        %2307 = vmatprep.subr.bf16.mxu0 0
        %2308 = vmatpush1.bf16.msra.mxu0 0
        %2309 = vmatprep.subr.bf16.mxu0 0
        %2310 = vmatpush1.bf16.msra.mxu0 0
        %2311 = vmatprep.subr.bf16.mxu0 0
        %2312 = vmatpush1.bf16.msra.mxu0 0
        %2313 = vmatprep.subr.bf16.mxu0 0
        %2314 = vmatpush1.bf16.msra.mxu0 0
        %2315 = vmatprep.subr.bf16.mxu0 0
        %2316 = vmatpush1.bf16.msra.mxu0 0
        %2317 = vmatprep.subr.bf16.mxu0 0
        %2318 = vmatpush1.bf16.msra.mxu0 0
        %2319 = vmatprep.subr.bf16.mxu0 0
        %2320 = vmatpush1.bf16.msra.mxu0 0
        %2321 = vmatprep.subr.bf16.mxu0 0
        %2322 = vmatpush1.bf16.msra.mxu0 0
        %2323 = vmatprep.subr.bf16.mxu0 0
        %2324 = vmatpush1.bf16.msra.mxu0 0
        %2325 = vmatprep.subr.bf16.mxu0 0
        %2326 = vmatpush1.bf16.msra.mxu0 0
        %2327 = vmatprep.subr.bf16.mxu0 0
        %2328 = vmatpush1.bf16.msra.mxu0 0
        %2329 = vmatprep.subr.bf16.mxu0 0
        %2330 = vmatpush1.bf16.msra.mxu0 0
        %2331 = vmatprep.subr.bf16.mxu0 0
        %2332 = vmatpush1.bf16.msra.mxu0 0
        %2333 = vmatprep.subr.bf16.mxu0 0
        %2334 = vmatpush1.bf16.msra.mxu0 0
        %2335 = vmatprep.subr.bf16.mxu0 0
        %2336 = vmatpush1.bf16.msra.mxu0 0
        %2337 = vmatprep.mubr.bf16.mxu0 0
        %2338 = vmatmul.mubr.bf16.gmra.mrb[0].mxu0 %v2300
        %v2339 = vpop.f32.mrb[0].mxu0
        %v2340 = vadd.f32 0.0, %v2339
        %v2341 = vpop.f32.mrb[0].mxu0
        %v2342 = vpop.f32.mrb[0].mxu0
        %v2343 = vpop.f32.mrb[0].mxu0
        %2344 = vdwg.mxu0
        %2345 = vrot.lane.b32.xlu0 %v1952, 64
        %v2346 = vpop.permute.xlu0 %2345
        %v2348 = vsel %vm1031, %v2200, 0
        %v2351 = vsel %vm1284, %v2346, 0
        %2353 = vmatprep.subr.bf16.mxu0 0
        %2354 = vmatpush1.bf16.msra.mxu0 %v2351
        %2355 = vmatprep.subr.bf16.mxu0 0
        %2356 = vmatpush1.bf16.msra.mxu0 0
        %2357 = vmatprep.subr.bf16.mxu0 0
        %2358 = vmatpush1.bf16.msra.mxu0 0
        %2359 = vmatprep.subr.bf16.mxu0 0
        %2360 = vmatpush1.bf16.msra.mxu0 0
        %2361 = vmatprep.subr.bf16.mxu0 0
        %2362 = vmatpush1.bf16.msra.mxu0 0
        %2363 = vmatprep.subr.bf16.mxu0 0
        %2364 = vmatpush1.bf16.msra.mxu0 0
        %2365 = vmatprep.subr.bf16.mxu0 0
        %2366 = vmatpush1.bf16.msra.mxu0 0
        %2367 = vmatprep.subr.bf16.mxu0 0
        %2368 = vmatpush1.bf16.msra.mxu0 0
        %2369 = vmatprep.subr.bf16.mxu0 0
        %2370 = vmatpush1.bf16.msra.mxu0 0
        %2371 = vmatprep.subr.bf16.mxu0 0
        %2372 = vmatpush1.bf16.msra.mxu0 0
        %2373 = vmatprep.subr.bf16.mxu0 0
        %2374 = vmatpush1.bf16.msra.mxu0 0
        %2375 = vmatprep.subr.bf16.mxu0 0
        %2376 = vmatpush1.bf16.msra.mxu0 0
        %2377 = vmatprep.subr.bf16.mxu0 0
        %2378 = vmatpush1.bf16.msra.mxu0 0
        %2379 = vmatprep.subr.bf16.mxu0 0
        %2380 = vmatpush1.bf16.msra.mxu0 0
        %2381 = vmatprep.subr.bf16.mxu0 0
        %2382 = vmatpush1.bf16.msra.mxu0 0
        %2383 = vmatprep.subr.bf16.mxu0 0
        %2384 = vmatpush1.bf16.msra.mxu0 0
        %2385 = vmatprep.mubr.bf16.mxu0 0
        %2386 = vmatmul.mubr.bf16.gmra.mrb[0].mxu0 %v2348
        %v2387 = vpop.f32.mrb[0].mxu0
        %v2388 = vadd.f32 0.0, %v2387
        %v2389 = vpop.f32.mrb[0].mxu0
        %v2390 = vpop.f32.mrb[0].mxu0
        %v2391 = vpop.f32.mrb[0].mxu0
        %2392 = vdwg.mxu0
        %v2393 = vpack.c.bf16 %v2244, %v2244
        %v2394 = vpack.c.bf16 %v2292, %v2292
        %v2395 = vpack.c.bf16 %v2340, %v2340
        %v2396 = vpack.c.bf16 %v2388, %v2388
        %v2398 = vsel %vm1031, %v2393, 0
        %2400 = vmatprep.subr.bf16.mxu0 0
        %2401 = vmatpush1.bf16.msra.mxu0 %v1480
        %2402 = vmatprep.subr.bf16.mxu0 0
        %2403 = vmatpush1.bf16.msra.mxu0 0
        %2404 = vmatprep.subr.bf16.mxu0 0
        %2405 = vmatpush1.bf16.msra.mxu0 0
        %2406 = vmatprep.subr.bf16.mxu0 0
        %2407 = vmatpush1.bf16.msra.mxu0 0
        %2408 = vmatprep.subr.bf16.mxu0 0
        %2409 = vmatpush1.bf16.msra.mxu0 0
        %2410 = vmatprep.subr.bf16.mxu0 0
        %2411 = vmatpush1.bf16.msra.mxu0 0
        %2412 = vmatprep.subr.bf16.mxu0 0
        %2413 = vmatpush1.bf16.msra.mxu0 0
        %2414 = vmatprep.subr.bf16.mxu0 0
        %2415 = vmatpush1.bf16.msra.mxu0 0
        %2416 = vmatprep.subr.bf16.mxu0 0
        %2417 = vmatpush1.bf16.msra.mxu0 0
        %2418 = vmatprep.subr.bf16.mxu0 0
        %2419 = vmatpush1.bf16.msra.mxu0 0
        %2420 = vmatprep.subr.bf16.mxu0 0
        %2421 = vmatpush1.bf16.msra.mxu0 0
        %2422 = vmatprep.subr.bf16.mxu0 0
        %2423 = vmatpush1.bf16.msra.mxu0 0
        %2424 = vmatprep.subr.bf16.mxu0 0
        %2425 = vmatpush1.bf16.msra.mxu0 0
        %2426 = vmatprep.subr.bf16.mxu0 0
        %2427 = vmatpush1.bf16.msra.mxu0 0
        %2428 = vmatprep.subr.bf16.mxu0 0
        %2429 = vmatpush1.bf16.msra.mxu0 0
        %2430 = vmatprep.subr.bf16.mxu0 0
        %2431 = vmatpush1.bf16.msra.mxu0 0
        %2432 = vmatprep.mubr.bf16.mxu0 0
        %2433 = vmatmul.mubr.bf16.gmra.mrb[0].mxu0 %v2398
        %v2434 = vpop.f32.mrb[0].mxu0
        %v2435 = vadd.f32 0.0, %v2434
        %v2436 = vpop.f32.mrb[0].mxu0
        %v2437 = vpop.f32.mrb[0].mxu0
        %v2438 = vpop.f32.mrb[0].mxu0
        %2439 = vdwg.mxu0
        %v2441 = vsel %vm1031, %v2394, 0
        %2443 = vmatprep.subr.bf16.mxu0 0
        %2444 = vmatpush1.bf16.msra.mxu0 %v1526
        %2445 = vmatprep.subr.bf16.mxu0 0
        %2446 = vmatpush1.bf16.msra.mxu0 0
        %2447 = vmatprep.subr.bf16.mxu0 0
        %2448 = vmatpush1.bf16.msra.mxu0 0
        %2449 = vmatprep.subr.bf16.mxu0 0
        %2450 = vmatpush1.bf16.msra.mxu0 0
        %2451 = vmatprep.subr.bf16.mxu0 0
        %2452 = vmatpush1.bf16.msra.mxu0 0
        %2453 = vmatprep.subr.bf16.mxu0 0
        %2454 = vmatpush1.bf16.msra.mxu0 0
        %2455 = vmatprep.subr.bf16.mxu0 0
        %2456 = vmatpush1.bf16.msra.mxu0 0
        %2457 = vmatprep.subr.bf16.mxu0 0
        %2458 = vmatpush1.bf16.msra.mxu0 0
        %2459 = vmatprep.subr.bf16.mxu0 0
        %2460 = vmatpush1.bf16.msra.mxu0 0
        %2461 = vmatprep.subr.bf16.mxu0 0
        %2462 = vmatpush1.bf16.msra.mxu0 0
        %2463 = vmatprep.subr.bf16.mxu0 0
        %2464 = vmatpush1.bf16.msra.mxu0 0
        %2465 = vmatprep.subr.bf16.mxu0 0
        %2466 = vmatpush1.bf16.msra.mxu0 0
        %2467 = vmatprep.subr.bf16.mxu0 0
        %2468 = vmatpush1.bf16.msra.mxu0 0
        %2469 = vmatprep.subr.bf16.mxu0 0
        %2470 = vmatpush1.bf16.msra.mxu0 0
        %2471 = vmatprep.subr.bf16.mxu0 0
        %2472 = vmatpush1.bf16.msra.mxu0 0
        %2473 = vmatprep.subr.bf16.mxu0 0
        %2474 = vmatpush1.bf16.msra.mxu0 0
        %2475 = vmatprep.mubr.bf16.mxu0 0
        %2476 = vmatmul.mubr.bf16.gmra.mrb[0].mxu0 %v2441
        %v2477 = vpop.f32.mrb[0].mxu0
        %v2478 = vadd.f32 0.0, %v2477
        %v2479 = vpop.f32.mrb[0].mxu0
        %v2480 = vpop.f32.mrb[0].mxu0
        %v2481 = vpop.f32.mrb[0].mxu0
        %2482 = vdwg.mxu0
        %v2484 = vsel %vm1031, %v2395, 0
        %2486 = vmatprep.subr.bf16.mxu0 0
        %2487 = vmatpush1.bf16.msra.mxu0 %v1572
        %2488 = vmatprep.subr.bf16.mxu0 0
        %2489 = vmatpush1.bf16.msra.mxu0 0
        %2490 = vmatprep.subr.bf16.mxu0 0
        %2491 = vmatpush1.bf16.msra.mxu0 0
        %2492 = vmatprep.subr.bf16.mxu0 0
        %2493 = vmatpush1.bf16.msra.mxu0 0
        %2494 = vmatprep.subr.bf16.mxu0 0
        %2495 = vmatpush1.bf16.msra.mxu0 0
        %2496 = vmatprep.subr.bf16.mxu0 0
        %2497 = vmatpush1.bf16.msra.mxu0 0
        %2498 = vmatprep.subr.bf16.mxu0 0
        %2499 = vmatpush1.bf16.msra.mxu0 0
        %2500 = vmatprep.subr.bf16.mxu0 0
        %2501 = vmatpush1.bf16.msra.mxu0 0
        %2502 = vmatprep.subr.bf16.mxu0 0
        %2503 = vmatpush1.bf16.msra.mxu0 0
        %2504 = vmatprep.subr.bf16.mxu0 0
        %2505 = vmatpush1.bf16.msra.mxu0 0
        %2506 = vmatprep.subr.bf16.mxu0 0
        %2507 = vmatpush1.bf16.msra.mxu0 0
        %2508 = vmatprep.subr.bf16.mxu0 0
        %2509 = vmatpush1.bf16.msra.mxu0 0
        %2510 = vmatprep.subr.bf16.mxu0 0
        %2511 = vmatpush1.bf16.msra.mxu0 0
        %2512 = vmatprep.subr.bf16.mxu0 0
        %2513 = vmatpush1.bf16.msra.mxu0 0
        %2514 = vmatprep.subr.bf16.mxu0 0
        %2515 = vmatpush1.bf16.msra.mxu0 0
        %2516 = vmatprep.subr.bf16.mxu0 0
        %2517 = vmatpush1.bf16.msra.mxu0 0
        %2518 = vmatprep.mubr.bf16.mxu0 0
        %2519 = vmatmul.mubr.bf16.gmra.mrb[0].mxu0 %v2484
        %v2520 = vpop.f32.mrb[0].mxu0
        %v2521 = vadd.f32 0.0, %v2520
        %v2522 = vpop.f32.mrb[0].mxu0
        %v2523 = vpop.f32.mrb[0].mxu0
        %v2524 = vpop.f32.mrb[0].mxu0
        %2525 = vdwg.mxu0
        %v2527 = vsel %vm1031, %v2396, 0
        %2529 = vmatprep.subr.bf16.mxu0 0
        %2530 = vmatpush1.bf16.msra.mxu0 %v1618
        %2531 = vmatprep.subr.bf16.mxu0 0
        %2532 = vmatpush1.bf16.msra.mxu0 0
        %2533 = vmatprep.subr.bf16.mxu0 0
        %2534 = vmatpush1.bf16.msra.mxu0 0
        %2535 = vmatprep.subr.bf16.mxu0 0
        %2536 = vmatpush1.bf16.msra.mxu0 0
        %2537 = vmatprep.subr.bf16.mxu0 0
        %2538 = vmatpush1.bf16.msra.mxu0 0
        %2539 = vmatprep.subr.bf16.mxu0 0
        %2540 = vmatpush1.bf16.msra.mxu0 0
        %2541 = vmatprep.subr.bf16.mxu0 0
        %2542 = vmatpush1.bf16.msra.mxu0 0
        %2543 = vmatprep.subr.bf16.mxu0 0
        %2544 = vmatpush1.bf16.msra.mxu0 0
        %2545 = vmatprep.subr.bf16.mxu0 0
        %2546 = vmatpush1.bf16.msra.mxu0 0
        %2547 = vmatprep.subr.bf16.mxu0 0
        %2548 = vmatpush1.bf16.msra.mxu0 0
        %2549 = vmatprep.subr.bf16.mxu0 0
        %2550 = vmatpush1.bf16.msra.mxu0 0
        %2551 = vmatprep.subr.bf16.mxu0 0
        %2552 = vmatpush1.bf16.msra.mxu0 0
        %2553 = vmatprep.subr.bf16.mxu0 0
        %2554 = vmatpush1.bf16.msra.mxu0 0
        %2555 = vmatprep.subr.bf16.mxu0 0
        %2556 = vmatpush1.bf16.msra.mxu0 0
        %2557 = vmatprep.subr.bf16.mxu0 0
        %2558 = vmatpush1.bf16.msra.mxu0 0
        %2559 = vmatprep.subr.bf16.mxu0 0
        %2560 = vmatpush1.bf16.msra.mxu0 0
        %2561 = vmatprep.mubr.bf16.mxu0 0
        %2562 = vmatmul.mubr.bf16.gmra.mrb[0].mxu0 %v2527
        %v2563 = vpop.f32.mrb[0].mxu0
        %v2564 = vadd.f32 0.0, %v2563
        %v2565 = vpop.f32.mrb[0].mxu0
        %v2566 = vpop.f32.mrb[0].mxu0
        %v2567 = vpop.f32.mrb[0].mxu0
        %2568 = vdwg.mxu0
        %v2569 = vsel %vm915, %v2435, 0.0
        %v2570 = vsel %vm915, %v2478, 0.0
        %v2571 = vadd.f32 %v2569, %v2570
        %v2572 = vsel %vm915, %v2521, 0.0
        %v2573 = vadd.f32 %v2571, %v2572
        %v2574 = vsel %vm915, %v2564, 0.0
        %v2575 = vadd.f32 %v2573, %v2574
        %v2576 = vadd.f32 %v1871, %v2575
        %v2577 = vadd.f32 %v2576, %v1672
        %v2578 = vsel %vm915, %v2577, 0.0
        %2579 = vadd.xlane.f32.xlu0 %v2578
        %v2580 = vpop.xlane.xlu0 %2579
        %v2581 = vmul.f32 %v2580, %v919
        %v2582 = vsub.f32 %v2577, %v2581
        %v2583 = vmul.f32 %v2582, %v2582
        %v2584 = vsel %vm915, %v2583, 0.0
        %2585 = vadd.xlane.f32.xlu0 %v2584
        %v2586 = vpop.xlane.xlu0 %2585
        %v2587 = vmul.f32 %v2586, %v919
        %v2588 = vadd.f32 %v2587, 1e-05
        %v2589 = vrsqrt.pop %v2588
        %v2590 = vmul.f32 %v2582, %v2589
        %v2591 = vmul.f32 %v2590, %v1692
        %v2592 = vadd.f32 %v2591, %v1699
        %v2593 = vpack.c.bf16 %v2592, %v2592
        %v2595 = vsel %vm915, %v2593, 0
        %2597 = vmatprep.subr.bf16.mxu0 0
        %2598 = vmatpush1.bf16.msra.mxu0 %v1717
        %2599 = vmatprep.subr.bf16.mxu0 0
        %2600 = vmatpush1.bf16.msra.mxu0 %v1718
        %2601 = vmatprep.subr.bf16.mxu0 0
        %2602 = vmatpush1.bf16.msra.mxu0 0
        %2603 = vmatprep.subr.bf16.mxu0 0
        %2604 = vmatpush1.bf16.msra.mxu0 0
        %2605 = vmatprep.subr.bf16.mxu0 0
        %2606 = vmatpush1.bf16.msra.mxu0 0
        %2607 = vmatprep.subr.bf16.mxu0 0
        %2608 = vmatpush1.bf16.msra.mxu0 0
        %2609 = vmatprep.subr.bf16.mxu0 0
        %2610 = vmatpush1.bf16.msra.mxu0 0
        %2611 = vmatprep.subr.bf16.mxu0 0
        %2612 = vmatpush1.bf16.msra.mxu0 0
        %2613 = vmatprep.subr.bf16.mxu0 0
        %2614 = vmatpush1.bf16.msra.mxu0 0
        %2615 = vmatprep.subr.bf16.mxu0 0
        %2616 = vmatpush1.bf16.msra.mxu0 0
        %2617 = vmatprep.subr.bf16.mxu0 0
        %2618 = vmatpush1.bf16.msra.mxu0 0
        %2619 = vmatprep.subr.bf16.mxu0 0
        %2620 = vmatpush1.bf16.msra.mxu0 0
        %2621 = vmatprep.subr.bf16.mxu0 0
        %2622 = vmatpush1.bf16.msra.mxu0 0
        %2623 = vmatprep.subr.bf16.mxu0 0
        %2624 = vmatpush1.bf16.msra.mxu0 0
        %2625 = vmatprep.subr.bf16.mxu0 0
        %2626 = vmatpush1.bf16.msra.mxu0 0
        %2627 = vmatprep.subr.bf16.mxu0 0
        %2628 = vmatpush1.bf16.msra.mxu0 0
        %2629 = vmatprep.mubr.bf16.mxu0 0
        %2630 = vmatmul.mubr.bf16.gmra.mrb[0].mxu0 %v2595
        %v2631 = vpop.f32.mrb[0].mxu0
        %v2632 = vadd.f32 %v1707, %v2631
        %v2633 = vpop.f32.mrb[0].mxu0
        %v2634 = vpop.f32.mrb[0].mxu0
        %v2635 = vpop.f32.mrb[0].mxu0
        %2636 = vdwg.mxu0
        %v2637 = vmul.f32 %v2632, 0.5
        %v2638 = vmul.f32 %v2632, 0.044715
        %v2639 = vmul.f32 %v2638, %v2632
        %v2640 = vmul.f32 %v2639, %v2632
        %v2641 = vadd.f32 %v2632, %v2640
        %v2642 = vmul.f32 %v2641, 0.7978846
        %v2643 = vtanh.pop %v2642
        %v2644 = vadd.f32 %v2643, 1.0
        %v2645 = vmul.f32 %v2637, %v2644
        %v2646 = vpack.c.bf16 %v2645, %v2645
        %2647 = vmatprep.subr.bf16.mxu0 0
        %2648 = vmatpush1.bf16.msra.mxu0 %v1812
        %2649 = vmatprep.subr.bf16.mxu0 0
        %2650 = vmatpush1.bf16.msra.mxu0 %v1813
        %2651 = vmatprep.subr.bf16.mxu0 0
        %2652 = vmatpush1.bf16.msra.mxu0 %v1814
        %2653 = vmatprep.subr.bf16.mxu0 0
        %2654 = vmatpush1.bf16.msra.mxu0 %v1815
        %2655 = vmatprep.subr.bf16.mxu0 0
        %2656 = vmatpush1.bf16.msra.mxu0 %v1816
        %2657 = vmatprep.subr.bf16.mxu0 0
        %2658 = vmatpush1.bf16.msra.mxu0 %v1817
        %2659 = vmatprep.subr.bf16.mxu0 0
        %2660 = vmatpush1.bf16.msra.mxu0 %v1818
        %2661 = vmatprep.subr.bf16.mxu0 0
        %2662 = vmatpush1.bf16.msra.mxu0 %v1819
        %2663 = vmatprep.subr.bf16.mxu0 0
        %2664 = vmatpush1.bf16.msra.mxu0 0
        %2665 = vmatprep.subr.bf16.mxu0 0
        %2666 = vmatpush1.bf16.msra.mxu0 0
        %2667 = vmatprep.subr.bf16.mxu0 0
        %2668 = vmatpush1.bf16.msra.mxu0 0
        %2669 = vmatprep.subr.bf16.mxu0 0
        %2670 = vmatpush1.bf16.msra.mxu0 0
        %2671 = vmatprep.subr.bf16.mxu0 0
        %2672 = vmatpush1.bf16.msra.mxu0 0
        %2673 = vmatprep.subr.bf16.mxu0 0
        %2674 = vmatpush1.bf16.msra.mxu0 0
        %2675 = vmatprep.subr.bf16.mxu0 0
        %2676 = vmatpush1.bf16.msra.mxu0 0
        %2677 = vmatprep.subr.bf16.mxu0 0
        %2678 = vmatpush1.bf16.msra.mxu0 0
        %2679 = vmatprep.mubr.bf16.mxu0 0
        %2680 = vmatmul.mubr.bf16.gmra.mrb[0].mxu0 %v2646
        %v2681 = vpop.f32.mrb[0].mxu0
        %v2682 = vadd.f32 %v1778, %v2681
        %v2683 = vpop.f32.mrb[0].mxu0
        %v2684 = vpop.f32.mrb[0].mxu0
        %v2685 = vpop.f32.mrb[0].mxu0
        %2686 = vdwg.mxu0
        %v2687 = vadd.f32 %v2577, %v2682
        %2688 = vst.msk [vmem:[%s1870] sm:$0xff] %vm915, %v2687
        // Predicated region
        $region129: #{tpu_custom_call.1} parent=71 // pred_check
          %p2689 = pneg %p412
        $region130: #{tpu_custom_call.1} parent=71 // pred_check_branch
          %2691 = sbr.rel (%p2689) target = $region132
        $region131: #{tpu_custom_call.1} parent=71 // pred_region
          %s2692 = smul.u32 2, %s48
          %s2694 = ssub.s32 256, 256
          %2695 = vsyncadd [#allocation4], %s2694
          %s2696 = smul.addr %s2692, 128
          %s2697 = scalar_lea.hbm %s13, %s2696
          %s2698 = sshll.u32 [#allocation23], 4
          %s2699 = int_to_ptr.vmem [resolvable:$true] %s2698
          %2704 = dma.vmem_to_hbm [thread:$0]  %s2699, 256, %s2697, [#allocation4], 128, 128, 8
        $region132: #{tpu_custom_call.1} parent=71 // pred_fallthru
          _
        // Predicated region
        $region133: #{tpu_custom_call.1} parent=71 // pred_check
          %p2705 = pneg %p412
        $region134: #{tpu_custom_call.1} parent=71 // pred_check_branch
          %2707 = sbr.rel (%p2705) target = $region136
        $region135: #{tpu_custom_call.1} parent=71 // pred_region
          %2708 = dma.done [#allocation4], 256
        $region136: #{tpu_custom_call.1} parent=71 // pred_fallthru
          _
      $region72: #{tpu_custom_call.1} parent=5 // pred_fallthru
        _
      %p2709 = scmp.le.s32.totalorder 2, %s39
      // Predicated region
      $region137: #{tpu_custom_call.1} parent=5 // pred_check
        %p2710 = pneg %p2709
      $region138: #{tpu_custom_call.1} parent=5 // pred_check_branch
        %2712 = sbr.rel (%p2710) target = $region140
      $region139: #{tpu_custom_call.1} parent=5 // pred_region
        %s2713 = ssub.s32 %s39, 2
      $region140: #{tpu_custom_call.1} parent=5 // pred_fallthru
        _
    $region6: #{tpu_custom_call.1} parent=1 // loop_footer
      %s43 = sadd.s32 1, %s39
    $region7: #{tpu_custom_call.1} parent=1 // loop_footer_branch
      %38 = sbr.rel target = $region3
    $region8: #{tpu_custom_call.1} parent=1 // loop_exit
      _
    %2714 = vsyncpa [#allocation3], 1
    %s2715 = scalar_lea.sflag [#allocation3], 1
    %2716 = vsyncpa %s2715, 1
    %2717 = vsyncpa [#allocation6], 1
    %s2718 = scalar_lea.sflag [#allocation6], 1
    %2719 = vsyncpa %s2718, 1
    %2720 = vsyncpa [#allocation9], 1
    %s2721 = scalar_lea.sflag [#allocation9], 1
    %2722 = vsyncpa %s2721, 1
    %2723 = vsyncpa [#allocation12], 1
    %s2724 = scalar_lea.sflag [#allocation12], 1
    %2725 = vsyncpa %s2724, 1
    %2726 = vsyncpa [#allocation15], 1
    %s2727 = scalar_lea.sflag [#allocation15], 1
    %2728 = vsyncpa %s2727, 1
    %2729 = vsyncpa [#allocation18], 1
    %s2730 = scalar_lea.sflag [#allocation18], 1
    %2731 = vsyncpa %s2730, 1
    %2732 = vsyncpa [#allocation21], 1
    %s2733 = scalar_lea.sflag [#allocation21], 1
    %2734 = vsyncpa %s2733, 1
    %2735 = vsyncpa [#allocation4], 1
    %s2736 = scalar_lea.sflag [#allocation4], 1
    %2737 = vsyncpa %s2736, 1

</llo_original>
